<compile_context>
chip_gen: v7x
topology: tpu7x:2x2x1
jax: 0.10.0
libtpu: 0.0.40
codegen_flags: <defaults>
</compile_context>

<pallas_src>
import functools

import jax
import jax.numpy as jnp
from jax.experimental import pallas as pl
from jax.experimental.pallas import tpu as pltpu


# ----------------------------------------------------------------------------- kernels

def conv_gemm_relu_kernel(a_ref, w_ref, b_ref, o_ref):
    """o = relu(w @ a + b).  w:(N,K)  a:(K,tm)  b:(N,1)  o:(N,tm).  f32 accumulate,
    f32 epilogue; output last dim (tm) is lane-dense."""
    y = jnp.dot(w_ref[...], a_ref[...], preferred_element_type=jnp.float32)
    y = jnp.maximum(y + b_ref[...], 0.0)
    o_ref[...] = y.astype(o_ref.dtype)


def dense_head_kernel(xm_ref, xp_ref,
                      mf1w_ref, mf1b_ref, mf2w_ref, mf2b_ref,
                      pf1w_ref, pf1b_ref, pf2w_ref, pf2b_ref,
                      r1wm_ref, r1wp_ref, r1b_ref,
                      r2w_ref, r2b_ref, r3w_ref, r3b_ref, o_ref):
    """fc1/fc2 for both encoders + 3-layer regressor, fully fused (all f32, tiny)."""
    mm = lambda a, b: jnp.dot(a, b, preferred_element_type=jnp.float32)
    em = jnp.maximum(mm(xm_ref[...], mf1w_ref[...]) + mf1b_ref[...], 0.0)
    em = mm(em, mf2w_ref[...]) + mf2b_ref[...]
    ep = jnp.maximum(mm(xp_ref[...], pf1w_ref[...]) + pf1b_ref[...], 0.0)
    ep = mm(ep, pf2w_ref[...]) + pf2b_ref[...]
    # concat([em, ep], axis=1) @ r1w.T  ==  em @ r1wm + ep @ r1wp   (no in-kernel concat)
    h = jnp.maximum(mm(em, r1wm_ref[...]) + mm(ep, r1wp_ref[...]) + r1b_ref[...], 0.0)
    h = jnp.maximum(mm(h, r2w_ref[...]) + r2b_ref[...], 0.0)
    # final Linear(emb -> 1) as an elementwise-mul + lane reduce (avoids an N=1 matmul)
    o = jnp.sum(h * r3w_ref[...], axis=-1, keepdims=True) + r3b_ref[...]
    o_ref[...] = o.astype(o_ref.dtype)


# ----------------------------------------------------------------------------- wrappers

def pallas_conv_gemm(A, Wm, bias, *, tm_cap=4096):
    """Per-modality GEMM: out[g] = relu(Wm[g] @ A[g] + bias[g]).
    A:(G,K,M)  Wm:(G,N,K)  bias:(G,N)  ->  (G,N,M) float32."""
    G, K, M = A.shape
    N = Wm.shape[1]
    if M >= 128:
        Mp = pl.cdiv(M, 128) * 128            # pad lane axis to a 128 multiple
        tm = min(Mp, tm_cap)                  # bounded tile -> VMEM-safe on v7x too
        while Mp % tm:                        # largest multiple-of-128 tile dividing Mp
            tm -= 128
    else:
        Mp, tm = M, M                         # tiny final stage: one full block
    if Mp != M:
        A = jnp.pad(A, ((0, 0), (0, 0), (0, Mp - M)))
    bias2 = bias.reshape(G, N, 1).astype(jnp.float32)

    out = pl.pallas_call(
        conv_gemm_relu_kernel,
        out_shape=jax.ShapeDtypeStruct((G, N, Mp), jnp.float32),
        grid=(G, Mp // tm),                   # G=2 modalities -> >=2 parallel blocks
        in_specs=[
            pl.BlockSpec((None, K, tm), lambda g, j: (g, 0, j)),
            pl.BlockSpec((None, N, K), lambda g, j: (g, 0, 0)),
            pl.BlockSpec((None, N, 1), lambda g, j: (g, 0, 0)),
        ],
        out_specs=pl.BlockSpec((None, N, tm), lambda g, j: (g, 0, j)),
        compiler_params=pltpu.CompilerParams(
            dimension_semantics=("parallel", "parallel")),
    )(A, Wm, bias2)
    return out[:, :, :M] if Mp != M else out


def pallas_dense_head(xm, xp, params):
    """xm/xp: (B, flat_dim) f32 -> (B, 1) f32.  Single fused pallas_call."""
    E = params["r2w"].shape[0]
    t = lambda w: w.T
    rb = lambda b: b.reshape(1, -1)
    r1wt = params["r1w"].T                    # (2E, E); rows [:E] pair with MRI embed
    pm, pp = params["mri"], params["pet"]
    args = (
        xm, xp,
        t(pm["fc1w"]), rb(pm["fc1b"]), t(pm["fc2w"]), rb(pm["fc2b"]),
        t(pp["fc1w"]), rb(pp["fc1b"]), t(pp["fc2w"]), rb(pp["fc2b"]),
        r1wt[:E], r1wt[E:], rb(params["r1b"]),
        t(params["r2w"]), rb(params["r2b"]),
        params["r3w"], rb(params["r3b"]),     # r3w is already (1, E) in torch layout
    )
    B = xm.shape[0]
    return pl.pallas_call(
        dense_head_kernel,
        out_shape=jax.ShapeDtypeStruct((B, 1), jnp.float32),
    )(*args)


# ----------------------------------------------------------------------------- modules

def conv3d_relu(x, wstack, bstack, *, compute_dtype):
    """3D conv k=3 s=1 p=1 + fused ReLU for both modalities at once.
    x:(G,C,B,D,H,W)  wstack:(G,Cout,C,3,3,3)[torch]  bstack:(G,Cout) -> (G,Cout,B,D,H,W)."""
    G, C, B, D, H, W = x.shape
    Cout = wstack.shape[1]
    xp = jnp.pad(x, ((0, 0), (0, 0), (0, 0), (1, 1), (1, 1), (1, 1)))
    taps = [xp[:, :, :, kd:kd + D, kh:kh + H, kw:kw + W]
            for kd in range(3) for kh in range(3) for kw in range(3)]
    # (G, C, 27, B, D, H, W): row order (ci, kd, kh, kw) matches torch w.reshape(Cout, C*27)
    A = jnp.stack(taps, axis=2).reshape(G, C * 27, B * D * H * W)
    Wm = wstack.reshape(G, Cout, C * 27)
    y = pallas_conv_gemm(A.astype(compute_dtype), Wm.astype(compute_dtype), bstack)
    return y.reshape(G, Cout, B, D, H, W)
    # TODO(synk): for realistic image dims, replace im2col with an accumulated
    # 27-shifted-taps GEMM (P3 pattern) to avoid the 27x activation blow-up in HBM.


def maxpool3d(x):
    """F.max_pool3d(x, 2) on channels-first (G,C,B,D,H,W) -- plain JAX glue."""
    return jax.lax.reduce_window(
        x, -jnp.inf, jax.lax.max,
        window_dimensions=(1, 1, 1, 2, 2, 2),
        window_strides=(1, 1, 1, 2, 2, 2),
        padding="VALID")


def image_regressor(mri, pet, params, *, compute_dtype=jnp.bfloat16):
    """Mirrors ImageRegressor.forward (has_mri=has_pet=True, has_dropout=True -> no dropout)."""
    # NOTE: MRI and PET share (depth, image_dim) in this config, so both encoders run
    # batched along a leading modality axis; per-modality weights are stacked on axis 0.
    x = jnp.stack([mri, pet], axis=0)[:, None]           # (G=2, C=1, B, D, H, W)
    cw = lambda k: jnp.stack([params["mri"][k], params["pet"][k]], axis=0)
    x = conv3d_relu(x, cw("c1w"), cw("c1b"), compute_dtype=compute_dtype)
    x = maxpool3d(x)
    x = conv3d_relu(x, cw("c2w"), cw("c2b"), compute_dtype=compute_dtype)
    x = maxpool3d(x)
    x = conv3d_relu(x, cw("c3w"), cw("c3b"), compute_dtype=compute_dtype)
    x = maxpool3d(x)                                     # (2, 32, B, D/8, H/8, W/8)
    G, C, B = x.shape[:3]
    # torch's x.view(-1, flat_dim) flattens in (C, D, H, W) order:
    feats = jnp.transpose(x, (0, 2, 1, 3, 4, 5)).reshape(G, B, -1)
    out = pallas_dense_head(feats[0], feats[1], params)  # (B, 1)
    return jnp.squeeze(out)                              # (B,)


# ----------------------------------------------------------------------------- params

def _w(key, shape, fan_in):
    return jax.random.normal(key, shape, jnp.float32) * (1.0 / jnp.sqrt(float(fan_in)))


def init_encoder_params(key, depth, image_dim, embed_dim):
    ks = jax.random.split(key, 10)
    flat_dim = 32 * (depth // 8) * (image_dim // 8) * (image_dim // 8)
    return {
        "c1w": _w(ks[0], (8, 1, 3, 3, 3), 1 * 27),    "c1b": _w(ks[1], (8,), 27),
        "c2w": _w(ks[2], (16, 8, 3, 3, 3), 8 * 27),   "c2b": _w(ks[3], (16,), 8 * 27),
        "c3w": _w(ks[4], (32, 16, 3, 3, 3), 16 * 27), "c3b": _w(ks[5], (32,), 16 * 27),
        "fc1w": _w(ks[6], (embed_dim, flat_dim), flat_dim), "fc1b": _w(ks[7], (embed_dim,), flat_dim),
        "fc2w": _w(ks[8], (embed_dim, embed_dim), embed_dim), "fc2b": _w(ks[9], (embed_dim,), embed_dim),
    }


def init_params(key, depth, image_dim, embed_dim):
    k_mri, k_pet, k1, k2, k3, k4, k5, k6 = jax.random.split(key, 8)
    return {
        "mri": init_encoder_params(k_mri, depth, image_dim, embed_dim),
        "pet": init_encoder_params(k_pet, depth, image_dim, embed_dim),
        "r1w": _w(k1, (embed_dim, 2 * embed_dim), 2 * embed_dim), "r1b": _w(k2, (embed_dim,), 2 * embed_dim),
        "r2w": _w(k3, (embed_dim, embed_dim), embed_dim),         "r2b": _w(k4, (embed_dim,), embed_dim),
        "r3w": _w(k5, (1, embed_dim), embed_dim),                 "r3b": _w(k6, (1,), embed_dim),
    }


# ----------------------------------------------------------------------------- main

if __name__ == "__main__":
    # config: n_mri_channels = n_pet_channels = 8, mri_image_dim = pet_image_dim = 16,
    # embed_dim = 32, batch = 2.  flat_dim = 32 * 1 * 2 * 2 = 128.
    B, DEPTH, DIM, EMBED = 2, 8, 16, 32

    key = jax.random.PRNGKey(0)
    k_params, k_mri, k_pet = jax.random.split(key, 3)
    params = init_params(k_params, DEPTH, DIM, EMBED)

    mri = jax.random.normal(k_mri, (B, DEPTH, DIM, DIM), jnp.float32)
    pet = jax.random.normal(k_pet, (B, DEPTH, DIM, DIM), jnp.float32)

    out = jax.jit(image_regressor)(mri, pet, params)
    out = jax.block_until_ready(out)
    assert out.shape == (B,), f"unexpected output shape {out.shape}"
    print("KERNEL_OK")
</pallas_src>

<mosaic_0001>
module attributes {stable_mosaic.version = 11 : i64} {
  func.func @conv_gemm_relu_kernel(%arg0: i32, %arg1: i32, %arg2: memref<1x27x4096xbf16, #tpu.memory_space<vmem>>, %arg3: memref<1x8x27xbf16, #tpu.memory_space<vmem>>, %arg4: memref<1x8x1xf32, #tpu.memory_space<vmem>>, %arg5: memref<1x8x4096xf32, #tpu.memory_space<vmem>>) attributes {dimension_semantics = [#tpu.dimension_semantics<parallel>, #tpu.dimension_semantics<parallel>], iteration_bounds = array<i64: 2, 1>, scalar_prefetch = 0 : i64, scratch_operands = 0 : i64, tpu.core_type = #tpu.core_type<tc>, window_params = [{transform_indices = @transform_0, window_bounds = array<i64: 1, 27, 4096>}, {transform_indices = @transform_1, window_bounds = array<i64: 1, 8, 27>}, {transform_indices = @transform_2, window_bounds = array<i64: 1, 8, 1>}, {transform_indices = @transform_3, window_bounds = array<i64: 1, 8, 4096>}]} {
    %c0 = arith.constant 0 : index
    %c0_0 = arith.constant 0 : index
    %c0_1 = arith.constant 0 : index
    %0 = vector.load %arg3[%c0, %c0_0, %c0_1] : memref<1x8x27xbf16, #tpu.memory_space<vmem>>, vector<1x8x27xbf16>
    %1 = vector.shape_cast %0 : vector<1x8x27xbf16> to vector<8x27xbf16>
    %c0_2 = arith.constant 0 : index
    %c0_3 = arith.constant 0 : index
    %c0_4 = arith.constant 0 : index
    %2 = vector.load %arg2[%c0_2, %c0_3, %c0_4] : memref<1x27x4096xbf16, #tpu.memory_space<vmem>>, vector<1x27x4096xbf16>
    %3 = vector.shape_cast %2 : vector<1x27x4096xbf16> to vector<27x4096xbf16>
    %cst = arith.constant dense<0.000000e+00> : vector<8x4096xf32>
    %4 = tpu.matmul %1, %3, %cst {dimension_numbers = #tpu.dot_dimension_numbers<[1], [0], [0], [1], [0, 0, 1, 1], [], []>} : vector<8x27xbf16>, vector<27x4096xbf16>, vector<8x4096xf32> -> vector<8x4096xf32>
    %c0_5 = arith.constant 0 : index
    %c0_6 = arith.constant 0 : index
    %c0_7 = arith.constant 0 : index
    %5 = vector.load %arg4[%c0_5, %c0_6, %c0_7] : memref<1x8x1xf32, #tpu.memory_space<vmem>>, vector<1x8x1xf32>
    %6 = vector.shape_cast %5 : vector<1x8x1xf32> to vector<8x1xf32>
    %7 = vector.broadcast %6 : vector<8x1xf32> to vector<8x4096xf32>
    %8 = arith.addf %4, %7 : vector<8x4096xf32>
    %cst_8 = arith.constant 0.000000e+00 : f32
    %9 = vector.broadcast %cst_8 : f32 to vector<8x4096xf32>
    %10 = arith.maximumf %8, %9 : vector<8x4096xf32>
    %c0_9 = arith.constant 0 : index
    %c0_10 = arith.constant 0 : index
    %c0_11 = arith.constant 0 : index
    %11 = vector.load %arg5[%c0_9, %c0_10, %c0_11] : memref<1x8x4096xf32, #tpu.memory_space<vmem>>, vector<1x8x4096xf32>
    %12 = vector.shape_cast %11 : vector<1x8x4096xf32> to vector<8x4096xf32>
    %13 = vector.shape_cast %10 : vector<8x4096xf32> to vector<1x8x4096xf32>
    tpu.vector_store %arg5[%c0_9, %c0_10, %c0_11], %13 {strides = array<i32>} : memref<1x8x4096xf32, #tpu.memory_space<vmem>>, vector<1x8x4096xf32>,
    return
  }
  func.func @transform_0(%arg0: i32, %arg1: i32) -> (i32, i32, i32) {
    %c0_i32 = arith.constant 0 : i32
    %c0_i32_0 = arith.constant 0 : i32
    return %arg0, %c0_i32, %arg1 : i32, i32, i32
  }
  func.func @transform_1(%arg0: i32, %arg1: i32) -> (i32, i32, i32) {
    %c0_i32 = arith.constant 0 : i32
    %c0_i32_0 = arith.constant 0 : i32
    %c0_i32_1 = arith.constant 0 : i32
    return %arg0, %c0_i32, %c0_i32_0 : i32, i32, i32
  }
  func.func @transform_2(%arg0: i32, %arg1: i32) -> (i32, i32, i32) {
    %c0_i32 = arith.constant 0 : i32
    %c0_i32_0 = arith.constant 0 : i32
    %c0_i32_1 = arith.constant 0 : i32
    return %arg0, %c0_i32, %c0_i32_0 : i32, i32, i32
  }
  func.func @transform_3(%arg0: i32, %arg1: i32) -> (i32, i32, i32) {
    %c0_i32 = arith.constant 0 : i32
    %c0_i32_0 = arith.constant 0 : i32
    return %arg0, %c0_i32, %arg1 : i32, i32, i32
  }
}

module attributes {stable_mosaic.version = 11 : i64} {
  func.func @conv_gemm_relu_kernel(%arg0: i32, %arg1: i32, %arg2: memref<1x216x512xbf16, #tpu.memory_space<vmem>>, %arg3: memref<1x16x216xbf16, #tpu.memory_space<vmem>>, %arg4: memref<1x16x1xf32, #tpu.memory_space<vmem>>, %arg5: memref<1x16x512xf32, #tpu.memory_space<vmem>>) attributes {dimension_semantics = [#tpu.dimension_semantics<parallel>, #tpu.dimension_semantics<parallel>], iteration_bounds = array<i64: 2, 1>, scalar_prefetch = 0 : i64, scratch_operands = 0 : i64, tpu.core_type = #tpu.core_type<tc>, window_params = [{transform_indices = @transform_0, window_bounds = array<i64: 1, 216, 512>}, {transform_indices = @transform_1, window_bounds = array<i64: 1, 16, 216>}, {transform_indices = @transform_2, window_bounds = array<i64: 1, 16, 1>}, {transform_indices = @transform_3, window_bounds = array<i64: 1, 16, 512>}]} {
    %c0 = arith.constant 0 : index
    %c0_0 = arith.constant 0 : index
    %c0_1 = arith.constant 0 : index
    %0 = vector.load %arg3[%c0, %c0_0, %c0_1] : memref<1x16x216xbf16, #tpu.memory_space<vmem>>, vector<1x16x216xbf16>
    %1 = vector.shape_cast %0 : vector<1x16x216xbf16> to vector<16x216xbf16>
    %c0_2 = arith.constant 0 : index
    %c0_3 = arith.constant 0 : index
    %c0_4 = arith.constant 0 : index
    %2 = vector.load %arg2[%c0_2, %c0_3, %c0_4] : memref<1x216x512xbf16, #tpu.memory_space<vmem>>, vector<1x216x512xbf16>
    %3 = vector.shape_cast %2 : vector<1x216x512xbf16> to vector<216x512xbf16>
    %cst = arith.constant dense<0.000000e+00> : vector<16x512xf32>
    %4 = tpu.matmul %1, %3, %cst {dimension_numbers = #tpu.dot_dimension_numbers<[1], [0], [0], [1], [0, 0, 1, 1], [], []>} : vector<16x216xbf16>, vector<216x512xbf16>, vector<16x512xf32> -> vector<16x512xf32>
    %c0_5 = arith.constant 0 : index
    %c0_6 = arith.constant 0 : index
    %c0_7 = arith.constant 0 : index
    %5 = vector.load %arg4[%c0_5, %c0_6, %c0_7] : memref<1x16x1xf32, #tpu.memory_space<vmem>>, vector<1x16x1xf32>
    %6 = vector.shape_cast %5 : vector<1x16x1xf32> to vector<16x1xf32>
    %7 = vector.broadcast %6 : vector<16x1xf32> to vector<16x512xf32>
    %8 = arith.addf %4, %7 : vector<16x512xf32>
    %cst_8 = arith.constant 0.000000e+00 : f32
    %9 = vector.broadcast %cst_8 : f32 to vector<16x512xf32>
    %10 = arith.maximumf %8, %9 : vector<16x512xf32>
    %c0_9 = arith.constant 0 : index
    %c0_10 = arith.constant 0 : index
    %c0_11 = arith.constant 0 : index
    %11 = vector.load %arg5[%c0_9, %c0_10, %c0_11] : memref<1x16x512xf32, #tpu.memory_space<vmem>>, vector<1x16x512xf32>
    %12 = vector.shape_cast %11 : vector<1x16x512xf32> to vector<16x512xf32>
    %13 = vector.shape_cast %10 : vector<16x512xf32> to vector<1x16x512xf32>
    tpu.vector_store %arg5[%c0_9, %c0_10, %c0_11], %13 {strides = array<i32>} : memref<1x16x512xf32, #tpu.memory_space<vmem>>, vector<1x16x512xf32>,
    return
  }
  func.func @transform_0(%arg0: i32, %arg1: i32) -> (i32, i32, i32) {
    %c0_i32 = arith.constant 0 : i32
    %c0_i32_0 = arith.constant 0 : i32
    return %arg0, %c0_i32, %arg1 : i32, i32, i32
  }
  func.func @transform_1(%arg0: i32, %arg1: i32) -> (i32, i32, i32) {
    %c0_i32 = arith.constant 0 : i32
    %c0_i32_0 = arith.constant 0 : i32
    %c0_i32_1 = arith.constant 0 : i32
    return %arg0, %c0_i32, %c0_i32_0 : i32, i32, i32
  }
  func.func @transform_2(%arg0: i32, %arg1: i32) -> (i32, i32, i32) {
    %c0_i32 = arith.constant 0 : i32
    %c0_i32_0 = arith.constant 0 : i32
    %c0_i32_1 = arith.constant 0 : i32
    return %arg0, %c0_i32, %c0_i32_0 : i32, i32, i32
  }
  func.func @transform_3(%arg0: i32, %arg1: i32) -> (i32, i32, i32) {
    %c0_i32 = arith.constant 0 : i32
    %c0_i32_0 = arith.constant 0 : i32
    return %arg0, %c0_i32, %arg1 : i32, i32, i32
  }
}

module attributes {stable_mosaic.version = 11 : i64} {
  func.func @conv_gemm_relu_kernel(%arg0: i32, %arg1: i32, %arg2: memref<1x432x64xbf16, #tpu.memory_space<vmem>>, %arg3: memref<1x32x432xbf16, #tpu.memory_space<vmem>>, %arg4: memref<1x32x1xf32, #tpu.memory_space<vmem>>, %arg5: memref<1x32x64xf32, #tpu.memory_space<vmem>>) attributes {dimension_semantics = [#tpu.dimension_semantics<parallel>, #tpu.dimension_semantics<parallel>], iteration_bounds = array<i64: 2, 1>, scalar_prefetch = 0 : i64, scratch_operands = 0 : i64, tpu.core_type = #tpu.core_type<tc>, window_params = [{transform_indices = @transform_0, window_bounds = array<i64: 1, 432, 64>}, {transform_indices = @transform_1, window_bounds = array<i64: 1, 32, 432>}, {transform_indices = @transform_2, window_bounds = array<i64: 1, 32, 1>}, {transform_indices = @transform_3, window_bounds = array<i64: 1, 32, 64>}]} {
    %c0 = arith.constant 0 : index
    %c0_0 = arith.constant 0 : index
    %c0_1 = arith.constant 0 : index
    %0 = vector.load %arg3[%c0, %c0_0, %c0_1] : memref<1x32x432xbf16, #tpu.memory_space<vmem>>, vector<1x32x432xbf16>
    %1 = vector.shape_cast %0 : vector<1x32x432xbf16> to vector<32x432xbf16>
    %c0_2 = arith.constant 0 : index
    %c0_3 = arith.constant 0 : index
    %c0_4 = arith.constant 0 : index
    %2 = vector.load %arg2[%c0_2, %c0_3, %c0_4] : memref<1x432x64xbf16, #tpu.memory_space<vmem>>, vector<1x432x64xbf16>
    %3 = vector.shape_cast %2 : vector<1x432x64xbf16> to vector<432x64xbf16>
    %cst = arith.constant dense<0.000000e+00> : vector<32x64xf32>
    %4 = tpu.matmul %1, %3, %cst {dimension_numbers = #tpu.dot_dimension_numbers<[1], [0], [0], [1], [0, 0, 1, 1], [], []>} : vector<32x432xbf16>, vector<432x64xbf16>, vector<32x64xf32> -> vector<32x64xf32>
    %c0_5 = arith.constant 0 : index
    %c0_6 = arith.constant 0 : index
    %c0_7 = arith.constant 0 : index
    %5 = vector.load %arg4[%c0_5, %c0_6, %c0_7] : memref<1x32x1xf32, #tpu.memory_space<vmem>>, vector<1x32x1xf32>
    %6 = vector.shape_cast %5 : vector<1x32x1xf32> to vector<32x1xf32>
    %7 = vector.broadcast %6 : vector<32x1xf32> to vector<32x64xf32>
    %8 = arith.addf %4, %7 : vector<32x64xf32>
    %cst_8 = arith.constant 0.000000e+00 : f32
    %9 = vector.broadcast %cst_8 : f32 to vector<32x64xf32>
    %10 = arith.maximumf %8, %9 : vector<32x64xf32>
    %c0_9 = arith.constant 0 : index
    %c0_10 = arith.constant 0 : index
    %c0_11 = arith.constant 0 : index
    %11 = vector.load %arg5[%c0_9, %c0_10, %c0_11] : memref<1x32x64xf32, #tpu.memory_space<vmem>>, vector<1x32x64xf32>
    %12 = vector.shape_cast %11 : vector<1x32x64xf32> to vector<32x64xf32>
    %13 = vector.shape_cast %10 : vector<32x64xf32> to vector<1x32x64xf32>
    tpu.vector_store %arg5[%c0_9, %c0_10, %c0_11], %13 {strides = array<i32>} : memref<1x32x64xf32, #tpu.memory_space<vmem>>, vector<1x32x64xf32>,
    return
  }
  func.func @transform_0(%arg0: i32, %arg1: i32) -> (i32, i32, i32) {
    %c0_i32 = arith.constant 0 : i32
    %c0_i32_0 = arith.constant 0 : i32
    return %arg0, %c0_i32, %arg1 : i32, i32, i32
  }
  func.func @transform_1(%arg0: i32, %arg1: i32) -> (i32, i32, i32) {
    %c0_i32 = arith.constant 0 : i32
    %c0_i32_0 = arith.constant 0 : i32
    %c0_i32_1 = arith.constant 0 : i32
    return %arg0, %c0_i32, %c0_i32_0 : i32, i32, i32
  }
  func.func @transform_2(%arg0: i32, %arg1: i32) -> (i32, i32, i32) {
    %c0_i32 = arith.constant 0 : i32
    %c0_i32_0 = arith.constant 0 : i32
    %c0_i32_1 = arith.constant 0 : i32
    return %arg0, %c0_i32, %c0_i32_0 : i32, i32, i32
  }
  func.func @transform_3(%arg0: i32, %arg1: i32) -> (i32, i32, i32) {
    %c0_i32 = arith.constant 0 : i32
    %c0_i32_0 = arith.constant 0 : i32
    return %arg0, %c0_i32, %arg1 : i32, i32, i32
  }
}

module attributes {stable_mosaic.version = 11 : i64} {
  func.func @dense_head_kernel(%arg0: memref<2x128xf32, #tpu.memory_space<vmem>>, %arg1: memref<2x128xf32, #tpu.memory_space<vmem>>, %arg2: memref<128x32xf32, #tpu.memory_space<vmem>>, %arg3: memref<1x32xf32, #tpu.memory_space<vmem>>, %arg4: memref<32x32xf32, #tpu.memory_space<vmem>>, %arg5: memref<1x32xf32, #tpu.memory_space<vmem>>, %arg6: memref<128x32xf32, #tpu.memory_space<vmem>>, %arg7: memref<1x32xf32, #tpu.memory_space<vmem>>, %arg8: memref<32x32xf32, #tpu.memory_space<vmem>>, %arg9: memref<1x32xf32, #tpu.memory_space<vmem>>, %arg10: memref<32x32xf32, #tpu.memory_space<vmem>>, %arg11: memref<32x32xf32, #tpu.memory_space<vmem>>, %arg12: memref<1x32xf32, #tpu.memory_space<vmem>>, %arg13: memref<32x32xf32, #tpu.memory_space<vmem>>, %arg14: memref<1x32xf32, #tpu.memory_space<vmem>>, %arg15: memref<1x32xf32, #tpu.memory_space<vmem>>, %arg16: memref<1x1xf32, #tpu.memory_space<vmem>>, %arg17: memref<2x1xf32, #tpu.memory_space<vmem>>) attributes {dimension_semantics = [], scalar_prefetch = 0 : i64, scratch_operands = 0 : i64, tpu.core_type = #tpu.core_type<tc>} {
    %c0 = arith.constant 0 : index
    %c0_0 = arith.constant 0 : index
    %0 = vector.load %arg0[%c0, %c0_0] : memref<2x128xf32, #tpu.memory_space<vmem>>, vector<2x128xf32>
    %c0_1 = arith.constant 0 : index
    %c0_2 = arith.constant 0 : index
    %1 = vector.load %arg2[%c0_1, %c0_2] : memref<128x32xf32, #tpu.memory_space<vmem>>, vector<128x32xf32>
    %cst = arith.constant dense<0.000000e+00> : vector<2x32xf32>
    %2 = tpu.matmul %0, %1, %cst {dimension_numbers = #tpu.dot_dimension_numbers<[1], [0], [0], [1], [0, 0, 1, 1], [], []>} : vector<2x128xf32>, vector<128x32xf32>, vector<2x32xf32> -> vector<2x32xf32>
    %c0_3 = arith.constant 0 : index
    %c0_4 = arith.constant 0 : index
    %3 = vector.load %arg3[%c0_3, %c0_4] : memref<1x32xf32, #tpu.memory_space<vmem>>, vector<1x32xf32>
    %4 = vector.broadcast %3 : vector<1x32xf32> to vector<2x32xf32>
    %5 = arith.addf %2, %4 : vector<2x32xf32>
    %cst_5 = arith.constant 0.000000e+00 : f32
    %6 = vector.broadcast %cst_5 : f32 to vector<2x32xf32>
    %7 = arith.maximumf %5, %6 : vector<2x32xf32>
    %c0_6 = arith.constant 0 : index
    %c0_7 = arith.constant 0 : index
    %8 = vector.load %arg4[%c0_6, %c0_7] : memref<32x32xf32, #tpu.memory_space<vmem>>, vector<32x32xf32>
    %cst_8 = arith.constant dense<0.000000e+00> : vector<2x32xf32>
    %9 = tpu.matmul %7, %8, %cst_8 {dimension_numbers = #tpu.dot_dimension_numbers<[1], [0], [0], [1], [0, 0, 1, 1], [], []>} : vector<2x32xf32>, vector<32x32xf32>, vector<2x32xf32> -> vector<2x32xf32>
    %c0_9 = arith.constant 0 : index
    %c0_10 = arith.constant 0 : index
    %10 = vector.load %arg5[%c0_9, %c0_10] : memref<1x32xf32, #tpu.memory_space<vmem>>, vector<1x32xf32>
    %11 = vector.broadcast %10 : vector<1x32xf32> to vector<2x32xf32>
    %12 = arith.addf %9, %11 : vector<2x32xf32>
    %c0_11 = arith.constant 0 : index
    %c0_12 = arith.constant 0 : index
    %13 = vector.load %arg1[%c0_11, %c0_12] : memref<2x128xf32, #tpu.memory_space<vmem>>, vector<2x128xf32>
    %c0_13 = arith.constant 0 : index
    %c0_14 = arith.constant 0 : index
    %14 = vector.load %arg6[%c0_13, %c0_14] : memref<128x32xf32, #tpu.memory_space<vmem>>, vector<128x32xf32>
    %cst_15 = arith.constant dense<0.000000e+00> : vector<2x32xf32>
    %15 = tpu.matmul %13, %14, %cst_15 {dimension_numbers = #tpu.dot_dimension_numbers<[1], [0], [0], [1], [0, 0, 1, 1], [], []>} : vector<2x128xf32>, vector<128x32xf32>, vector<2x32xf32> -> vector<2x32xf32>
    %c0_16 = arith.constant 0 : index
    %c0_17 = arith.constant 0 : index
    %16 = vector.load %arg7[%c0_16, %c0_17] : memref<1x32xf32, #tpu.memory_space<vmem>>, vector<1x32xf32>
    %17 = vector.broadcast %16 : vector<1x32xf32> to vector<2x32xf32>
    %18 = arith.addf %15, %17 : vector<2x32xf32>
    %cst_18 = arith.constant 0.000000e+00 : f32
    %19 = vector.broadcast %cst_18 : f32 to vector<2x32xf32>
    %20 = arith.maximumf %18, %19 : vector<2x32xf32>
    %c0_19 = arith.constant 0 : index
    %c0_20 = arith.constant 0 : index
    %21 = vector.load %arg8[%c0_19, %c0_20] : memref<32x32xf32, #tpu.memory_space<vmem>>, vector<32x32xf32>
    %cst_21 = arith.constant dense<0.000000e+00> : vector<2x32xf32>
    %22 = tpu.matmul %20, %21, %cst_21 {dimension_numbers = #tpu.dot_dimension_numbers<[1], [0], [0], [1], [0, 0, 1, 1], [], []>} : vector<2x32xf32>, vector<32x32xf32>, vector<2x32xf32> -> vector<2x32xf32>
    %c0_22 = arith.constant 0 : index
    %c0_23 = arith.constant 0 : index
    %23 = vector.load %arg9[%c0_22, %c0_23] : memref<1x32xf32, #tpu.memory_space<vmem>>, vector<1x32xf32>
    %24 = vector.broadcast %23 : vector<1x32xf32> to vector<2x32xf32>
    %25 = arith.addf %22, %24 : vector<2x32xf32>
    %c0_24 = arith.constant 0 : index
    %c0_25 = arith.constant 0 : index
    %26 = vector.load %arg10[%c0_24, %c0_25] : memref<32x32xf32, #tpu.memory_space<vmem>>, vector<32x32xf32>
    %cst_26 = arith.constant dense<0.000000e+00> : vector<2x32xf32>
    %27 = tpu.matmul %12, %26, %cst_26 {dimension_numbers = #tpu.dot_dimension_numbers<[1], [0], [0], [1], [0, 0, 1, 1], [], []>} : vector<2x32xf32>, vector<32x32xf32>, vector<2x32xf32> -> vector<2x32xf32>
    %c0_27 = arith.constant 0 : index
    %c0_28 = arith.constant 0 : index
    %28 = vector.load %arg11[%c0_27, %c0_28] : memref<32x32xf32, #tpu.memory_space<vmem>>, vector<32x32xf32>
    %cst_29 = arith.constant dense<0.000000e+00> : vector<2x32xf32>
    %29 = tpu.matmul %25, %28, %cst_29 {dimension_numbers = #tpu.dot_dimension_numbers<[1], [0], [0], [1], [0, 0, 1, 1], [], []>} : vector<2x32xf32>, vector<32x32xf32>, vector<2x32xf32> -> vector<2x32xf32>
    %30 = arith.addf %27, %29 : vector<2x32xf32>
    %c0_30 = arith.constant 0 : index
    %c0_31 = arith.constant 0 : index
    %31 = vector.load %arg12[%c0_30, %c0_31] : memref<1x32xf32, #tpu.memory_space<vmem>>, vector<1x32xf32>
    %32 = vector.broadcast %31 : vector<1x32xf32> to vector<2x32xf32>
    %33 = arith.addf %30, %32 : vector<2x32xf32>
    %cst_32 = arith.constant 0.000000e+00 : f32
    %34 = vector.broadcast %cst_32 : f32 to vector<2x32xf32>
    %35 = arith.maximumf %33, %34 : vector<2x32xf32>
    %c0_33 = arith.constant 0 : index
    %c0_34 = arith.constant 0 : index
    %36 = vector.load %arg13[%c0_33, %c0_34] : memref<32x32xf32, #tpu.memory_space<vmem>>, vector<32x32xf32>
    %cst_35 = arith.constant dense<0.000000e+00> : vector<2x32xf32>
    %37 = tpu.matmul %35, %36, %cst_35 {dimension_numbers = #tpu.dot_dimension_numbers<[1], [0], [0], [1], [0, 0, 1, 1], [], []>} : vector<2x32xf32>, vector<32x32xf32>, vector<2x32xf32> -> vector<2x32xf32>
    %c0_36 = arith.constant 0 : index
    %c0_37 = arith.constant 0 : index
    %38 = vector.load %arg14[%c0_36, %c0_37] : memref<1x32xf32, #tpu.memory_space<vmem>>, vector<1x32xf32>
    %39 = vector.broadcast %38 : vector<1x32xf32> to vector<2x32xf32>
    %40 = arith.addf %37, %39 : vector<2x32xf32>
    %cst_38 = arith.constant 0.000000e+00 : f32
    %41 = vector.broadcast %cst_38 : f32 to vector<2x32xf32>
    %42 = arith.maximumf %40, %41 : vector<2x32xf32>
    %c0_39 = arith.constant 0 : index
    %c0_40 = arith.constant 0 : index
    %43 = vector.load %arg15[%c0_39, %c0_40] : memref<1x32xf32, #tpu.memory_space<vmem>>, vector<1x32xf32>
    %44 = vector.broadcast %43 : vector<1x32xf32> to vector<2x32xf32>
    %45 = arith.mulf %42, %44 : vector<2x32xf32>
    %cst_41 = arith.constant dense<0.000000e+00> : vector<2xf32>
    %46 = vector.multi_reduction <add>, %45, %cst_41 [1] : vector<2x32xf32> to vector<2xf32>
    %47 = vector.shape_cast %46 : vector<2xf32> to vector<2x1xf32>
    %c0_42 = arith.constant 0 : index
    %c0_43 = arith.constant 0 : index
    %48 = vector.load %arg16[%c0_42, %c0_43] : memref<1x1xf32, #tpu.memory_space<vmem>>, vector<1x1xf32>
    %49 = vector.broadcast %48 : vector<1x1xf32> to vector<2x1xf32>
    %50 = arith.addf %47, %49 : vector<2x1xf32>
    %c0_44 = arith.constant 0 : index
    %c0_45 = arith.constant 0 : index
    %51 = vector.load %arg17[%c0_44, %c0_45] : memref<2x1xf32, #tpu.memory_space<vmem>>, vector<2x1xf32>
    tpu.vector_store %arg17[%c0_44, %c0_45], %50 {strides = array<i32>} : memref<2x1xf32, #tpu.memory_space<vmem>>, vector<2x1xf32>,
    return
  }
}

</mosaic_0001>

<llo_original>
// kernel: image_regressor.4
$region0: #{image_regressor.4}
  #allocation0 [shape = 'u32[]', space=smem, size = 0x4, offset = 0x4, fixed_abs, tag = 'smem constant byte address 0x4 - core index']
  #allocation1 [shape = 'u32[144,128]{1,0:T(1,128)}', space=vmem, size = 0x12000, scoped, tag = 'internal scratch']
  %s0 = inlined_call_operand.vmem [shape: bf16[2,27,4096], index: 0, kind: input, shape index: {}]
  %s1 = inlined_call_operand.vmem [shape: bf16[2,8,27], index: 1, kind: input, shape index: {}]
  %s2 = inlined_call_operand.vmem [shape: f32[2,8,1], index: 2, kind: input, shape index: {}]
  %s3 = inlined_call_operand.vmem [shape: f32[2,8,4096], index: 3, kind: output, shape index: {}]
  %s4 = sld [smem:[#allocation0]]
  $region45: #{image_regressor.4} parent=0
    _
  %s6 = ssub.s32 1, %s4
  %s7 = scalar_select 0, %s6, %s4
  loop: start=0, step=1, limit=4
  $region2: #{image_regressor.4} parent=0 // loop_pre_header
    _
  $region3: #{image_regressor.4} parent=0 // loop_header
    %s9 = sphi 0, %s13
    %p10 = scmp.ge.s32.totalorder %s9, 4
    %s16 = sphi 0, %s28
    %s17 = sphi 0, %s24
    %s18 = sphi 0, %s16
    %s19 = sphi 0, %s17
    %s20 = sphi 0, %s18
    %s21 = sphi 0, %s19
    %s33 = sphi 0, %s35
    %s36 = sphi 0, %s33
    %s37 = sphi 0, %s36
    %s53 = sphi 0, %s37
    %s59 = sphi 0, %s61
    %s62 = sphi 0, %s59
    %s63 = sphi 0, %s62
    %s79 = sphi 0, %s63
    %s85 = sphi 0, %s87
    %s88 = sphi 0, %s85
    %s89 = sphi 0, %s88
    %s105 = sphi 0, %s89
    %s113 = sphi 0, %s115
    %s116 = sphi 0, %s113
    %s117 = sphi 0, %s116
    %s133 = sphi 0, %s117
  $region4: #{image_regressor.4} parent=0 // loop_header_branch
    %12 = sbr.rel (%p10) target = $region8
  $region5: #{image_regressor.4} parent=0 // loop_body
    %s14 = ssub.s32 %s9, 1
    %s15 = ssub.s32 %s9, 2
    %s22 = sadd.s32 1, %s17
    %p23 = scmp.ge.s32.totalorder %s22, 1
    %s24 = scalar_select %p23, 0, %s22
    %s25 = sadd.s32 1, %s16
    %s26 = scalar_select %p23, %s25, %s16
    %p27 = scmp.ge.s32.totalorder %s26, 2
    %s28 = scalar_select %p27, 0, %s26
    %s29 = ssub.s32 %s16, %s28
    %s30 = ssub.s32 %s17, %s24
    %s31 = sor.u32 %s29, %s30
    %p32 = scmp.eq.s32.totalorder %s31, 0
    %s34 = sadd.s32 %s33, 1
    %s35 = scalar_select %p32, %s33, %s34
    %p38 = pneg %p32
    %p39 = scmp.eq.s32.totalorder %s9, 1
    %p40 = por %p38, %p39
    %p41 = scmp.ne.s32.totalorder %s33, %s36
    %p42 = scmp.eq.s32.totalorder %s9, 0
    %p43 = por %p41, %p42
    %p44 = scmp.ne.s32.totalorder %s33, %s36
    %p45 = scmp.eq.s32.totalorder %s14, 1
    %p46 = por %p44, %p45
    %p47 = scmp.ne.s32.totalorder %s36, %s37
    %p48 = scmp.eq.s32.totalorder %s14, 0
    %p49 = por %p47, %p48
    %p50 = scmp.ne.s32.totalorder %s36, %s37
    %p51 = scmp.eq.s32.totalorder %s15, 1
    %p52 = por %p50, %p51
    %p54 = scmp.ne.s32.totalorder %s37, %s53
    %p55 = scmp.eq.s32.totalorder %s15, 0
    %p56 = por %p54, %p55
    %s57 = ssub.s32 %s16, %s28
    %p58 = scmp.eq.s32.totalorder %s57, 0
    %s60 = sadd.s32 %s59, 1
    %s61 = scalar_select %p58, %s59, %s60
    %p64 = pneg %p58
    %p65 = scmp.eq.s32.totalorder %s9, 1
    %p66 = por %p64, %p65
    %p67 = scmp.ne.s32.totalorder %s59, %s62
    %p68 = scmp.eq.s32.totalorder %s9, 0
    %p69 = por %p67, %p68
    %p70 = scmp.ne.s32.totalorder %s59, %s62
    %p71 = scmp.eq.s32.totalorder %s14, 1
    %p72 = por %p70, %p71
    %p73 = scmp.ne.s32.totalorder %s62, %s63
    %p74 = scmp.eq.s32.totalorder %s14, 0
    %p75 = por %p73, %p74
    %p76 = scmp.ne.s32.totalorder %s62, %s63
    %p77 = scmp.eq.s32.totalorder %s15, 1
    %p78 = por %p76, %p77
    %p80 = scmp.ne.s32.totalorder %s63, %s79
    %p81 = scmp.eq.s32.totalorder %s15, 0
    %p82 = por %p80, %p81
    %s83 = ssub.s32 %s16, %s28
    %p84 = scmp.eq.s32.totalorder %s83, 0
    %s86 = sadd.s32 %s85, 1
    %s87 = scalar_select %p84, %s85, %s86
    %p90 = pneg %p84
    %p91 = scmp.eq.s32.totalorder %s9, 1
    %p92 = por %p90, %p91
    %p93 = scmp.ne.s32.totalorder %s85, %s88
    %p94 = scmp.eq.s32.totalorder %s9, 0
    %p95 = por %p93, %p94
    %p96 = scmp.ne.s32.totalorder %s85, %s88
    %p97 = scmp.eq.s32.totalorder %s14, 1
    %p98 = por %p96, %p97
    %p99 = scmp.ne.s32.totalorder %s88, %s89
    %p100 = scmp.eq.s32.totalorder %s14, 0
    %p101 = por %p99, %p100
    %p102 = scmp.ne.s32.totalorder %s88, %s89
    %p103 = scmp.eq.s32.totalorder %s15, 1
    %p104 = por %p102, %p103
    %p106 = scmp.ne.s32.totalorder %s89, %s105
    %p107 = scmp.eq.s32.totalorder %s15, 0
    %p108 = por %p106, %p107
    %s109 = ssub.s32 %s16, %s28
    %s110 = ssub.s32 %s17, %s24
    %s111 = sor.u32 %s109, %s110
    %p112 = scmp.eq.s32.totalorder %s111, 0
    %s114 = sadd.s32 %s113, 1
    %s115 = scalar_select %p112, %s113, %s114
    %p118 = pneg %p112
    %p119 = scmp.eq.s32.totalorder %s9, 1
    %p120 = por %p118, %p119
    %p121 = scmp.ne.s32.totalorder %s113, %s116
    %p122 = scmp.eq.s32.totalorder %s9, 0
    %p123 = por %p121, %p122
    %p124 = scmp.ne.s32.totalorder %s113, %s116
    %p125 = scmp.eq.s32.totalorder %s14, 1
    %p126 = por %p124, %p125
    %p127 = scmp.ne.s32.totalorder %s116, %s117
    %p128 = scmp.eq.s32.totalorder %s14, 0
    %p129 = por %p127, %p128
    %p130 = scmp.ne.s32.totalorder %s116, %s117
    %p131 = scmp.eq.s32.totalorder %s15, 1
    %p132 = por %p130, %p131
    %p134 = scmp.ne.s32.totalorder %s117, %s133
    %p135 = scmp.eq.s32.totalorder %s15, 0
    %p136 = por %p134, %p135
    %p137 = scmp.le.s32.totalorder 1, %s9
    %p138 = scmp.lt.s32.totalorder %s9, 3
    %p139 = pnand %p137, %p138
    %p140 = pneg %p139
    // Predicated region
    $region9: #{image_regressor.4} parent=5 // pred_check
      _
    $region10: #{image_regressor.4} parent=5 // pred_check_branch
      %142 = sbr.rel (%p139) target = $region12
    $region11: #{image_regressor.4} parent=5 // pred_region
      %s143 = ssub.s32 %s9, 1
    $region12: #{image_regressor.4} parent=5 // pred_fallthru
      _
    %p144 = scmp.lt.s32.totalorder %s9, 2
    // Predicated region
    $region13: #{image_regressor.4} parent=5 // pred_check
      %p145 = pneg %p144
    $region14: #{image_regressor.4} parent=5 // pred_check_branch
      %147 = sbr.rel (%p145) target = $region16
    $region15: #{image_regressor.4} parent=5 // pred_region
      // Predicated region
      $region17: #{image_regressor.4} parent=15 // pred_check
        %p148 = pneg %p43
      $region18: #{image_regressor.4} parent=15 // pred_check_branch
        %150 = sbr.rel (%p148) target = $region20
      $region19: #{image_regressor.4} parent=15 // pred_region
        %s151 = smul.u32 32, %s17
        %p152 = scmp.lt.s32.totalorder %s16, 1
        %s153 = scalar_select %p152, %s16, 1
        %p154 = scmp.lt.s32.totalorder %s151, 31
        %s155 = scalar_select %p154, %s151, 31
        %s156 = smul.addr %s153, 128
        %s157 = sadd.s32 %s155, %s156
        %s158 = smul.addr %s157, 4
        %s159 = scalar_lea.vmem %s0, %s158
        %s160 = smul.u32 32, %s17
      $region20: #{image_regressor.4} parent=15 // pred_fallthru
        _
      // Predicated region
      $region21: #{image_regressor.4} parent=15 // pred_check
        %p161 = pneg %p69
      $region22: #{image_regressor.4} parent=15 // pred_check_branch
        %163 = sbr.rel (%p161) target = $region24
      $region23: #{image_regressor.4} parent=15 // pred_region
        %p164 = scmp.lt.s32.totalorder %s16, 1
        %s165 = scalar_select %p164, %s16, 1
        %s166 = smul.addr %s165, 4
        %s167 = scalar_lea.vmem %s1, %s166
      $region24: #{image_regressor.4} parent=15 // pred_fallthru
        _
      // Predicated region
      $region25: #{image_regressor.4} parent=15 // pred_check
        %p168 = pneg %p95
      $region26: #{image_regressor.4} parent=15 // pred_check_branch
        %170 = sbr.rel (%p168) target = $region28
      $region27: #{image_regressor.4} parent=15 // pred_region
        %p171 = scmp.lt.s32.totalorder %s16, 1
        %s172 = scalar_select %p171, %s16, 1
        %s173 = smul.addr %s172, 8
        %s174 = scalar_lea.vmem %s2, %s173
      $region28: #{image_regressor.4} parent=15 // pred_fallthru
        _
    $region16: #{image_regressor.4} parent=5 // pred_fallthru
      _
    %p175 = scmp.le.s32.totalorder 1, %s9
    %p176 = scmp.lt.s32.totalorder %s9, 3
    %p177 = pnand %p175, %p176
    %p178 = pneg %p177
    // Predicated region
    $region29: #{image_regressor.4} parent=5 // pred_check
      _
    $region30: #{image_regressor.4} parent=5 // pred_check_branch
      %180 = sbr.rel (%p177) target = $region32
    $region31: #{image_regressor.4} parent=5 // pred_region
      %s181 = ssub.s32 %s9, 1
      %s182 = smul.u32 32, %s19
      %p183 = scmp.lt.s32.totalorder %s18, 1
      %s184 = scalar_select %p183, %s18, 1
      %p185 = scmp.lt.s32.totalorder %s182, 31
      %s186 = scalar_select %p185, %s182, 31
      %s187 = smul.addr %s184, 128
      %s188 = sadd.s32 %s186, %s187
      %s189 = smul.addr %s188, 4
      %s190 = scalar_lea.vmem %s0, %s189
      %p191 = pneg %p49
      %p192 = pneg %p46
      %p193 = scmp.lt.s32.totalorder %s18, 1
      %s194 = scalar_select %p193, %s18, 1
      %s195 = smul.addr %s194, 4
      %s196 = scalar_lea.vmem %s1, %s195
      %p197 = pneg %p75
      %p198 = pneg %p72
      %p199 = scmp.lt.s32.totalorder %s18, 1
      %s200 = scalar_select %p199, %s18, 1
      %s201 = smul.addr %s200, 8
      %s202 = scalar_lea.vmem %s2, %s201
      %p203 = pneg %p101
      %p204 = pneg %p98
      %p205 = pneg %p129
      %p206 = pneg %p126
      %s207 = smul.u32 32, %s19
      %p208 = scmp.lt.s32.totalorder %s18, 1
      %s209 = scalar_select %p208, %s18, 1
      %p210 = scmp.lt.s32.totalorder %s207, 31
      %s211 = scalar_select %p210, %s207, 31
      %s212 = smul.addr %s209, 32
      %s213 = sadd.s32 %s211, %s212
      %s214 = smul.addr %s213, 8
      %s215 = scalar_lea.vmem %s3, %s214
      %s216 = smul.u32 32, %s19
      %p217 = scmp.lt.s32.totalorder %s18, 1
      %s218 = scalar_select %p217, %s18, 1
      %p219 = scmp.lt.s32.totalorder %s216, 31
      %s220 = scalar_select %p219, %s216, 31
      %s221 = smul.addr %s218, 128
      %s222 = sadd.s32 %s220, %s221
      %s223 = smul.addr %s222, 4
      %s224 = scalar_lea.vmem %s0, %s223
      %s225 = smul.u32 32, %s19
      %p226 = scmp.lt.s32.totalorder %s18, 1
      %s227 = scalar_select %p226, %s18, 1
      %s228 = smul.addr %s227, 4
      %s229 = scalar_lea.vmem %s1, %s228
      %p230 = scmp.lt.s32.totalorder %s18, 1
      %s231 = scalar_select %p230, %s18, 1
      %s232 = smul.addr %s231, 8
      %s233 = scalar_lea.vmem %s2, %s232
      %s234 = smul.u32 32, %s19
      %p235 = scmp.lt.s32.totalorder %s18, 1
      %s236 = scalar_select %p235, %s18, 1
      %p237 = scmp.lt.s32.totalorder %s234, 31
      %s238 = scalar_select %p237, %s234, 31
      %s239 = smul.addr %s236, 32
      %s240 = sadd.s32 %s238, %s239
      %s241 = smul.addr %s240, 8
      %s242 = scalar_lea.vmem %s3, %s241
      %s243 = smul.u32 32, %s19
      %v245 = vld [vmem:[%s229] sm:$0xf]
      %v246 = vld [vmem:[%s224] sm:$0xff]
      %v247 = vld [vmem:[%s224 + $0x8] sm:$0xff]
      %v248 = vld [vmem:[%s224 + $0x10] sm:$0xff]
      %v249 = vld [vmem:[%s224 + $0x18] sm:$0xff]
      %v250 = vld [vmem:[%s224 + $0x20] sm:$0xff]
      %v251 = vld [vmem:[%s224 + $0x28] sm:$0xff]
      %v252 = vld [vmem:[%s224 + $0x30] sm:$0xff]
      %v253 = vld [vmem:[%s224 + $0x38] sm:$0xff]
      %v254 = vld [vmem:[%s224 + $0x40] sm:$0xff]
      %v255 = vld [vmem:[%s224 + $0x48] sm:$0xff]
      %v256 = vld [vmem:[%s224 + $0x50] sm:$0xff]
      %v257 = vld [vmem:[%s224 + $0x58] sm:$0xff]
      %v258 = vld [vmem:[%s224 + $0x60] sm:$0xff]
      %v259 = vld [vmem:[%s224 + $0x68] sm:$0xff]
      %v260 = vld [vmem:[%s224 + $0x70] sm:$0xff]
      %v261 = vld [vmem:[%s224 + $0x78] sm:$0xff]
      %v262 = vld [vmem:[%s224 + $0x80] sm:$0xff]
      %v263 = vld [vmem:[%s224 + $0x88] sm:$0xff]
      %v264 = vld [vmem:[%s224 + $0x90] sm:$0xff]
      %v265 = vld [vmem:[%s224 + $0x98] sm:$0xff]
      %v266 = vld [vmem:[%s224 + $0xa0] sm:$0xff]
      %v267 = vld [vmem:[%s224 + $0xa8] sm:$0xff]
      %v268 = vld [vmem:[%s224 + $0xb0] sm:$0xff]
      %v269 = vld [vmem:[%s224 + $0xb8] sm:$0xff]
      %v270 = vld [vmem:[%s224 + $0xc0] sm:$0xff]
      %v271 = vld [vmem:[%s224 + $0xc8] sm:$0xff]
      %v272 = vld [vmem:[%s224 + $0xd0] sm:$0xff]
      %v273 = vld [vmem:[%s224 + $0xd8] sm:$0xff]
      %v274 = vld [vmem:[%s224 + $0xe0] sm:$0xff]
      %v275 = vld [vmem:[%s224 + $0xe8] sm:$0xff]
      %v276 = vld [vmem:[%s224 + $0xf0] sm:$0xff]
      %v277 = vld [vmem:[%s224 + $0xf8] sm:$0xff]
      %v278 = vld [vmem:[%s224 + $0x100] sm:$0xff]
      %v279 = vld [vmem:[%s224 + $0x108] sm:$0xff]
      %v280 = vld [vmem:[%s224 + $0x110] sm:$0xff]
      %v281 = vld [vmem:[%s224 + $0x118] sm:$0xff]
      %v282 = vld [vmem:[%s224 + $0x120] sm:$0xff]
      %v283 = vld [vmem:[%s224 + $0x128] sm:$0xff]
      %v284 = vld [vmem:[%s224 + $0x130] sm:$0xff]
      %v285 = vld [vmem:[%s224 + $0x138] sm:$0xff]
      %v286 = vld [vmem:[%s224 + $0x140] sm:$0xff]
      %v287 = vld [vmem:[%s224 + $0x148] sm:$0xff]
      %v288 = vld [vmem:[%s224 + $0x150] sm:$0xff]
      %v289 = vld [vmem:[%s224 + $0x158] sm:$0xff]
      %v290 = vld [vmem:[%s224 + $0x160] sm:$0xff]
      %v291 = vld [vmem:[%s224 + $0x168] sm:$0xff]
      %v292 = vld [vmem:[%s224 + $0x170] sm:$0xff]
      %v293 = vld [vmem:[%s224 + $0x178] sm:$0xff]
      %v294 = vld [vmem:[%s224 + $0x180] sm:$0x33]
      %v295 = vld [vmem:[%s224 + $0x188] sm:$0x33]
      %v296 = vld [vmem:[%s224 + $0x190] sm:$0x33]
      %v297 = vld [vmem:[%s224 + $0x198] sm:$0x33]
      %v298 = vld [vmem:[%s224 + $0x1a0] sm:$0x33]
      %v299 = vld [vmem:[%s224 + $0x1a8] sm:$0x33]
      %v300 = vld [vmem:[%s224 + $0x1b0] sm:$0x33]
      %v301 = vld [vmem:[%s224 + $0x1b8] sm:$0x33]
      %v302 = vld [vmem:[%s224 + $0x1c0] sm:$0x33]
      %v303 = vld [vmem:[%s224 + $0x1c8] sm:$0x33]
      %v304 = vld [vmem:[%s224 + $0x1d0] sm:$0x33]
      %v305 = vld [vmem:[%s224 + $0x1d8] sm:$0x33]
      %v306 = vld [vmem:[%s224 + $0x1e0] sm:$0x33]
      %v307 = vld [vmem:[%s224 + $0x1e8] sm:$0x33]
      %v308 = vld [vmem:[%s224 + $0x1f0] sm:$0x33]
      %v309 = vld [vmem:[%s224 + $0x1f8] sm:$0x33]
      %v310 = vld [vmem:[%s233] sm:$0xff]
      %312 = vset.pattern.permute.xlu0 0
      %313 = vperm.xlu0 %312, %v310
      %v314 = vpop.permute.xlu0 %313
      %v380 = vunpack.c.l.b16 %v246
      %v381 = vunpack.c.h.b16 %v246
      %v382 = vunpack.c.l.b16 %v247
      %v383 = vunpack.c.h.b16 %v247
      %v384 = vunpack.c.l.b16 %v248
      %v385 = vunpack.c.h.b16 %v248
      %v386 = vunpack.c.l.b16 %v249
      %v387 = vunpack.c.h.b16 %v249
      %v388 = vunpack.c.l.b16 %v250
      %v389 = vunpack.c.h.b16 %v250
      %v390 = vunpack.c.l.b16 %v251
      %v391 = vunpack.c.h.b16 %v251
      %v392 = vunpack.c.l.b16 %v252
      %v393 = vunpack.c.h.b16 %v252
      %v394 = vunpack.c.l.b16 %v253
      %v395 = vunpack.c.h.b16 %v253
      %v396 = vunpack.c.l.b16 %v254
      %v397 = vunpack.c.h.b16 %v254
      %v398 = vunpack.c.l.b16 %v255
      %v399 = vunpack.c.h.b16 %v255
      %v400 = vunpack.c.l.b16 %v256
      %v401 = vunpack.c.h.b16 %v256
      %v402 = vunpack.c.l.b16 %v257
      %v403 = vunpack.c.h.b16 %v257
      %v404 = vunpack.c.l.b16 %v258
      %v405 = vunpack.c.h.b16 %v258
      %v406 = vunpack.c.l.b16 %v259
      %v407 = vunpack.c.h.b16 %v259
      %v408 = vunpack.c.l.b16 %v260
      %v409 = vunpack.c.h.b16 %v260
      %v410 = vunpack.c.l.b16 %v261
      %v411 = vunpack.c.h.b16 %v261
      %v412 = vunpack.c.l.b16 %v262
      %v413 = vunpack.c.h.b16 %v262
      %v414 = vunpack.c.l.b16 %v263
      %v415 = vunpack.c.h.b16 %v263
      %v416 = vunpack.c.l.b16 %v264
      %v417 = vunpack.c.h.b16 %v264
      %v418 = vunpack.c.l.b16 %v265
      %v419 = vunpack.c.h.b16 %v265
      %v420 = vunpack.c.l.b16 %v266
      %v421 = vunpack.c.h.b16 %v266
      %v422 = vunpack.c.l.b16 %v267
      %v423 = vunpack.c.h.b16 %v267
      %v424 = vunpack.c.l.b16 %v268
      %v425 = vunpack.c.h.b16 %v268
      %v426 = vunpack.c.l.b16 %v269
      %v427 = vunpack.c.h.b16 %v269
      %v428 = vunpack.c.l.b16 %v270
      %v429 = vunpack.c.h.b16 %v270
      %v430 = vunpack.c.l.b16 %v271
      %v431 = vunpack.c.h.b16 %v271
      %v432 = vunpack.c.l.b16 %v272
      %v433 = vunpack.c.h.b16 %v272
      %v434 = vunpack.c.l.b16 %v273
      %v435 = vunpack.c.h.b16 %v273
      %v436 = vunpack.c.l.b16 %v274
      %v437 = vunpack.c.h.b16 %v274
      %v438 = vunpack.c.l.b16 %v275
      %v439 = vunpack.c.h.b16 %v275
      %v440 = vunpack.c.l.b16 %v276
      %v441 = vunpack.c.h.b16 %v276
      %v442 = vunpack.c.l.b16 %v277
      %v443 = vunpack.c.h.b16 %v277
      %v444 = vunpack.c.l.b16 %v278
      %v445 = vunpack.c.h.b16 %v278
      %v446 = vunpack.c.l.b16 %v279
      %v447 = vunpack.c.h.b16 %v279
      %v448 = vunpack.c.l.b16 %v280
      %v449 = vunpack.c.h.b16 %v280
      %v450 = vunpack.c.l.b16 %v281
      %v451 = vunpack.c.h.b16 %v281
      %v452 = vunpack.c.l.b16 %v282
      %v453 = vunpack.c.h.b16 %v282
      %v454 = vunpack.c.l.b16 %v283
      %v455 = vunpack.c.h.b16 %v283
      %v456 = vunpack.c.l.b16 %v284
      %v457 = vunpack.c.h.b16 %v284
      %v458 = vunpack.c.l.b16 %v285
      %v459 = vunpack.c.h.b16 %v285
      %v460 = vunpack.c.l.b16 %v286
      %v461 = vunpack.c.h.b16 %v286
      %v462 = vunpack.c.l.b16 %v287
      %v463 = vunpack.c.h.b16 %v287
      %v464 = vunpack.c.l.b16 %v288
      %v465 = vunpack.c.h.b16 %v288
      %v466 = vunpack.c.l.b16 %v289
      %v467 = vunpack.c.h.b16 %v289
      %v468 = vunpack.c.l.b16 %v290
      %v469 = vunpack.c.h.b16 %v290
      %v470 = vunpack.c.l.b16 %v291
      %v471 = vunpack.c.h.b16 %v291
      %v472 = vunpack.c.l.b16 %v292
      %v473 = vunpack.c.h.b16 %v292
      %v474 = vunpack.c.l.b16 %v293
      %v475 = vunpack.c.h.b16 %v293
      %v476 = vunpack.c.l.b16 %v294
      %v477 = vunpack.c.h.b16 %v294
      %v478 = vunpack.c.l.b16 %v295
      %v479 = vunpack.c.h.b16 %v295
      %v480 = vunpack.c.l.b16 %v296
      %v481 = vunpack.c.h.b16 %v296
      %v482 = vunpack.c.l.b16 %v297
      %v483 = vunpack.c.h.b16 %v297
      %v484 = vunpack.c.l.b16 %v298
      %v485 = vunpack.c.h.b16 %v298
      %v486 = vunpack.c.l.b16 %v299
      %v487 = vunpack.c.h.b16 %v299
      %v488 = vunpack.c.l.b16 %v300
      %v489 = vunpack.c.h.b16 %v300
      %v490 = vunpack.c.l.b16 %v301
      %v491 = vunpack.c.h.b16 %v301
      %v492 = vunpack.c.l.b16 %v302
      %v493 = vunpack.c.h.b16 %v302
      %v494 = vunpack.c.l.b16 %v303
      %v495 = vunpack.c.h.b16 %v303
      %v496 = vunpack.c.l.b16 %v304
      %v497 = vunpack.c.h.b16 %v304
      %v498 = vunpack.c.l.b16 %v305
      %v499 = vunpack.c.h.b16 %v305
      %v500 = vunpack.c.l.b16 %v306
      %v501 = vunpack.c.h.b16 %v306
      %v502 = vunpack.c.l.b16 %v307
      %v503 = vunpack.c.h.b16 %v307
      %v504 = vunpack.c.l.b16 %v308
      %v505 = vunpack.c.h.b16 %v308
      %v506 = vunpack.c.l.b16 %v309
      %v507 = vunpack.c.h.b16 %v309
      %v508 = vpack.c.b16 %v412, %v380
      %v509 = vpack.c.b16 %v413, %v381
      %v510 = vpack.c.b16 %v414, %v382
      %v511 = vpack.c.b16 %v415, %v383
      %v512 = vpack.c.b16 %v416, %v384
      %v513 = vpack.c.b16 %v417, %v385
      %v514 = vpack.c.b16 %v418, %v386
      %v515 = vpack.c.b16 %v419, %v387
      %v516 = vpack.c.b16 %v420, %v388
      %v517 = vpack.c.b16 %v421, %v389
      %v518 = vpack.c.b16 %v422, %v390
      %v519 = vpack.c.b16 %v423, %v391
      %v520 = vpack.c.b16 %v424, %v392
      %v521 = vpack.c.b16 %v425, %v393
      %v522 = vpack.c.b16 %v426, %v394
      %v523 = vpack.c.b16 %v427, %v395
      %v524 = vpack.c.b16 %v428, %v396
      %v525 = vpack.c.b16 %v429, %v397
      %v526 = vpack.c.b16 %v430, %v398
      %v527 = vpack.c.b16 %v431, %v399
      %v528 = vpack.c.b16 %v432, %v400
      %v529 = vpack.c.b16 %v433, %v401
      %v530 = vpack.c.b16 %v434, %v402
      %v531 = vpack.c.b16 %v435, %v403
      %v532 = vpack.c.b16 %v436, %v404
      %v533 = vpack.c.b16 %v437, %v405
      %v534 = vpack.c.b16 %v438, %v406
      %v535 = vpack.c.b16 %v439, %v407
      %v536 = vpack.c.b16 %v440, %v408
      %v537 = vpack.c.b16 %v441, %v409
      %v538 = vpack.c.b16 %v442, %v410
      %v539 = vpack.c.b16 %v443, %v411
      %v540 = vpack.c.b16 %v476, %v444
      %v541 = vpack.c.b16 %v477, %v445
      %v542 = vpack.c.b16 %v478, %v446
      %v543 = vpack.c.b16 %v479, %v447
      %v544 = vpack.c.b16 %v480, %v448
      %v545 = vpack.c.b16 %v481, %v449
      %v546 = vpack.c.b16 %v482, %v450
      %v547 = vpack.c.b16 %v483, %v451
      %v548 = vpack.c.b16 %v484, %v452
      %v549 = vpack.c.b16 %v485, %v453
      %v550 = vpack.c.b16 %v486, %v454
      %v551 = vpack.c.b16 %v487, %v455
      %v552 = vpack.c.b16 %v488, %v456
      %v553 = vpack.c.b16 %v489, %v457
      %v554 = vpack.c.b16 %v490, %v458
      %v555 = vpack.c.b16 %v491, %v459
      %v556 = vpack.c.b16 %v492, %v460
      %v557 = vpack.c.b16 %v493, %v461
      %v558 = vpack.c.b16 %v494, %v462
      %v559 = vpack.c.b16 %v495, %v463
      %v560 = vpack.c.b16 %v496, %v464
      %v561 = vpack.c.b16 %v497, %v465
      %v562 = vpack.c.b16 %v498, %v466
      %v563 = vpack.c.b16 %v499, %v467
      %v564 = vpack.c.b16 %v500, %v468
      %v565 = vpack.c.b16 %v501, %v469
      %v566 = vpack.c.b16 %v502, %v470
      %v567 = vpack.c.b16 %v503, %v471
      %v568 = vpack.c.b16 %v504, %v472
      %v569 = vpack.c.b16 %v505, %v473
      %v570 = vpack.c.b16 %v506, %v474
      %v571 = vpack.c.b16 %v507, %v475
      %vm604 = vcmask 220160
      %v606 = vsel %vm604, %v245, 0
      %vm608 = vcmask 1044480
      %vm609 = vcmask 1045504
      %v610 = vsel %vm608, 4294967295, 65535
      %v611 = vsel %vm609, %v610, 0
      %v613 = vand.u32 %v540, %v611
      %v616 = vand.u32 %v541, %v611
      %v619 = vand.u32 %v542, %v611
      %v622 = vand.u32 %v543, %v611
      %v625 = vand.u32 %v544, %v611
      %v628 = vand.u32 %v545, %v611
      %v631 = vand.u32 %v546, %v611
      %v634 = vand.u32 %v547, %v611
      %v637 = vand.u32 %v548, %v611
      %v640 = vand.u32 %v549, %v611
      %v643 = vand.u32 %v550, %v611
      %v646 = vand.u32 %v551, %v611
      %v649 = vand.u32 %v552, %v611
      %v652 = vand.u32 %v553, %v611
      %v655 = vand.u32 %v554, %v611
      %v658 = vand.u32 %v555, %v611
      %v661 = vand.u32 %v556, %v611
      %v664 = vand.u32 %v557, %v611
      %v667 = vand.u32 %v558, %v611
      %v670 = vand.u32 %v559, %v611
      %v673 = vand.u32 %v560, %v611
      %v676 = vand.u32 %v561, %v611
      %v679 = vand.u32 %v562, %v611
      %v682 = vand.u32 %v563, %v611
      %v685 = vand.u32 %v564, %v611
      %v688 = vand.u32 %v565, %v611
      %v691 = vand.u32 %v566, %v611
      %v694 = vand.u32 %v567, %v611
      %v697 = vand.u32 %v568, %v611
      %v700 = vand.u32 %v569, %v611
      %v703 = vand.u32 %v570, %v611
      %v706 = vand.u32 %v571, %v611
      %708 = vmatprep.subr.bf16.mxu0 %v509
      %709 = vmatpush1.bf16.msra.mxu0 %v508
      %710 = vmatprep.subr.bf16.mxu0 %v616
      %711 = vmatpush1.bf16.msra.mxu0 %v613
      %712 = vmatprep.subr.bf16.mxu0 0
      %713 = vmatpush1.bf16.msra.mxu0 0
      %714 = vmatprep.subr.bf16.mxu0 0
      %715 = vmatpush1.bf16.msra.mxu0 0
      %716 = vmatprep.subr.bf16.mxu0 0
      %717 = vmatpush1.bf16.msra.mxu0 0
      %718 = vmatprep.subr.bf16.mxu0 0
      %719 = vmatpush1.bf16.msra.mxu0 0
      %720 = vmatprep.subr.bf16.mxu0 0
      %721 = vmatpush1.bf16.msra.mxu0 0
      %722 = vmatprep.subr.bf16.mxu0 0
      %723 = vmatpush1.bf16.msra.mxu0 0
      %724 = vmatprep.subr.bf16.mxu0 0
      %725 = vmatpush1.bf16.msra.mxu0 0
      %726 = vmatprep.subr.bf16.mxu0 0
      %727 = vmatpush1.bf16.msra.mxu0 0
      %728 = vmatprep.subr.bf16.mxu0 0
      %729 = vmatpush1.bf16.msra.mxu0 0
      %730 = vmatprep.subr.bf16.mxu0 0
      %731 = vmatpush1.bf16.msra.mxu0 0
      %732 = vmatprep.subr.bf16.mxu0 0
      %733 = vmatpush1.bf16.msra.mxu0 0
      %734 = vmatprep.subr.bf16.mxu0 0
      %735 = vmatpush1.bf16.msra.mxu0 0
      %736 = vmatprep.subr.bf16.mxu0 0
      %737 = vmatpush1.bf16.msra.mxu0 0
      %738 = vmatprep.subr.bf16.mxu0 0
      %739 = vmatpush1.bf16.msra.mxu0 0
      %740 = vmatprep.mubr.bf16.mxu0 0
      %741 = vmatmul.mubr.bf16.gmra.mrb[0].mxu0 %v606
      %v742 = vpop.f32.mrb[0].mxu0
      %v743 = vadd.f32 %v314, %v742
      %v744 = vpop.f32.mrb[0].mxu0
      %v745 = vadd.f32 %v314, %v744
      %v746 = vpop.f32.mrb[0].mxu0
      %v747 = vpop.f32.mrb[0].mxu0
      %748 = vdwg.mxu0
      %749 = vmatprep.subr.bf16.mxu0 %v511
      %750 = vmatpush1.bf16.msra.mxu0 %v510
      %751 = vmatprep.subr.bf16.mxu0 %v622
      %752 = vmatpush1.bf16.msra.mxu0 %v619
      %753 = vmatprep.subr.bf16.mxu0 0
      %754 = vmatpush1.bf16.msra.mxu0 0
      %755 = vmatprep.subr.bf16.mxu0 0
      %756 = vmatpush1.bf16.msra.mxu0 0
      %757 = vmatprep.subr.bf16.mxu0 0
      %758 = vmatpush1.bf16.msra.mxu0 0
      %759 = vmatprep.subr.bf16.mxu0 0
      %760 = vmatpush1.bf16.msra.mxu0 0
      %761 = vmatprep.subr.bf16.mxu0 0
      %762 = vmatpush1.bf16.msra.mxu0 0
      %763 = vmatprep.subr.bf16.mxu0 0
      %764 = vmatpush1.bf16.msra.mxu0 0
      %765 = vmatprep.subr.bf16.mxu0 0
      %766 = vmatpush1.bf16.msra.mxu0 0
      %767 = vmatprep.subr.bf16.mxu0 0
      %768 = vmatpush1.bf16.msra.mxu0 0
      %769 = vmatprep.subr.bf16.mxu0 0
      %770 = vmatpush1.bf16.msra.mxu0 0
      %771 = vmatprep.subr.bf16.mxu0 0
      %772 = vmatpush1.bf16.msra.mxu0 0
      %773 = vmatprep.subr.bf16.mxu0 0
      %774 = vmatpush1.bf16.msra.mxu0 0
      %775 = vmatprep.subr.bf16.mxu0 0
      %776 = vmatpush1.bf16.msra.mxu0 0
      %777 = vmatprep.subr.bf16.mxu0 0
      %778 = vmatpush1.bf16.msra.mxu0 0
      %779 = vmatprep.subr.bf16.mxu0 0
      %780 = vmatpush1.bf16.msra.mxu0 0
      %781 = vmatprep.mubr.bf16.mxu0 0
      %782 = vmatmul.mubr.bf16.gmra.mrb[0].mxu0 %v606
      %v783 = vpop.f32.mrb[0].mxu0
      %v784 = vadd.f32 %v314, %v783
      %v785 = vpop.f32.mrb[0].mxu0
      %v786 = vadd.f32 %v314, %v785
      %v787 = vpop.f32.mrb[0].mxu0
      %v788 = vpop.f32.mrb[0].mxu0
      %789 = vdwg.mxu0
      %790 = vmatprep.subr.bf16.mxu0 %v513
      %791 = vmatpush1.bf16.msra.mxu0 %v512
      %792 = vmatprep.subr.bf16.mxu0 %v628
      %793 = vmatpush1.bf16.msra.mxu0 %v625
      %794 = vmatprep.subr.bf16.mxu0 0
      %795 = vmatpush1.bf16.msra.mxu0 0
      %796 = vmatprep.subr.bf16.mxu0 0
      %797 = vmatpush1.bf16.msra.mxu0 0
      %798 = vmatprep.subr.bf16.mxu0 0
      %799 = vmatpush1.bf16.msra.mxu0 0
      %800 = vmatprep.subr.bf16.mxu0 0
      %801 = vmatpush1.bf16.msra.mxu0 0
      %802 = vmatprep.subr.bf16.mxu0 0
      %803 = vmatpush1.bf16.msra.mxu0 0
      %804 = vmatprep.subr.bf16.mxu0 0
      %805 = vmatpush1.bf16.msra.mxu0 0
      %806 = vmatprep.subr.bf16.mxu0 0
      %807 = vmatpush1.bf16.msra.mxu0 0
      %808 = vmatprep.subr.bf16.mxu0 0
      %809 = vmatpush1.bf16.msra.mxu0 0
      %810 = vmatprep.subr.bf16.mxu0 0
      %811 = vmatpush1.bf16.msra.mxu0 0
      %812 = vmatprep.subr.bf16.mxu0 0
      %813 = vmatpush1.bf16.msra.mxu0 0
      %814 = vmatprep.subr.bf16.mxu0 0
      %815 = vmatpush1.bf16.msra.mxu0 0
      %816 = vmatprep.subr.bf16.mxu0 0
      %817 = vmatpush1.bf16.msra.mxu0 0
      %818 = vmatprep.subr.bf16.mxu0 0
      %819 = vmatpush1.bf16.msra.mxu0 0
      %820 = vmatprep.subr.bf16.mxu0 0
      %821 = vmatpush1.bf16.msra.mxu0 0
      %822 = vmatprep.mubr.bf16.mxu0 0
      %823 = vmatmul.mubr.bf16.gmra.mrb[0].mxu0 %v606
      %v824 = vpop.f32.mrb[0].mxu0
      %v825 = vadd.f32 %v314, %v824
      %v826 = vpop.f32.mrb[0].mxu0
      %v827 = vadd.f32 %v314, %v826
      %v828 = vpop.f32.mrb[0].mxu0
      %v829 = vpop.f32.mrb[0].mxu0
      %830 = vdwg.mxu0
      %831 = vmatprep.subr.bf16.mxu0 %v515
      %832 = vmatpush1.bf16.msra.mxu0 %v514
      %833 = vmatprep.subr.bf16.mxu0 %v634
      %834 = vmatpush1.bf16.msra.mxu0 %v631
      %835 = vmatprep.subr.bf16.mxu0 0
      %836 = vmatpush1.bf16.msra.mxu0 0
      %837 = vmatprep.subr.bf16.mxu0 0
      %838 = vmatpush1.bf16.msra.mxu0 0
      %839 = vmatprep.subr.bf16.mxu0 0
      %840 = vmatpush1.bf16.msra.mxu0 0
      %841 = vmatprep.subr.bf16.mxu0 0
      %842 = vmatpush1.bf16.msra.mxu0 0
      %843 = vmatprep.subr.bf16.mxu0 0
      %844 = vmatpush1.bf16.msra.mxu0 0
      %845 = vmatprep.subr.bf16.mxu0 0
      %846 = vmatpush1.bf16.msra.mxu0 0
      %847 = vmatprep.subr.bf16.mxu0 0
      %848 = vmatpush1.bf16.msra.mxu0 0
      %849 = vmatprep.subr.bf16.mxu0 0
      %850 = vmatpush1.bf16.msra.mxu0 0
      %851 = vmatprep.subr.bf16.mxu0 0
      %852 = vmatpush1.bf16.msra.mxu0 0
      %853 = vmatprep.subr.bf16.mxu0 0
      %854 = vmatpush1.bf16.msra.mxu0 0
      %855 = vmatprep.subr.bf16.mxu0 0
      %856 = vmatpush1.bf16.msra.mxu0 0
      %857 = vmatprep.subr.bf16.mxu0 0
      %858 = vmatpush1.bf16.msra.mxu0 0
      %859 = vmatprep.subr.bf16.mxu0 0
      %860 = vmatpush1.bf16.msra.mxu0 0
      %861 = vmatprep.subr.bf16.mxu0 0
      %862 = vmatpush1.bf16.msra.mxu0 0
      %863 = vmatprep.mubr.bf16.mxu0 0
      %864 = vmatmul.mubr.bf16.gmra.mrb[0].mxu0 %v606
      %v865 = vpop.f32.mrb[0].mxu0
      %v866 = vadd.f32 %v314, %v865
      %v867 = vpop.f32.mrb[0].mxu0
      %v868 = vadd.f32 %v314, %v867
      %v869 = vpop.f32.mrb[0].mxu0
      %v870 = vpop.f32.mrb[0].mxu0
      %871 = vdwg.mxu0
      %872 = vmatprep.subr.bf16.mxu0 %v517
      %873 = vmatpush1.bf16.msra.mxu0 %v516
      %874 = vmatprep.subr.bf16.mxu0 %v640
      %875 = vmatpush1.bf16.msra.mxu0 %v637
      %876 = vmatprep.subr.bf16.mxu0 0
      %877 = vmatpush1.bf16.msra.mxu0 0
      %878 = vmatprep.subr.bf16.mxu0 0
      %879 = vmatpush1.bf16.msra.mxu0 0
      %880 = vmatprep.subr.bf16.mxu0 0
      %881 = vmatpush1.bf16.msra.mxu0 0
      %882 = vmatprep.subr.bf16.mxu0 0
      %883 = vmatpush1.bf16.msra.mxu0 0
      %884 = vmatprep.subr.bf16.mxu0 0
      %885 = vmatpush1.bf16.msra.mxu0 0
      %886 = vmatprep.subr.bf16.mxu0 0
      %887 = vmatpush1.bf16.msra.mxu0 0
      %888 = vmatprep.subr.bf16.mxu0 0
      %889 = vmatpush1.bf16.msra.mxu0 0
      %890 = vmatprep.subr.bf16.mxu0 0
      %891 = vmatpush1.bf16.msra.mxu0 0
      %892 = vmatprep.subr.bf16.mxu0 0
      %893 = vmatpush1.bf16.msra.mxu0 0
      %894 = vmatprep.subr.bf16.mxu0 0
      %895 = vmatpush1.bf16.msra.mxu0 0
      %896 = vmatprep.subr.bf16.mxu0 0
      %897 = vmatpush1.bf16.msra.mxu0 0
      %898 = vmatprep.subr.bf16.mxu0 0
      %899 = vmatpush1.bf16.msra.mxu0 0
      %900 = vmatprep.subr.bf16.mxu0 0
      %901 = vmatpush1.bf16.msra.mxu0 0
      %902 = vmatprep.subr.bf16.mxu0 0
      %903 = vmatpush1.bf16.msra.mxu0 0
      %904 = vmatprep.mubr.bf16.mxu0 0
      %905 = vmatmul.mubr.bf16.gmra.mrb[0].mxu0 %v606
      %v906 = vpop.f32.mrb[0].mxu0
      %v907 = vadd.f32 %v314, %v906
      %v908 = vpop.f32.mrb[0].mxu0
      %v909 = vadd.f32 %v314, %v908
      %v910 = vpop.f32.mrb[0].mxu0
      %v911 = vpop.f32.mrb[0].mxu0
      %912 = vdwg.mxu0
      %913 = vmatprep.subr.bf16.mxu0 %v519
      %914 = vmatpush1.bf16.msra.mxu0 %v518
      %915 = vmatprep.subr.bf16.mxu0 %v646
      %916 = vmatpush1.bf16.msra.mxu0 %v643
      %917 = vmatprep.subr.bf16.mxu0 0
      %918 = vmatpush1.bf16.msra.mxu0 0
      %919 = vmatprep.subr.bf16.mxu0 0
      %920 = vmatpush1.bf16.msra.mxu0 0
      %921 = vmatprep.subr.bf16.mxu0 0
      %922 = vmatpush1.bf16.msra.mxu0 0
      %923 = vmatprep.subr.bf16.mxu0 0
      %924 = vmatpush1.bf16.msra.mxu0 0
      %925 = vmatprep.subr.bf16.mxu0 0
      %926 = vmatpush1.bf16.msra.mxu0 0
      %927 = vmatprep.subr.bf16.mxu0 0
      %928 = vmatpush1.bf16.msra.mxu0 0
      %929 = vmatprep.subr.bf16.mxu0 0
      %930 = vmatpush1.bf16.msra.mxu0 0
      %931 = vmatprep.subr.bf16.mxu0 0
      %932 = vmatpush1.bf16.msra.mxu0 0
      %933 = vmatprep.subr.bf16.mxu0 0
      %934 = vmatpush1.bf16.msra.mxu0 0
      %935 = vmatprep.subr.bf16.mxu0 0
      %936 = vmatpush1.bf16.msra.mxu0 0
      %937 = vmatprep.subr.bf16.mxu0 0
      %938 = vmatpush1.bf16.msra.mxu0 0
      %939 = vmatprep.subr.bf16.mxu0 0
      %940 = vmatpush1.bf16.msra.mxu0 0
      %941 = vmatprep.subr.bf16.mxu0 0
      %942 = vmatpush1.bf16.msra.mxu0 0
      %943 = vmatprep.subr.bf16.mxu0 0
      %944 = vmatpush1.bf16.msra.mxu0 0
      %945 = vmatprep.mubr.bf16.mxu0 0
      %946 = vmatmul.mubr.bf16.gmra.mrb[0].mxu0 %v606
      %v947 = vpop.f32.mrb[0].mxu0
      %v948 = vadd.f32 %v314, %v947
      %v949 = vpop.f32.mrb[0].mxu0
      %v950 = vadd.f32 %v314, %v949
      %v951 = vpop.f32.mrb[0].mxu0
      %v952 = vpop.f32.mrb[0].mxu0
      %953 = vdwg.mxu0
      %954 = vmatprep.subr.bf16.mxu0 %v521
      %955 = vmatpush1.bf16.msra.mxu0 %v520
      %956 = vmatprep.subr.bf16.mxu0 %v652
      %957 = vmatpush1.bf16.msra.mxu0 %v649
      %958 = vmatprep.subr.bf16.mxu0 0
      %959 = vmatpush1.bf16.msra.mxu0 0
      %960 = vmatprep.subr.bf16.mxu0 0
      %961 = vmatpush1.bf16.msra.mxu0 0
      %962 = vmatprep.subr.bf16.mxu0 0
      %963 = vmatpush1.bf16.msra.mxu0 0
      %964 = vmatprep.subr.bf16.mxu0 0
      %965 = vmatpush1.bf16.msra.mxu0 0
      %966 = vmatprep.subr.bf16.mxu0 0
      %967 = vmatpush1.bf16.msra.mxu0 0
      %968 = vmatprep.subr.bf16.mxu0 0
      %969 = vmatpush1.bf16.msra.mxu0 0
      %970 = vmatprep.subr.bf16.mxu0 0
      %971 = vmatpush1.bf16.msra.mxu0 0
      %972 = vmatprep.subr.bf16.mxu0 0
      %973 = vmatpush1.bf16.msra.mxu0 0
      %974 = vmatprep.subr.bf16.mxu0 0
      %975 = vmatpush1.bf16.msra.mxu0 0
      %976 = vmatprep.subr.bf16.mxu0 0
      %977 = vmatpush1.bf16.msra.mxu0 0
      %978 = vmatprep.subr.bf16.mxu0 0
      %979 = vmatpush1.bf16.msra.mxu0 0
      %980 = vmatprep.subr.bf16.mxu0 0
      %981 = vmatpush1.bf16.msra.mxu0 0
      %982 = vmatprep.subr.bf16.mxu0 0
      %983 = vmatpush1.bf16.msra.mxu0 0
      %984 = vmatprep.subr.bf16.mxu0 0
      %985 = vmatpush1.bf16.msra.mxu0 0
      %986 = vmatprep.mubr.bf16.mxu0 0
      %987 = vmatmul.mubr.bf16.gmra.mrb[0].mxu0 %v606
      %v988 = vpop.f32.mrb[0].mxu0
      %v989 = vadd.f32 %v314, %v988
      %v990 = vpop.f32.mrb[0].mxu0
      %v991 = vadd.f32 %v314, %v990
      %v992 = vpop.f32.mrb[0].mxu0
      %v993 = vpop.f32.mrb[0].mxu0
      %994 = vdwg.mxu0
      %995 = vmatprep.subr.bf16.mxu0 %v523
      %996 = vmatpush1.bf16.msra.mxu0 %v522
      %997 = vmatprep.subr.bf16.mxu0 %v658
      %998 = vmatpush1.bf16.msra.mxu0 %v655
      %999 = vmatprep.subr.bf16.mxu0 0
      %1000 = vmatpush1.bf16.msra.mxu0 0
      %1001 = vmatprep.subr.bf16.mxu0 0
      %1002 = vmatpush1.bf16.msra.mxu0 0
      %1003 = vmatprep.subr.bf16.mxu0 0
      %1004 = vmatpush1.bf16.msra.mxu0 0
      %1005 = vmatprep.subr.bf16.mxu0 0
      %1006 = vmatpush1.bf16.msra.mxu0 0
      %1007 = vmatprep.subr.bf16.mxu0 0
      %1008 = vmatpush1.bf16.msra.mxu0 0
      %1009 = vmatprep.subr.bf16.mxu0 0
      %1010 = vmatpush1.bf16.msra.mxu0 0
      %1011 = vmatprep.subr.bf16.mxu0 0
      %1012 = vmatpush1.bf16.msra.mxu0 0
      %1013 = vmatprep.subr.bf16.mxu0 0
      %1014 = vmatpush1.bf16.msra.mxu0 0
      %1015 = vmatprep.subr.bf16.mxu0 0
      %1016 = vmatpush1.bf16.msra.mxu0 0
      %1017 = vmatprep.subr.bf16.mxu0 0
      %1018 = vmatpush1.bf16.msra.mxu0 0
      %1019 = vmatprep.subr.bf16.mxu0 0
      %1020 = vmatpush1.bf16.msra.mxu0 0
      %1021 = vmatprep.subr.bf16.mxu0 0
      %1022 = vmatpush1.bf16.msra.mxu0 0
      %1023 = vmatprep.subr.bf16.mxu0 0
      %1024 = vmatpush1.bf16.msra.mxu0 0
      %1025 = vmatprep.subr.bf16.mxu0 0
      %1026 = vmatpush1.bf16.msra.mxu0 0
      %1027 = vmatprep.mubr.bf16.mxu0 0
      %1028 = vmatmul.mubr.bf16.gmra.mrb[0].mxu0 %v606
      %v1029 = vpop.f32.mrb[0].mxu0
      %v1030 = vadd.f32 %v314, %v1029
      %v1031 = vpop.f32.mrb[0].mxu0
      %v1032 = vadd.f32 %v314, %v1031
      %v1033 = vpop.f32.mrb[0].mxu0
      %v1034 = vpop.f32.mrb[0].mxu0
      %1035 = vdwg.mxu0
      %1036 = vmatprep.subr.bf16.mxu0 %v525
      %1037 = vmatpush1.bf16.msra.mxu0 %v524
      %1038 = vmatprep.subr.bf16.mxu0 %v664
      %1039 = vmatpush1.bf16.msra.mxu0 %v661
      %1040 = vmatprep.subr.bf16.mxu0 0
      %1041 = vmatpush1.bf16.msra.mxu0 0
      %1042 = vmatprep.subr.bf16.mxu0 0
      %1043 = vmatpush1.bf16.msra.mxu0 0
      %1044 = vmatprep.subr.bf16.mxu0 0
      %1045 = vmatpush1.bf16.msra.mxu0 0
      %1046 = vmatprep.subr.bf16.mxu0 0
      %1047 = vmatpush1.bf16.msra.mxu0 0
      %1048 = vmatprep.subr.bf16.mxu0 0
      %1049 = vmatpush1.bf16.msra.mxu0 0
      %1050 = vmatprep.subr.bf16.mxu0 0
      %1051 = vmatpush1.bf16.msra.mxu0 0
      %1052 = vmatprep.subr.bf16.mxu0 0
      %1053 = vmatpush1.bf16.msra.mxu0 0
      %1054 = vmatprep.subr.bf16.mxu0 0
      %1055 = vmatpush1.bf16.msra.mxu0 0
      %1056 = vmatprep.subr.bf16.mxu0 0
      %1057 = vmatpush1.bf16.msra.mxu0 0
      %1058 = vmatprep.subr.bf16.mxu0 0
      %1059 = vmatpush1.bf16.msra.mxu0 0
      %1060 = vmatprep.subr.bf16.mxu0 0
      %1061 = vmatpush1.bf16.msra.mxu0 0
      %1062 = vmatprep.subr.bf16.mxu0 0
      %1063 = vmatpush1.bf16.msra.mxu0 0
      %1064 = vmatprep.subr.bf16.mxu0 0
      %1065 = vmatpush1.bf16.msra.mxu0 0
      %1066 = vmatprep.subr.bf16.mxu0 0
      %1067 = vmatpush1.bf16.msra.mxu0 0
      %1068 = vmatprep.mubr.bf16.mxu0 0
      %1069 = vmatmul.mubr.bf16.gmra.mrb[0].mxu0 %v606
      %v1070 = vpop.f32.mrb[0].mxu0
      %v1071 = vadd.f32 %v314, %v1070
      %v1072 = vpop.f32.mrb[0].mxu0
      %v1073 = vadd.f32 %v314, %v1072
      %v1074 = vpop.f32.mrb[0].mxu0
      %v1075 = vpop.f32.mrb[0].mxu0
      %1076 = vdwg.mxu0
      %1077 = vmatprep.subr.bf16.mxu0 %v527
      %1078 = vmatpush1.bf16.msra.mxu0 %v526
      %1079 = vmatprep.subr.bf16.mxu0 %v670
      %1080 = vmatpush1.bf16.msra.mxu0 %v667
      %1081 = vmatprep.subr.bf16.mxu0 0
      %1082 = vmatpush1.bf16.msra.mxu0 0
      %1083 = vmatprep.subr.bf16.mxu0 0
      %1084 = vmatpush1.bf16.msra.mxu0 0
      %1085 = vmatprep.subr.bf16.mxu0 0
      %1086 = vmatpush1.bf16.msra.mxu0 0
      %1087 = vmatprep.subr.bf16.mxu0 0
      %1088 = vmatpush1.bf16.msra.mxu0 0
      %1089 = vmatprep.subr.bf16.mxu0 0
      %1090 = vmatpush1.bf16.msra.mxu0 0
      %1091 = vmatprep.subr.bf16.mxu0 0
      %1092 = vmatpush1.bf16.msra.mxu0 0
      %1093 = vmatprep.subr.bf16.mxu0 0
      %1094 = vmatpush1.bf16.msra.mxu0 0
      %1095 = vmatprep.subr.bf16.mxu0 0
      %1096 = vmatpush1.bf16.msra.mxu0 0
      %1097 = vmatprep.subr.bf16.mxu0 0
      %1098 = vmatpush1.bf16.msra.mxu0 0
      %1099 = vmatprep.subr.bf16.mxu0 0
      %1100 = vmatpush1.bf16.msra.mxu0 0
      %1101 = vmatprep.subr.bf16.mxu0 0
      %1102 = vmatpush1.bf16.msra.mxu0 0
      %1103 = vmatprep.subr.bf16.mxu0 0
      %1104 = vmatpush1.bf16.msra.mxu0 0
      %1105 = vmatprep.subr.bf16.mxu0 0
      %1106 = vmatpush1.bf16.msra.mxu0 0
      %1107 = vmatprep.subr.bf16.mxu0 0
      %1108 = vmatpush1.bf16.msra.mxu0 0
      %1109 = vmatprep.mubr.bf16.mxu0 0
      %1110 = vmatmul.mubr.bf16.gmra.mrb[0].mxu0 %v606
      %v1111 = vpop.f32.mrb[0].mxu0
      %v1112 = vadd.f32 %v314, %v1111
      %v1113 = vpop.f32.mrb[0].mxu0
      %v1114 = vadd.f32 %v314, %v1113
      %v1115 = vpop.f32.mrb[0].mxu0
      %v1116 = vpop.f32.mrb[0].mxu0
      %1117 = vdwg.mxu0
      %1118 = vmatprep.subr.bf16.mxu0 %v529
      %1119 = vmatpush1.bf16.msra.mxu0 %v528
      %1120 = vmatprep.subr.bf16.mxu0 %v676
      %1121 = vmatpush1.bf16.msra.mxu0 %v673
      %1122 = vmatprep.subr.bf16.mxu0 0
      %1123 = vmatpush1.bf16.msra.mxu0 0
      %1124 = vmatprep.subr.bf16.mxu0 0
      %1125 = vmatpush1.bf16.msra.mxu0 0
      %1126 = vmatprep.subr.bf16.mxu0 0
      %1127 = vmatpush1.bf16.msra.mxu0 0
      %1128 = vmatprep.subr.bf16.mxu0 0
      %1129 = vmatpush1.bf16.msra.mxu0 0
      %1130 = vmatprep.subr.bf16.mxu0 0
      %1131 = vmatpush1.bf16.msra.mxu0 0
      %1132 = vmatprep.subr.bf16.mxu0 0
      %1133 = vmatpush1.bf16.msra.mxu0 0
      %1134 = vmatprep.subr.bf16.mxu0 0
      %1135 = vmatpush1.bf16.msra.mxu0 0
      %1136 = vmatprep.subr.bf16.mxu0 0
      %1137 = vmatpush1.bf16.msra.mxu0 0
      %1138 = vmatprep.subr.bf16.mxu0 0
      %1139 = vmatpush1.bf16.msra.mxu0 0
      %1140 = vmatprep.subr.bf16.mxu0 0
      %1141 = vmatpush1.bf16.msra.mxu0 0
      %1142 = vmatprep.subr.bf16.mxu0 0
      %1143 = vmatpush1.bf16.msra.mxu0 0
      %1144 = vmatprep.subr.bf16.mxu0 0
      %1145 = vmatpush1.bf16.msra.mxu0 0
      %1146 = vmatprep.subr.bf16.mxu0 0
      %1147 = vmatpush1.bf16.msra.mxu0 0
      %1148 = vmatprep.subr.bf16.mxu0 0
      %1149 = vmatpush1.bf16.msra.mxu0 0
      %1150 = vmatprep.mubr.bf16.mxu0 0
      %1151 = vmatmul.mubr.bf16.gmra.mrb[0].mxu0 %v606
      %v1152 = vpop.f32.mrb[0].mxu0
      %v1153 = vadd.f32 %v314, %v1152
      %v1154 = vpop.f32.mrb[0].mxu0
      %v1155 = vadd.f32 %v314, %v1154
      %v1156 = vpop.f32.mrb[0].mxu0
      %v1157 = vpop.f32.mrb[0].mxu0
      %1158 = vdwg.mxu0
      %1159 = vmatprep.subr.bf16.mxu0 %v531
      %1160 = vmatpush1.bf16.msra.mxu0 %v530
      %1161 = vmatprep.subr.bf16.mxu0 %v682
      %1162 = vmatpush1.bf16.msra.mxu0 %v679
      %1163 = vmatprep.subr.bf16.mxu0 0
      %1164 = vmatpush1.bf16.msra.mxu0 0
      %1165 = vmatprep.subr.bf16.mxu0 0
      %1166 = vmatpush1.bf16.msra.mxu0 0
      %1167 = vmatprep.subr.bf16.mxu0 0
      %1168 = vmatpush1.bf16.msra.mxu0 0
      %1169 = vmatprep.subr.bf16.mxu0 0
      %1170 = vmatpush1.bf16.msra.mxu0 0
      %1171 = vmatprep.subr.bf16.mxu0 0
      %1172 = vmatpush1.bf16.msra.mxu0 0
      %1173 = vmatprep.subr.bf16.mxu0 0
      %1174 = vmatpush1.bf16.msra.mxu0 0
      %1175 = vmatprep.subr.bf16.mxu0 0
      %1176 = vmatpush1.bf16.msra.mxu0 0
      %1177 = vmatprep.subr.bf16.mxu0 0
      %1178 = vmatpush1.bf16.msra.mxu0 0
      %1179 = vmatprep.subr.bf16.mxu0 0
      %1180 = vmatpush1.bf16.msra.mxu0 0
      %1181 = vmatprep.subr.bf16.mxu0 0
      %1182 = vmatpush1.bf16.msra.mxu0 0
      %1183 = vmatprep.subr.bf16.mxu0 0
      %1184 = vmatpush1.bf16.msra.mxu0 0
      %1185 = vmatprep.subr.bf16.mxu0 0
      %1186 = vmatpush1.bf16.msra.mxu0 0
      %1187 = vmatprep.subr.bf16.mxu0 0
      %1188 = vmatpush1.bf16.msra.mxu0 0
      %1189 = vmatprep.subr.bf16.mxu0 0
      %1190 = vmatpush1.bf16.msra.mxu0 0
      %1191 = vmatprep.mubr.bf16.mxu0 0
      %1192 = vmatmul.mubr.bf16.gmra.mrb[0].mxu0 %v606
      %v1193 = vpop.f32.mrb[0].mxu0
      %v1194 = vadd.f32 %v314, %v1193
      %v1195 = vpop.f32.mrb[0].mxu0
      %v1196 = vadd.f32 %v314, %v1195
      %v1197 = vpop.f32.mrb[0].mxu0
      %v1198 = vpop.f32.mrb[0].mxu0
      %1199 = vdwg.mxu0
      %1200 = vmatprep.subr.bf16.mxu0 %v533
      %1201 = vmatpush1.bf16.msra.mxu0 %v532
      %1202 = vmatprep.subr.bf16.mxu0 %v688
      %1203 = vmatpush1.bf16.msra.mxu0 %v685
      %1204 = vmatprep.subr.bf16.mxu0 0
      %1205 = vmatpush1.bf16.msra.mxu0 0
      %1206 = vmatprep.subr.bf16.mxu0 0
      %1207 = vmatpush1.bf16.msra.mxu0 0
      %1208 = vmatprep.subr.bf16.mxu0 0
      %1209 = vmatpush1.bf16.msra.mxu0 0
      %1210 = vmatprep.subr.bf16.mxu0 0
      %1211 = vmatpush1.bf16.msra.mxu0 0
      %1212 = vmatprep.subr.bf16.mxu0 0
      %1213 = vmatpush1.bf16.msra.mxu0 0
      %1214 = vmatprep.subr.bf16.mxu0 0
      %1215 = vmatpush1.bf16.msra.mxu0 0
      %1216 = vmatprep.subr.bf16.mxu0 0
      %1217 = vmatpush1.bf16.msra.mxu0 0
      %1218 = vmatprep.subr.bf16.mxu0 0
      %1219 = vmatpush1.bf16.msra.mxu0 0
      %1220 = vmatprep.subr.bf16.mxu0 0
      %1221 = vmatpush1.bf16.msra.mxu0 0
      %1222 = vmatprep.subr.bf16.mxu0 0
      %1223 = vmatpush1.bf16.msra.mxu0 0
      %1224 = vmatprep.subr.bf16.mxu0 0
      %1225 = vmatpush1.bf16.msra.mxu0 0
      %1226 = vmatprep.subr.bf16.mxu0 0
      %1227 = vmatpush1.bf16.msra.mxu0 0
      %1228 = vmatprep.subr.bf16.mxu0 0
      %1229 = vmatpush1.bf16.msra.mxu0 0
      %1230 = vmatprep.subr.bf16.mxu0 0
      %1231 = vmatpush1.bf16.msra.mxu0 0
      %1232 = vmatprep.mubr.bf16.mxu0 0
      %1233 = vmatmul.mubr.bf16.gmra.mrb[0].mxu0 %v606
      %v1234 = vpop.f32.mrb[0].mxu0
      %v1235 = vadd.f32 %v314, %v1234
      %v1236 = vpop.f32.mrb[0].mxu0
      %v1237 = vadd.f32 %v314, %v1236
      %v1238 = vpop.f32.mrb[0].mxu0
      %v1239 = vpop.f32.mrb[0].mxu0
      %1240 = vdwg.mxu0
      %1241 = vmatprep.subr.bf16.mxu0 %v535
      %1242 = vmatpush1.bf16.msra.mxu0 %v534
      %1243 = vmatprep.subr.bf16.mxu0 %v694
      %1244 = vmatpush1.bf16.msra.mxu0 %v691
      %1245 = vmatprep.subr.bf16.mxu0 0
      %1246 = vmatpush1.bf16.msra.mxu0 0
      %1247 = vmatprep.subr.bf16.mxu0 0
      %1248 = vmatpush1.bf16.msra.mxu0 0
      %1249 = vmatprep.subr.bf16.mxu0 0
      %1250 = vmatpush1.bf16.msra.mxu0 0
      %1251 = vmatprep.subr.bf16.mxu0 0
      %1252 = vmatpush1.bf16.msra.mxu0 0
      %1253 = vmatprep.subr.bf16.mxu0 0
      %1254 = vmatpush1.bf16.msra.mxu0 0
      %1255 = vmatprep.subr.bf16.mxu0 0
      %1256 = vmatpush1.bf16.msra.mxu0 0
      %1257 = vmatprep.subr.bf16.mxu0 0
      %1258 = vmatpush1.bf16.msra.mxu0 0
      %1259 = vmatprep.subr.bf16.mxu0 0
      %1260 = vmatpush1.bf16.msra.mxu0 0
      %1261 = vmatprep.subr.bf16.mxu0 0
      %1262 = vmatpush1.bf16.msra.mxu0 0
      %1263 = vmatprep.subr.bf16.mxu0 0
      %1264 = vmatpush1.bf16.msra.mxu0 0
      %1265 = vmatprep.subr.bf16.mxu0 0
      %1266 = vmatpush1.bf16.msra.mxu0 0
      %1267 = vmatprep.subr.bf16.mxu0 0
      %1268 = vmatpush1.bf16.msra.mxu0 0
      %1269 = vmatprep.subr.bf16.mxu0 0
      %1270 = vmatpush1.bf16.msra.mxu0 0
      %1271 = vmatprep.subr.bf16.mxu0 0
      %1272 = vmatpush1.bf16.msra.mxu0 0
      %1273 = vmatprep.mubr.bf16.mxu0 0
      %1274 = vmatmul.mubr.bf16.gmra.mrb[0].mxu0 %v606
      %v1275 = vpop.f32.mrb[0].mxu0
      %v1276 = vadd.f32 %v314, %v1275
      %v1277 = vpop.f32.mrb[0].mxu0
      %v1278 = vadd.f32 %v314, %v1277
      %v1279 = vpop.f32.mrb[0].mxu0
      %v1280 = vpop.f32.mrb[0].mxu0
      %1281 = vdwg.mxu0
      %1282 = vmatprep.subr.bf16.mxu0 %v537
      %1283 = vmatpush1.bf16.msra.mxu0 %v536
      %1284 = vmatprep.subr.bf16.mxu0 %v700
      %1285 = vmatpush1.bf16.msra.mxu0 %v697
      %1286 = vmatprep.subr.bf16.mxu0 0
      %1287 = vmatpush1.bf16.msra.mxu0 0
      %1288 = vmatprep.subr.bf16.mxu0 0
      %1289 = vmatpush1.bf16.msra.mxu0 0
      %1290 = vmatprep.subr.bf16.mxu0 0
      %1291 = vmatpush1.bf16.msra.mxu0 0
      %1292 = vmatprep.subr.bf16.mxu0 0
      %1293 = vmatpush1.bf16.msra.mxu0 0
      %1294 = vmatprep.subr.bf16.mxu0 0
      %1295 = vmatpush1.bf16.msra.mxu0 0
      %1296 = vmatprep.subr.bf16.mxu0 0
      %1297 = vmatpush1.bf16.msra.mxu0 0
      %1298 = vmatprep.subr.bf16.mxu0 0
      %1299 = vmatpush1.bf16.msra.mxu0 0
      %1300 = vmatprep.subr.bf16.mxu0 0
      %1301 = vmatpush1.bf16.msra.mxu0 0
      %1302 = vmatprep.subr.bf16.mxu0 0
      %1303 = vmatpush1.bf16.msra.mxu0 0
      %1304 = vmatprep.subr.bf16.mxu0 0
      %1305 = vmatpush1.bf16.msra.mxu0 0
      %1306 = vmatprep.subr.bf16.mxu0 0
      %1307 = vmatpush1.bf16.msra.mxu0 0
      %1308 = vmatprep.subr.bf16.mxu0 0
      %1309 = vmatpush1.bf16.msra.mxu0 0
      %1310 = vmatprep.subr.bf16.mxu0 0
      %1311 = vmatpush1.bf16.msra.mxu0 0
      %1312 = vmatprep.subr.bf16.mxu0 0
      %1313 = vmatpush1.bf16.msra.mxu0 0
      %1314 = vmatprep.mubr.bf16.mxu0 0
      %1315 = vmatmul.mubr.bf16.gmra.mrb[0].mxu0 %v606
      %v1316 = vpop.f32.mrb[0].mxu0
      %v1317 = vadd.f32 %v314, %v1316
      %v1318 = vpop.f32.mrb[0].mxu0
      %v1319 = vadd.f32 %v314, %v1318
      %v1320 = vpop.f32.mrb[0].mxu0
      %v1321 = vpop.f32.mrb[0].mxu0
      %1322 = vdwg.mxu0
      %1323 = vmatprep.subr.bf16.mxu0 %v539
      %1324 = vmatpush1.bf16.msra.mxu0 %v538
      %1325 = vmatprep.subr.bf16.mxu0 %v706
      %1326 = vmatpush1.bf16.msra.mxu0 %v703
      %1327 = vmatprep.subr.bf16.mxu0 0
      %1328 = vmatpush1.bf16.msra.mxu0 0
      %1329 = vmatprep.subr.bf16.mxu0 0
      %1330 = vmatpush1.bf16.msra.mxu0 0
      %1331 = vmatprep.subr.bf16.mxu0 0
      %1332 = vmatpush1.bf16.msra.mxu0 0
      %1333 = vmatprep.subr.bf16.mxu0 0
      %1334 = vmatpush1.bf16.msra.mxu0 0
      %1335 = vmatprep.subr.bf16.mxu0 0
      %1336 = vmatpush1.bf16.msra.mxu0 0
      %1337 = vmatprep.subr.bf16.mxu0 0
      %1338 = vmatpush1.bf16.msra.mxu0 0
      %1339 = vmatprep.subr.bf16.mxu0 0
      %1340 = vmatpush1.bf16.msra.mxu0 0
      %1341 = vmatprep.subr.bf16.mxu0 0
      %1342 = vmatpush1.bf16.msra.mxu0 0
      %1343 = vmatprep.subr.bf16.mxu0 0
      %1344 = vmatpush1.bf16.msra.mxu0 0
      %1345 = vmatprep.subr.bf16.mxu0 0
      %1346 = vmatpush1.bf16.msra.mxu0 0
      %1347 = vmatprep.subr.bf16.mxu0 0
      %1348 = vmatpush1.bf16.msra.mxu0 0
      %1349 = vmatprep.subr.bf16.mxu0 0
      %1350 = vmatpush1.bf16.msra.mxu0 0
      %1351 = vmatprep.subr.bf16.mxu0 0
      %1352 = vmatpush1.bf16.msra.mxu0 0
      %1353 = vmatprep.subr.bf16.mxu0 0
      %1354 = vmatpush1.bf16.msra.mxu0 0
      %1355 = vmatprep.mubr.bf16.mxu0 0
      %1356 = vmatmul.mubr.bf16.gmra.mrb[0].mxu0 %v606
      %v1357 = vpop.f32.mrb[0].mxu0
      %v1358 = vadd.f32 %v314, %v1357
      %v1359 = vpop.f32.mrb[0].mxu0
      %v1360 = vadd.f32 %v314, %v1359
      %v1361 = vpop.f32.mrb[0].mxu0
      %v1362 = vpop.f32.mrb[0].mxu0
      %1363 = vdwg.mxu0
      %v1364 = vmax.f32 %v743, 0.0
      %v1365 = vmax.f32 %v745, 0.0
      %v1366 = vmax.f32 %v784, 0.0
      %v1367 = vmax.f32 %v786, 0.0
      %v1368 = vmax.f32 %v825, 0.0
      %v1369 = vmax.f32 %v827, 0.0
      %v1370 = vmax.f32 %v866, 0.0
      %v1371 = vmax.f32 %v868, 0.0
      %v1372 = vmax.f32 %v907, 0.0
      %v1373 = vmax.f32 %v909, 0.0
      %v1374 = vmax.f32 %v948, 0.0
      %v1375 = vmax.f32 %v950, 0.0
      %v1376 = vmax.f32 %v989, 0.0
      %v1377 = vmax.f32 %v991, 0.0
      %v1378 = vmax.f32 %v1030, 0.0
      %v1379 = vmax.f32 %v1032, 0.0
      %v1380 = vmax.f32 %v1071, 0.0
      %v1381 = vmax.f32 %v1073, 0.0
      %v1382 = vmax.f32 %v1112, 0.0
      %v1383 = vmax.f32 %v1114, 0.0
      %v1384 = vmax.f32 %v1153, 0.0
      %v1385 = vmax.f32 %v1155, 0.0
      %v1386 = vmax.f32 %v1194, 0.0
      %v1387 = vmax.f32 %v1196, 0.0
      %v1388 = vmax.f32 %v1235, 0.0
      %v1389 = vmax.f32 %v1237, 0.0
      %v1390 = vmax.f32 %v1276, 0.0
      %v1391 = vmax.f32 %v1278, 0.0
      %v1392 = vmax.f32 %v1317, 0.0
      %v1393 = vmax.f32 %v1319, 0.0
      %v1394 = vmax.f32 %v1358, 0.0
      %v1395 = vmax.f32 %v1360, 0.0
      %1396 = vst [vmem:[%s242] sm:$0xff] %v1364
      %1397 = vst [vmem:[%s242 + $0x8] sm:$0xff] %v1365
      %1398 = vst [vmem:[%s242 + $0x10] sm:$0xff] %v1366
      %1399 = vst [vmem:[%s242 + $0x18] sm:$0xff] %v1367
      %1400 = vst [vmem:[%s242 + $0x20] sm:$0xff] %v1368
      %1401 = vst [vmem:[%s242 + $0x28] sm:$0xff] %v1369
      %1402 = vst [vmem:[%s242 + $0x30] sm:$0xff] %v1370
      %1403 = vst [vmem:[%s242 + $0x38] sm:$0xff] %v1371
      %1404 = vst [vmem:[%s242 + $0x40] sm:$0xff] %v1372
      %1405 = vst [vmem:[%s242 + $0x48] sm:$0xff] %v1373
      %1406 = vst [vmem:[%s242 + $0x50] sm:$0xff] %v1374
      %1407 = vst [vmem:[%s242 + $0x58] sm:$0xff] %v1375
      %1408 = vst [vmem:[%s242 + $0x60] sm:$0xff] %v1376
      %1409 = vst [vmem:[%s242 + $0x68] sm:$0xff] %v1377
      %1410 = vst [vmem:[%s242 + $0x70] sm:$0xff] %v1378
      %1411 = vst [vmem:[%s242 + $0x78] sm:$0xff] %v1379
      %1412 = vst [vmem:[%s242 + $0x80] sm:$0xff] %v1380
      %1413 = vst [vmem:[%s242 + $0x88] sm:$0xff] %v1381
      %1414 = vst [vmem:[%s242 + $0x90] sm:$0xff] %v1382
      %1415 = vst [vmem:[%s242 + $0x98] sm:$0xff] %v1383
      %1416 = vst [vmem:[%s242 + $0xa0] sm:$0xff] %v1384
      %1417 = vst [vmem:[%s242 + $0xa8] sm:$0xff] %v1385
      %1418 = vst [vmem:[%s242 + $0xb0] sm:$0xff] %v1386
      %1419 = vst [vmem:[%s242 + $0xb8] sm:$0xff] %v1387
      %1420 = vst [vmem:[%s242 + $0xc0] sm:$0xff] %v1388
      %1421 = vst [vmem:[%s242 + $0xc8] sm:$0xff] %v1389
      %1422 = vst [vmem:[%s242 + $0xd0] sm:$0xff] %v1390
      %1423 = vst [vmem:[%s242 + $0xd8] sm:$0xff] %v1391
      %1424 = vst [vmem:[%s242 + $0xe0] sm:$0xff] %v1392
      %1425 = vst [vmem:[%s242 + $0xe8] sm:$0xff] %v1393
      %1426 = vst [vmem:[%s242 + $0xf0] sm:$0xff] %v1394
      %1427 = vst [vmem:[%s242 + $0xf8] sm:$0xff] %v1395
      %s1428 = smul.u32 32, %s19
      %p1429 = scmp.lt.s32.totalorder %s18, 1
      %s1430 = scalar_select %p1429, %s18, 1
      %p1431 = scmp.lt.s32.totalorder %s1428, 31
      %s1432 = scalar_select %p1431, %s1428, 31
      %s1433 = smul.addr %s1430, 32
      %s1434 = sadd.s32 %s1432, %s1433
      %s1435 = smul.addr %s1434, 8
      %s1436 = scalar_lea.vmem %s3, %s1435
      // Predicated region
      $region33: #{image_regressor.4} parent=31 // pred_check
        %p1437 = pneg %p126
      $region34: #{image_regressor.4} parent=31 // pred_check_branch
        %1439 = sbr.rel (%p1437) target = $region36
      $region35: #{image_regressor.4} parent=31 // pred_region
        %s1440 = smul.u32 32, %s19
      $region36: #{image_regressor.4} parent=31 // pred_fallthru
        _
    $region32: #{image_regressor.4} parent=5 // pred_fallthru
      _
    %p1441 = scmp.le.s32.totalorder 2, %s9
    // Predicated region
    $region37: #{image_regressor.4} parent=5 // pred_check
      %p1442 = pneg %p1441
    $region38: #{image_regressor.4} parent=5 // pred_check_branch
      %1444 = sbr.rel (%p1442) target = $region40
    $region39: #{image_regressor.4} parent=5 // pred_region
      %s1445 = ssub.s32 %s9, 2
      // Predicated region
      $region41: #{image_regressor.4} parent=39 // pred_check
        %p1446 = pneg %p132
      $region42: #{image_regressor.4} parent=39 // pred_check_branch
        %1448 = sbr.rel (%p1446) target = $region44
      $region43: #{image_regressor.4} parent=39 // pred_region
        %s1449 = smul.u32 32, %s21
        %p1450 = scmp.lt.s32.totalorder %s20, 1
        %s1451 = scalar_select %p1450, %s20, 1
        %p1452 = scmp.lt.s32.totalorder %s1449, 31
        %s1453 = scalar_select %p1452, %s1449, 31
        %s1454 = smul.addr %s1451, 32
        %s1455 = sadd.s32 %s1453, %s1454
        %s1456 = smul.addr %s1455, 8
        %s1457 = scalar_lea.vmem %s3, %s1456
      $region44: #{image_regressor.4} parent=39 // pred_fallthru
        _
    $region40: #{image_regressor.4} parent=5 // pred_fallthru
      _
  $region6: #{image_regressor.4} parent=0 // loop_footer
    %s13 = sadd.s32 1, %s9
  $region7: #{image_regressor.4} parent=0 // loop_footer_branch
    %8 = sbr.rel target = $region3
  $region8: #{image_regressor.4} parent=0 // loop_exit
    _

// kernel: image_regressor.5
$region0: #{image_regressor.5}
  #allocation0 [shape = 'u32[]', space=smem, size = 0x4, offset = 0x4, fixed_abs, tag = 'smem constant byte address 0x4 - core index']
  #allocation1 [shape = 'u32[144,128]{1,0:T(1,128)}', space=vmem, size = 0x12000, scoped, tag = 'internal scratch']
  %s0 = inlined_call_operand.vmem [shape: bf16[2,216,512], index: 0, kind: input, shape index: {}]
  %s1 = inlined_call_operand.vmem [shape: bf16[2,16,216], index: 1, kind: input, shape index: {}]
  %s2 = inlined_call_operand.vmem [shape: f32[2,16,1], index: 2, kind: input, shape index: {}]
  %s3 = inlined_call_operand.vmem [shape: f32[2,16,512], index: 3, kind: output, shape index: {}]
  %s4 = sld [smem:[#allocation0]]
  $region45: #{image_regressor.5} parent=0
    _
  %s6 = ssub.s32 1, %s4
  %s7 = scalar_select 0, %s6, %s4
  loop: start=0, step=1, limit=4
  $region2: #{image_regressor.5} parent=0 // loop_pre_header
    _
  $region3: #{image_regressor.5} parent=0 // loop_header
    %s9 = sphi 0, %s13
    %p10 = scmp.ge.s32.totalorder %s9, 4
    %s16 = sphi 0, %s28
    %s17 = sphi 0, %s24
    %s18 = sphi 0, %s16
    %s19 = sphi 0, %s17
    %s20 = sphi 0, %s18
    %s21 = sphi 0, %s19
    %s33 = sphi 0, %s35
    %s36 = sphi 0, %s33
    %s37 = sphi 0, %s36
    %s53 = sphi 0, %s37
    %s59 = sphi 0, %s61
    %s62 = sphi 0, %s59
    %s63 = sphi 0, %s62
    %s79 = sphi 0, %s63
    %s85 = sphi 0, %s87
    %s88 = sphi 0, %s85
    %s89 = sphi 0, %s88
    %s105 = sphi 0, %s89
    %s113 = sphi 0, %s115
    %s116 = sphi 0, %s113
    %s117 = sphi 0, %s116
    %s133 = sphi 0, %s117
  $region4: #{image_regressor.5} parent=0 // loop_header_branch
    %12 = sbr.rel (%p10) target = $region8
  $region5: #{image_regressor.5} parent=0 // loop_body
    %s14 = ssub.s32 %s9, 1
    %s15 = ssub.s32 %s9, 2
    %s22 = sadd.s32 1, %s17
    %p23 = scmp.ge.s32.totalorder %s22, 1
    %s24 = scalar_select %p23, 0, %s22
    %s25 = sadd.s32 1, %s16
    %s26 = scalar_select %p23, %s25, %s16
    %p27 = scmp.ge.s32.totalorder %s26, 2
    %s28 = scalar_select %p27, 0, %s26
    %s29 = ssub.s32 %s16, %s28
    %s30 = ssub.s32 %s17, %s24
    %s31 = sor.u32 %s29, %s30
    %p32 = scmp.eq.s32.totalorder %s31, 0
    %s34 = sadd.s32 %s33, 1
    %s35 = scalar_select %p32, %s33, %s34
    %p38 = pneg %p32
    %p39 = scmp.eq.s32.totalorder %s9, 1
    %p40 = por %p38, %p39
    %p41 = scmp.ne.s32.totalorder %s33, %s36
    %p42 = scmp.eq.s32.totalorder %s9, 0
    %p43 = por %p41, %p42
    %p44 = scmp.ne.s32.totalorder %s33, %s36
    %p45 = scmp.eq.s32.totalorder %s14, 1
    %p46 = por %p44, %p45
    %p47 = scmp.ne.s32.totalorder %s36, %s37
    %p48 = scmp.eq.s32.totalorder %s14, 0
    %p49 = por %p47, %p48
    %p50 = scmp.ne.s32.totalorder %s36, %s37
    %p51 = scmp.eq.s32.totalorder %s15, 1
    %p52 = por %p50, %p51
    %p54 = scmp.ne.s32.totalorder %s37, %s53
    %p55 = scmp.eq.s32.totalorder %s15, 0
    %p56 = por %p54, %p55
    %s57 = ssub.s32 %s16, %s28
    %p58 = scmp.eq.s32.totalorder %s57, 0
    %s60 = sadd.s32 %s59, 1
    %s61 = scalar_select %p58, %s59, %s60
    %p64 = pneg %p58
    %p65 = scmp.eq.s32.totalorder %s9, 1
    %p66 = por %p64, %p65
    %p67 = scmp.ne.s32.totalorder %s59, %s62
    %p68 = scmp.eq.s32.totalorder %s9, 0
    %p69 = por %p67, %p68
    %p70 = scmp.ne.s32.totalorder %s59, %s62
    %p71 = scmp.eq.s32.totalorder %s14, 1
    %p72 = por %p70, %p71
    %p73 = scmp.ne.s32.totalorder %s62, %s63
    %p74 = scmp.eq.s32.totalorder %s14, 0
    %p75 = por %p73, %p74
    %p76 = scmp.ne.s32.totalorder %s62, %s63
    %p77 = scmp.eq.s32.totalorder %s15, 1
    %p78 = por %p76, %p77
    %p80 = scmp.ne.s32.totalorder %s63, %s79
    %p81 = scmp.eq.s32.totalorder %s15, 0
    %p82 = por %p80, %p81
    %s83 = ssub.s32 %s16, %s28
    %p84 = scmp.eq.s32.totalorder %s83, 0
    %s86 = sadd.s32 %s85, 1
    %s87 = scalar_select %p84, %s85, %s86
    %p90 = pneg %p84
    %p91 = scmp.eq.s32.totalorder %s9, 1
    %p92 = por %p90, %p91
    %p93 = scmp.ne.s32.totalorder %s85, %s88
    %p94 = scmp.eq.s32.totalorder %s9, 0
    %p95 = por %p93, %p94
    %p96 = scmp.ne.s32.totalorder %s85, %s88
    %p97 = scmp.eq.s32.totalorder %s14, 1
    %p98 = por %p96, %p97
    %p99 = scmp.ne.s32.totalorder %s88, %s89
    %p100 = scmp.eq.s32.totalorder %s14, 0
    %p101 = por %p99, %p100
    %p102 = scmp.ne.s32.totalorder %s88, %s89
    %p103 = scmp.eq.s32.totalorder %s15, 1
    %p104 = por %p102, %p103
    %p106 = scmp.ne.s32.totalorder %s89, %s105
    %p107 = scmp.eq.s32.totalorder %s15, 0
    %p108 = por %p106, %p107
    %s109 = ssub.s32 %s16, %s28
    %s110 = ssub.s32 %s17, %s24
    %s111 = sor.u32 %s109, %s110
    %p112 = scmp.eq.s32.totalorder %s111, 0
    %s114 = sadd.s32 %s113, 1
    %s115 = scalar_select %p112, %s113, %s114
    %p118 = pneg %p112
    %p119 = scmp.eq.s32.totalorder %s9, 1
    %p120 = por %p118, %p119
    %p121 = scmp.ne.s32.totalorder %s113, %s116
    %p122 = scmp.eq.s32.totalorder %s9, 0
    %p123 = por %p121, %p122
    %p124 = scmp.ne.s32.totalorder %s113, %s116
    %p125 = scmp.eq.s32.totalorder %s14, 1
    %p126 = por %p124, %p125
    %p127 = scmp.ne.s32.totalorder %s116, %s117
    %p128 = scmp.eq.s32.totalorder %s14, 0
    %p129 = por %p127, %p128
    %p130 = scmp.ne.s32.totalorder %s116, %s117
    %p131 = scmp.eq.s32.totalorder %s15, 1
    %p132 = por %p130, %p131
    %p134 = scmp.ne.s32.totalorder %s117, %s133
    %p135 = scmp.eq.s32.totalorder %s15, 0
    %p136 = por %p134, %p135
    %p137 = scmp.le.s32.totalorder 1, %s9
    %p138 = scmp.lt.s32.totalorder %s9, 3
    %p139 = pnand %p137, %p138
    %p140 = pneg %p139
    // Predicated region
    $region9: #{image_regressor.5} parent=5 // pred_check
      _
    $region10: #{image_regressor.5} parent=5 // pred_check_branch
      %142 = sbr.rel (%p139) target = $region12
    $region11: #{image_regressor.5} parent=5 // pred_region
      %s143 = ssub.s32 %s9, 1
    $region12: #{image_regressor.5} parent=5 // pred_fallthru
      _
    %p144 = scmp.lt.s32.totalorder %s9, 2
    // Predicated region
    $region13: #{image_regressor.5} parent=5 // pred_check
      %p145 = pneg %p144
    $region14: #{image_regressor.5} parent=5 // pred_check_branch
      %147 = sbr.rel (%p145) target = $region16
    $region15: #{image_regressor.5} parent=5 // pred_region
      // Predicated region
      $region17: #{image_regressor.5} parent=15 // pred_check
        %p148 = pneg %p43
      $region18: #{image_regressor.5} parent=15 // pred_check_branch
        %150 = sbr.rel (%p148) target = $region20
      $region19: #{image_regressor.5} parent=15 // pred_region
        %s151 = smul.u32 4, %s17
        %p152 = scmp.lt.s32.totalorder %s16, 1
        %s153 = scalar_select %p152, %s16, 1
        %p154 = scmp.lt.s32.totalorder %s151, 3
        %s155 = scalar_select %p154, %s151, 3
        %s156 = smul.addr %s153, 108
        %s157 = sadd.s32 %s155, %s156
        %s158 = smul.addr %s157, 4
        %s159 = scalar_lea.vmem %s0, %s158
        %s160 = smul.u32 4, %s17
      $region20: #{image_regressor.5} parent=15 // pred_fallthru
        _
      // Predicated region
      $region21: #{image_regressor.5} parent=15 // pred_check
        %p161 = pneg %p69
      $region22: #{image_regressor.5} parent=15 // pred_check_branch
        %163 = sbr.rel (%p161) target = $region24
      $region23: #{image_regressor.5} parent=15 // pred_region
        %p164 = scmp.lt.s32.totalorder %s16, 1
        %s165 = scalar_select %p164, %s16, 1
        %s166 = smul.addr %s165, 4
        %s167 = smul.addr %s166, 4
        %s168 = scalar_lea.vmem %s1, %s167
      $region24: #{image_regressor.5} parent=15 // pred_fallthru
        _
      // Predicated region
      $region25: #{image_regressor.5} parent=15 // pred_check
        %p169 = pneg %p95
      $region26: #{image_regressor.5} parent=15 // pred_check_branch
        %171 = sbr.rel (%p169) target = $region28
      $region27: #{image_regressor.5} parent=15 // pred_region
        %p172 = scmp.lt.s32.totalorder %s16, 1
        %s173 = scalar_select %p172, %s16, 1
        %s174 = smul.addr %s173, 2
        %s175 = smul.addr %s174, 8
        %s176 = scalar_lea.vmem %s2, %s175
      $region28: #{image_regressor.5} parent=15 // pred_fallthru
        _
    $region16: #{image_regressor.5} parent=5 // pred_fallthru
      _
    %p177 = scmp.le.s32.totalorder 1, %s9
    %p178 = scmp.lt.s32.totalorder %s9, 3
    %p179 = pnand %p177, %p178
    %p180 = pneg %p179
    // Predicated region
    $region29: #{image_regressor.5} parent=5 // pred_check
      _
    $region30: #{image_regressor.5} parent=5 // pred_check_branch
      %182 = sbr.rel (%p179) target = $region32
    $region31: #{image_regressor.5} parent=5 // pred_region
      %s183 = ssub.s32 %s9, 1
      %s184 = smul.u32 4, %s19
      %p185 = scmp.lt.s32.totalorder %s18, 1
      %s186 = scalar_select %p185, %s18, 1
      %p187 = scmp.lt.s32.totalorder %s184, 3
      %s188 = scalar_select %p187, %s184, 3
      %s189 = smul.addr %s186, 108
      %s190 = sadd.s32 %s188, %s189
      %s191 = smul.addr %s190, 4
      %s192 = scalar_lea.vmem %s0, %s191
      %p193 = pneg %p49
      %p194 = pneg %p46
      %p195 = scmp.lt.s32.totalorder %s18, 1
      %s196 = scalar_select %p195, %s18, 1
      %s197 = smul.addr %s196, 4
      %s198 = smul.addr %s197, 4
      %s199 = scalar_lea.vmem %s1, %s198
      %p200 = pneg %p75
      %p201 = pneg %p72
      %p202 = scmp.lt.s32.totalorder %s18, 1
      %s203 = scalar_select %p202, %s18, 1
      %s204 = smul.addr %s203, 2
      %s205 = smul.addr %s204, 8
      %s206 = scalar_lea.vmem %s2, %s205
      %p207 = pneg %p101
      %p208 = pneg %p98
      %p209 = pneg %p129
      %p210 = pneg %p126
      %s211 = smul.u32 4, %s19
      %p212 = scmp.lt.s32.totalorder %s18, 1
      %s213 = scalar_select %p212, %s18, 1
      %p214 = scmp.lt.s32.totalorder %s211, 3
      %s215 = scalar_select %p214, %s211, 3
      %s216 = smul.addr %s213, 8
      %s217 = sadd.s32 %s215, %s216
      %s218 = smul.addr %s217, 8
      %s219 = scalar_lea.vmem %s3, %s218
      %s220 = smul.u32 4, %s19
      %p221 = scmp.lt.s32.totalorder %s18, 1
      %s222 = scalar_select %p221, %s18, 1
      %p223 = scmp.lt.s32.totalorder %s220, 3
      %s224 = scalar_select %p223, %s220, 3
      %s225 = smul.addr %s222, 108
      %s226 = sadd.s32 %s224, %s225
      %s227 = smul.addr %s226, 4
      %s228 = scalar_lea.vmem %s0, %s227
      %s229 = smul.u32 4, %s19
      %p230 = scmp.lt.s32.totalorder %s18, 1
      %s231 = scalar_select %p230, %s18, 1
      %s232 = smul.addr %s231, 4
      %s233 = smul.addr %s232, 4
      %s234 = scalar_lea.vmem %s1, %s233
      %p235 = scmp.lt.s32.totalorder %s18, 1
      %s236 = scalar_select %p235, %s18, 1
      %s237 = smul.addr %s236, 2
      %s238 = smul.addr %s237, 8
      %s239 = scalar_lea.vmem %s2, %s238
      %s240 = smul.u32 4, %s19
      %p241 = scmp.lt.s32.totalorder %s18, 1
      %s242 = scalar_select %p241, %s18, 1
      %p243 = scmp.lt.s32.totalorder %s240, 3
      %s244 = scalar_select %p243, %s240, 3
      %s245 = smul.addr %s242, 8
      %s246 = sadd.s32 %s244, %s245
      %s247 = smul.addr %s246, 8
      %s248 = scalar_lea.vmem %s3, %s247
      %s249 = smul.u32 4, %s19
      %v251 = vld [vmem:[%s234] sm:$0xff]
      %v252 = vld [vmem:[%s234 + $0x8] sm:$0xff]
      %v253 = vld [vmem:[%s228] sm:$0xff]
      %v254 = vld [vmem:[%s228 + $0x8] sm:$0xff]
      %v255 = vld [vmem:[%s228 + $0x10] sm:$0xff]
      %v256 = vld [vmem:[%s228 + $0x18] sm:$0xff]
      %v257 = vld [vmem:[%s228 + $0x20] sm:$0xff]
      %v258 = vld [vmem:[%s228 + $0x28] sm:$0xff]
      %v259 = vld [vmem:[%s228 + $0x30] sm:$0xff]
      %v260 = vld [vmem:[%s228 + $0x38] sm:$0xff]
      %v261 = vld [vmem:[%s228 + $0x40] sm:$0xff]
      %v262 = vld [vmem:[%s228 + $0x48] sm:$0xff]
      %v263 = vld [vmem:[%s228 + $0x50] sm:$0xff]
      %v264 = vld [vmem:[%s228 + $0x58] sm:$0xff]
      %v265 = vld [vmem:[%s228 + $0x60] sm:$0xff]
      %v266 = vld [vmem:[%s228 + $0x68] sm:$0xff]
      %v267 = vld [vmem:[%s228 + $0x70] sm:$0xff]
      %v268 = vld [vmem:[%s228 + $0x78] sm:$0xff]
      %v269 = vld [vmem:[%s228 + $0x80] sm:$0xff]
      %v270 = vld [vmem:[%s228 + $0x88] sm:$0xff]
      %v271 = vld [vmem:[%s228 + $0x90] sm:$0xff]
      %v272 = vld [vmem:[%s228 + $0x98] sm:$0xff]
      %v273 = vld [vmem:[%s228 + $0xa0] sm:$0xff]
      %v274 = vld [vmem:[%s228 + $0xa8] sm:$0xff]
      %v275 = vld [vmem:[%s228 + $0xb0] sm:$0xff]
      %v276 = vld [vmem:[%s228 + $0xb8] sm:$0xff]
      %v277 = vld [vmem:[%s228 + $0xc0] sm:$0xff]
      %v278 = vld [vmem:[%s228 + $0xc8] sm:$0xff]
      %v279 = vld [vmem:[%s228 + $0xd0] sm:$0xff]
      %v280 = vld [vmem:[%s228 + $0xd8] sm:$0xff]
      %v281 = vld [vmem:[%s228 + $0xe0] sm:$0xff]
      %v282 = vld [vmem:[%s228 + $0xe8] sm:$0xff]
      %v283 = vld [vmem:[%s228 + $0xf0] sm:$0xff]
      %v284 = vld [vmem:[%s228 + $0xf8] sm:$0xff]
      %v285 = vld [vmem:[%s228 + $0x100] sm:$0xff]
      %v286 = vld [vmem:[%s228 + $0x108] sm:$0xff]
      %v287 = vld [vmem:[%s228 + $0x110] sm:$0xff]
      %v288 = vld [vmem:[%s228 + $0x118] sm:$0xff]
      %v289 = vld [vmem:[%s228 + $0x120] sm:$0xff]
      %v290 = vld [vmem:[%s228 + $0x128] sm:$0xff]
      %v291 = vld [vmem:[%s228 + $0x130] sm:$0xff]
      %v292 = vld [vmem:[%s228 + $0x138] sm:$0xff]
      %v293 = vld [vmem:[%s228 + $0x140] sm:$0xff]
      %v294 = vld [vmem:[%s228 + $0x148] sm:$0xff]
      %v295 = vld [vmem:[%s228 + $0x150] sm:$0xff]
      %v296 = vld [vmem:[%s228 + $0x158] sm:$0xff]
      %v297 = vld [vmem:[%s228 + $0x160] sm:$0xff]
      %v298 = vld [vmem:[%s228 + $0x168] sm:$0xff]
      %v299 = vld [vmem:[%s228 + $0x170] sm:$0xff]
      %v300 = vld [vmem:[%s228 + $0x178] sm:$0xff]
      %v301 = vld [vmem:[%s228 + $0x180] sm:$0xff]
      %v302 = vld [vmem:[%s228 + $0x188] sm:$0xff]
      %v303 = vld [vmem:[%s228 + $0x190] sm:$0xff]
      %v304 = vld [vmem:[%s228 + $0x198] sm:$0xff]
      %v305 = vld [vmem:[%s228 + $0x1a0] sm:$0xff]
      %v306 = vld [vmem:[%s228 + $0x1a8] sm:$0xff]
      %v307 = vld [vmem:[%s239] sm:$0xff]
      %v308 = vld [vmem:[%s239 + $0x8] sm:$0xff]
      %310 = vset.pattern.permute.xlu0 0
      %311 = vperm.xlu0 %310, %v307
      %v312 = vpop.permute.xlu0 %311
      %315 = vset.pattern.permute.xlu0 0
      %316 = vperm.xlu0 %315, %v308
      %v317 = vpop.permute.xlu0 %316
      %v321 = vunpack.c.l.b16 %v251
      %v322 = vunpack.c.h.b16 %v251
      %v323 = vunpack.c.l.b16 %v252
      %v324 = vunpack.c.h.b16 %v252
      %v325 = vpack.c.b16 %v323, %v321
      %v326 = vpack.c.b16 %v324, %v322
      %v382 = vunpack.c.l.b16 %v253
      %v383 = vunpack.c.h.b16 %v253
      %v384 = vunpack.c.l.b16 %v254
      %v385 = vunpack.c.h.b16 %v254
      %v386 = vunpack.c.l.b16 %v255
      %v387 = vunpack.c.h.b16 %v255
      %v388 = vunpack.c.l.b16 %v256
      %v389 = vunpack.c.h.b16 %v256
      %v390 = vunpack.c.l.b16 %v257
      %v391 = vunpack.c.h.b16 %v257
      %v392 = vunpack.c.l.b16 %v258
      %v393 = vunpack.c.h.b16 %v258
      %v394 = vunpack.c.l.b16 %v259
      %v395 = vunpack.c.h.b16 %v259
      %v396 = vunpack.c.l.b16 %v260
      %v397 = vunpack.c.h.b16 %v260
      %v398 = vunpack.c.l.b16 %v261
      %v399 = vunpack.c.h.b16 %v261
      %v400 = vunpack.c.l.b16 %v262
      %v401 = vunpack.c.h.b16 %v262
      %v402 = vunpack.c.l.b16 %v263
      %v403 = vunpack.c.h.b16 %v263
      %v404 = vunpack.c.l.b16 %v264
      %v405 = vunpack.c.h.b16 %v264
      %v406 = vunpack.c.l.b16 %v265
      %v407 = vunpack.c.h.b16 %v265
      %v408 = vunpack.c.l.b16 %v266
      %v409 = vunpack.c.h.b16 %v266
      %v410 = vunpack.c.l.b16 %v267
      %v411 = vunpack.c.h.b16 %v267
      %v412 = vunpack.c.l.b16 %v268
      %v413 = vunpack.c.h.b16 %v268
      %v414 = vunpack.c.l.b16 %v269
      %v415 = vunpack.c.h.b16 %v269
      %v416 = vunpack.c.l.b16 %v270
      %v417 = vunpack.c.h.b16 %v270
      %v418 = vunpack.c.l.b16 %v271
      %v419 = vunpack.c.h.b16 %v271
      %v420 = vunpack.c.l.b16 %v272
      %v421 = vunpack.c.h.b16 %v272
      %v422 = vunpack.c.l.b16 %v273
      %v423 = vunpack.c.h.b16 %v273
      %v424 = vunpack.c.l.b16 %v274
      %v425 = vunpack.c.h.b16 %v274
      %v426 = vunpack.c.l.b16 %v275
      %v427 = vunpack.c.h.b16 %v275
      %v428 = vunpack.c.l.b16 %v276
      %v429 = vunpack.c.h.b16 %v276
      %v430 = vunpack.c.l.b16 %v277
      %v431 = vunpack.c.h.b16 %v277
      %v432 = vunpack.c.l.b16 %v278
      %v433 = vunpack.c.h.b16 %v278
      %v434 = vunpack.c.l.b16 %v279
      %v435 = vunpack.c.h.b16 %v279
      %v436 = vunpack.c.l.b16 %v280
      %v437 = vunpack.c.h.b16 %v280
      %v438 = vunpack.c.l.b16 %v281
      %v439 = vunpack.c.h.b16 %v281
      %v440 = vunpack.c.l.b16 %v282
      %v441 = vunpack.c.h.b16 %v282
      %v442 = vunpack.c.l.b16 %v283
      %v443 = vunpack.c.h.b16 %v283
      %v444 = vunpack.c.l.b16 %v284
      %v445 = vunpack.c.h.b16 %v284
      %v446 = vunpack.c.l.b16 %v285
      %v447 = vunpack.c.h.b16 %v285
      %v448 = vunpack.c.l.b16 %v286
      %v449 = vunpack.c.h.b16 %v286
      %v450 = vunpack.c.l.b16 %v287
      %v451 = vunpack.c.h.b16 %v287
      %v452 = vunpack.c.l.b16 %v288
      %v453 = vunpack.c.h.b16 %v288
      %v454 = vunpack.c.l.b16 %v289
      %v455 = vunpack.c.h.b16 %v289
      %v456 = vunpack.c.l.b16 %v290
      %v457 = vunpack.c.h.b16 %v290
      %v458 = vunpack.c.l.b16 %v291
      %v459 = vunpack.c.h.b16 %v291
      %v460 = vunpack.c.l.b16 %v292
      %v461 = vunpack.c.h.b16 %v292
      %v462 = vunpack.c.l.b16 %v293
      %v463 = vunpack.c.h.b16 %v293
      %v464 = vunpack.c.l.b16 %v294
      %v465 = vunpack.c.h.b16 %v294
      %v466 = vunpack.c.l.b16 %v295
      %v467 = vunpack.c.h.b16 %v295
      %v468 = vunpack.c.l.b16 %v296
      %v469 = vunpack.c.h.b16 %v296
      %v470 = vunpack.c.l.b16 %v297
      %v471 = vunpack.c.h.b16 %v297
      %v472 = vunpack.c.l.b16 %v298
      %v473 = vunpack.c.h.b16 %v298
      %v474 = vunpack.c.l.b16 %v299
      %v475 = vunpack.c.h.b16 %v299
      %v476 = vunpack.c.l.b16 %v300
      %v477 = vunpack.c.h.b16 %v300
      %v478 = vunpack.c.l.b16 %v301
      %v479 = vunpack.c.h.b16 %v301
      %v480 = vunpack.c.l.b16 %v302
      %v481 = vunpack.c.h.b16 %v302
      %v482 = vunpack.c.l.b16 %v303
      %v483 = vunpack.c.h.b16 %v303
      %v484 = vunpack.c.l.b16 %v304
      %v485 = vunpack.c.h.b16 %v304
      %v486 = vunpack.c.l.b16 %v305
      %v487 = vunpack.c.h.b16 %v305
      %v488 = vunpack.c.l.b16 %v306
      %v489 = vunpack.c.h.b16 %v306
      %v490 = vpack.c.b16 %v386, %v382
      %v491 = vpack.c.b16 %v387, %v383
      %v492 = vpack.c.b16 %v388, %v384
      %v493 = vpack.c.b16 %v389, %v385
      %v494 = vpack.c.b16 %v394, %v390
      %v495 = vpack.c.b16 %v395, %v391
      %v496 = vpack.c.b16 %v396, %v392
      %v497 = vpack.c.b16 %v397, %v393
      %v498 = vpack.c.b16 %v402, %v398
      %v499 = vpack.c.b16 %v403, %v399
      %v500 = vpack.c.b16 %v404, %v400
      %v501 = vpack.c.b16 %v405, %v401
      %v502 = vpack.c.b16 %v410, %v406
      %v503 = vpack.c.b16 %v411, %v407
      %v504 = vpack.c.b16 %v412, %v408
      %v505 = vpack.c.b16 %v413, %v409
      %v506 = vpack.c.b16 %v418, %v414
      %v507 = vpack.c.b16 %v419, %v415
      %v508 = vpack.c.b16 %v420, %v416
      %v509 = vpack.c.b16 %v421, %v417
      %v510 = vpack.c.b16 %v426, %v422
      %v511 = vpack.c.b16 %v427, %v423
      %v512 = vpack.c.b16 %v428, %v424
      %v513 = vpack.c.b16 %v429, %v425
      %v514 = vpack.c.b16 %v434, %v430
      %v515 = vpack.c.b16 %v435, %v431
      %v516 = vpack.c.b16 %v436, %v432
      %v517 = vpack.c.b16 %v437, %v433
      %v518 = vpack.c.b16 %v442, %v438
      %v519 = vpack.c.b16 %v443, %v439
      %v520 = vpack.c.b16 %v444, %v440
      %v521 = vpack.c.b16 %v445, %v441
      %v522 = vpack.c.b16 %v450, %v446
      %v523 = vpack.c.b16 %v451, %v447
      %v524 = vpack.c.b16 %v452, %v448
      %v525 = vpack.c.b16 %v453, %v449
      %v526 = vpack.c.b16 %v458, %v454
      %v527 = vpack.c.b16 %v459, %v455
      %v528 = vpack.c.b16 %v460, %v456
      %v529 = vpack.c.b16 %v461, %v457
      %v530 = vpack.c.b16 %v466, %v462
      %v531 = vpack.c.b16 %v467, %v463
      %v532 = vpack.c.b16 %v468, %v464
      %v533 = vpack.c.b16 %v469, %v465
      %v534 = vpack.c.b16 %v474, %v470
      %v535 = vpack.c.b16 %v475, %v471
      %v536 = vpack.c.b16 %v476, %v472
      %v537 = vpack.c.b16 %v477, %v473
      %v538 = vpack.c.b16 %v482, %v478
      %v539 = vpack.c.b16 %v483, %v479
      %v540 = vpack.c.b16 %v484, %v480
      %v541 = vpack.c.b16 %v485, %v481
      %v542 = vpack.c.b16 %v486, %v486
      %v543 = vpack.c.b16 %v487, %v487
      %v544 = vpack.c.b16 %v488, %v488
      %v545 = vpack.c.b16 %v489, %v489
      %vm598 = vcmask 719872
      %v600 = vsel %vm598, %v326, 0
      %vm602 = vcmask 1043456
      %v604 = vsel %vm602, %v542, 0
      %v607 = vsel %vm602, %v543, 0
      %v610 = vsel %vm602, %v544, 0
      %v613 = vsel %vm602, %v545, 0
      %615 = vmatprep.subr.bf16.mxu0 %v491
      %616 = vmatpush1.bf16.msra.mxu0 %v490
      %617 = vmatprep.subr.bf16.mxu0 %v495
      %618 = vmatpush1.bf16.msra.mxu0 %v494
      %619 = vmatprep.subr.bf16.mxu0 %v499
      %620 = vmatpush1.bf16.msra.mxu0 %v498
      %621 = vmatprep.subr.bf16.mxu0 %v503
      %622 = vmatpush1.bf16.msra.mxu0 %v502
      %623 = vmatprep.subr.bf16.mxu0 %v507
      %624 = vmatpush1.bf16.msra.mxu0 %v506
      %625 = vmatprep.subr.bf16.mxu0 %v511
      %626 = vmatpush1.bf16.msra.mxu0 %v510
      %627 = vmatprep.subr.bf16.mxu0 %v515
      %628 = vmatpush1.bf16.msra.mxu0 %v514
      %629 = vmatprep.subr.bf16.mxu0 %v519
      %630 = vmatpush1.bf16.msra.mxu0 %v518
      %631 = vmatprep.subr.bf16.mxu0 %v523
      %632 = vmatpush1.bf16.msra.mxu0 %v522
      %633 = vmatprep.subr.bf16.mxu0 %v527
      %634 = vmatpush1.bf16.msra.mxu0 %v526
      %635 = vmatprep.subr.bf16.mxu0 %v531
      %636 = vmatpush1.bf16.msra.mxu0 %v530
      %637 = vmatprep.subr.bf16.mxu0 %v535
      %638 = vmatpush1.bf16.msra.mxu0 %v534
      %639 = vmatprep.subr.bf16.mxu0 %v539
      %640 = vmatpush1.bf16.msra.mxu0 %v538
      %641 = vmatprep.subr.bf16.mxu0 %v607
      %642 = vmatpush1.bf16.msra.mxu0 %v604
      %643 = vmatprep.subr.bf16.mxu0 0
      %644 = vmatpush1.bf16.msra.mxu0 0
      %645 = vmatprep.subr.bf16.mxu0 0
      %646 = vmatpush1.bf16.msra.mxu0 0
      %647 = vmatprep.mubr.bf16.mxu0 %v600
      %648 = vmatmul.mubr.bf16.gmra.mrb[0].mxu0 %v325
      %v649 = vpop.f32.mrb[0].mxu0
      %v650 = vadd.f32 %v312, %v649
      %v651 = vpop.f32.mrb[0].mxu0
      %v652 = vadd.f32 %v312, %v651
      %v653 = vpop.f32.mrb[0].mxu0
      %v654 = vadd.f32 %v317, %v653
      %v655 = vpop.f32.mrb[0].mxu0
      %v656 = vadd.f32 %v317, %v655
      %657 = vdwg.mxu0
      %658 = vmatprep.subr.bf16.mxu0 %v493
      %659 = vmatpush1.bf16.msra.mxu0 %v492
      %660 = vmatprep.subr.bf16.mxu0 %v497
      %661 = vmatpush1.bf16.msra.mxu0 %v496
      %662 = vmatprep.subr.bf16.mxu0 %v501
      %663 = vmatpush1.bf16.msra.mxu0 %v500
      %664 = vmatprep.subr.bf16.mxu0 %v505
      %665 = vmatpush1.bf16.msra.mxu0 %v504
      %666 = vmatprep.subr.bf16.mxu0 %v509
      %667 = vmatpush1.bf16.msra.mxu0 %v508
      %668 = vmatprep.subr.bf16.mxu0 %v513
      %669 = vmatpush1.bf16.msra.mxu0 %v512
      %670 = vmatprep.subr.bf16.mxu0 %v517
      %671 = vmatpush1.bf16.msra.mxu0 %v516
      %672 = vmatprep.subr.bf16.mxu0 %v521
      %673 = vmatpush1.bf16.msra.mxu0 %v520
      %674 = vmatprep.subr.bf16.mxu0 %v525
      %675 = vmatpush1.bf16.msra.mxu0 %v524
      %676 = vmatprep.subr.bf16.mxu0 %v529
      %677 = vmatpush1.bf16.msra.mxu0 %v528
      %678 = vmatprep.subr.bf16.mxu0 %v533
      %679 = vmatpush1.bf16.msra.mxu0 %v532
      %680 = vmatprep.subr.bf16.mxu0 %v537
      %681 = vmatpush1.bf16.msra.mxu0 %v536
      %682 = vmatprep.subr.bf16.mxu0 %v541
      %683 = vmatpush1.bf16.msra.mxu0 %v540
      %684 = vmatprep.subr.bf16.mxu0 %v613
      %685 = vmatpush1.bf16.msra.mxu0 %v610
      %686 = vmatprep.subr.bf16.mxu0 0
      %687 = vmatpush1.bf16.msra.mxu0 0
      %688 = vmatprep.subr.bf16.mxu0 0
      %689 = vmatpush1.bf16.msra.mxu0 0
      %690 = vmatprep.mubr.bf16.mxu0 %v600
      %691 = vmatmul.mubr.bf16.gmra.mrb[0].mxu0 %v325
      %v692 = vpop.f32.mrb[0].mxu0
      %v693 = vadd.f32 %v312, %v692
      %v694 = vpop.f32.mrb[0].mxu0
      %v695 = vadd.f32 %v312, %v694
      %v696 = vpop.f32.mrb[0].mxu0
      %v697 = vadd.f32 %v317, %v696
      %v698 = vpop.f32.mrb[0].mxu0
      %v699 = vadd.f32 %v317, %v698
      %700 = vdwg.mxu0
      %v701 = vmax.f32 %v650, 0.0
      %v702 = vmax.f32 %v652, 0.0
      %v703 = vmax.f32 %v693, 0.0
      %v704 = vmax.f32 %v695, 0.0
      %v705 = vmax.f32 %v654, 0.0
      %v706 = vmax.f32 %v656, 0.0
      %v707 = vmax.f32 %v697, 0.0
      %v708 = vmax.f32 %v699, 0.0
      %709 = vst [vmem:[%s248] sm:$0xff] %v701
      %710 = vst [vmem:[%s248 + $0x8] sm:$0xff] %v702
      %711 = vst [vmem:[%s248 + $0x10] sm:$0xff] %v703
      %712 = vst [vmem:[%s248 + $0x18] sm:$0xff] %v704
      %713 = vst [vmem:[%s248 + $0x20] sm:$0xff] %v705
      %714 = vst [vmem:[%s248 + $0x28] sm:$0xff] %v706
      %715 = vst [vmem:[%s248 + $0x30] sm:$0xff] %v707
      %716 = vst [vmem:[%s248 + $0x38] sm:$0xff] %v708
      %s717 = smul.u32 4, %s19
      %p718 = scmp.lt.s32.totalorder %s18, 1
      %s719 = scalar_select %p718, %s18, 1
      %p720 = scmp.lt.s32.totalorder %s717, 3
      %s721 = scalar_select %p720, %s717, 3
      %s722 = smul.addr %s719, 8
      %s723 = sadd.s32 %s721, %s722
      %s724 = smul.addr %s723, 8
      %s725 = scalar_lea.vmem %s3, %s724
      // Predicated region
      $region33: #{image_regressor.5} parent=31 // pred_check
        %p726 = pneg %p126
      $region34: #{image_regressor.5} parent=31 // pred_check_branch
        %728 = sbr.rel (%p726) target = $region36
      $region35: #{image_regressor.5} parent=31 // pred_region
        %s729 = smul.u32 4, %s19
      $region36: #{image_regressor.5} parent=31 // pred_fallthru
        _
    $region32: #{image_regressor.5} parent=5 // pred_fallthru
      _
    %p730 = scmp.le.s32.totalorder 2, %s9
    // Predicated region
    $region37: #{image_regressor.5} parent=5 // pred_check
      %p731 = pneg %p730
    $region38: #{image_regressor.5} parent=5 // pred_check_branch
      %733 = sbr.rel (%p731) target = $region40
    $region39: #{image_regressor.5} parent=5 // pred_region
      %s734 = ssub.s32 %s9, 2
      // Predicated region
      $region41: #{image_regressor.5} parent=39 // pred_check
        %p735 = pneg %p132
      $region42: #{image_regressor.5} parent=39 // pred_check_branch
        %737 = sbr.rel (%p735) target = $region44
      $region43: #{image_regressor.5} parent=39 // pred_region
        %s738 = smul.u32 4, %s21
        %p739 = scmp.lt.s32.totalorder %s20, 1
        %s740 = scalar_select %p739, %s20, 1
        %p741 = scmp.lt.s32.totalorder %s738, 3
        %s742 = scalar_select %p741, %s738, 3
        %s743 = smul.addr %s740, 8
        %s744 = sadd.s32 %s742, %s743
        %s745 = smul.addr %s744, 8
        %s746 = scalar_lea.vmem %s3, %s745
      $region44: #{image_regressor.5} parent=39 // pred_fallthru
        _
    $region40: #{image_regressor.5} parent=5 // pred_fallthru
      _
  $region6: #{image_regressor.5} parent=0 // loop_footer
    %s13 = sadd.s32 1, %s9
  $region7: #{image_regressor.5} parent=0 // loop_footer_branch
    %8 = sbr.rel target = $region3
  $region8: #{image_regressor.5} parent=0 // loop_exit
    _

// kernel: image_regressor.6
$region0: #{image_regressor.6}
  #allocation0 [shape = 'u32[]', space=smem, size = 0x4, offset = 0x4, fixed_abs, tag = 'smem constant byte address 0x4 - core index']
  #allocation1 [shape = 'u32[144,128]{1,0:T(1,128)}', space=vmem, size = 0x12000, scoped, tag = 'internal scratch']
  %s0 = inlined_call_operand.vmem [shape: bf16[2,432,64], index: 0, kind: input, shape index: {}]
  %s1 = inlined_call_operand.vmem [shape: bf16[2,32,432], index: 1, kind: input, shape index: {}]
  %s2 = inlined_call_operand.vmem [shape: f32[2,32,1], index: 2, kind: input, shape index: {}]
  %s3 = inlined_call_operand.vmem [shape: f32[2,32,64], index: 3, kind: output, shape index: {}]
  %s4 = sld [smem:[#allocation0]]
  $region45: #{image_regressor.6} parent=0
    _
  %s6 = ssub.s32 1, %s4
  %s7 = scalar_select 0, %s6, %s4
  loop: start=0, step=1, limit=4
  $region2: #{image_regressor.6} parent=0 // loop_pre_header
    _
  $region3: #{image_regressor.6} parent=0 // loop_header
    %s9 = sphi 0, %s13
    %p10 = scmp.ge.s32.totalorder %s9, 4
    %s16 = sphi 0, %s28
    %s17 = sphi 0, %s24
    %s18 = sphi 0, %s16
    %s19 = sphi 0, %s17
    %s20 = sphi 0, %s18
    %s21 = sphi 0, %s19
    %s33 = sphi 0, %s35
    %s36 = sphi 0, %s33
    %s37 = sphi 0, %s36
    %s53 = sphi 0, %s37
    %s59 = sphi 0, %s61
    %s62 = sphi 0, %s59
    %s63 = sphi 0, %s62
    %s79 = sphi 0, %s63
    %s85 = sphi 0, %s87
    %s88 = sphi 0, %s85
    %s89 = sphi 0, %s88
    %s105 = sphi 0, %s89
    %s113 = sphi 0, %s115
    %s116 = sphi 0, %s113
    %s117 = sphi 0, %s116
    %s133 = sphi 0, %s117
  $region4: #{image_regressor.6} parent=0 // loop_header_branch
    %12 = sbr.rel (%p10) target = $region8
  $region5: #{image_regressor.6} parent=0 // loop_body
    %s14 = ssub.s32 %s9, 1
    %s15 = ssub.s32 %s9, 2
    %s22 = sadd.s32 1, %s17
    %p23 = scmp.ge.s32.totalorder %s22, 1
    %s24 = scalar_select %p23, 0, %s22
    %s25 = sadd.s32 1, %s16
    %s26 = scalar_select %p23, %s25, %s16
    %p27 = scmp.ge.s32.totalorder %s26, 2
    %s28 = scalar_select %p27, 0, %s26
    %s29 = ssub.s32 %s16, %s28
    %s30 = ssub.s32 %s17, %s24
    %s31 = sor.u32 %s29, %s30
    %p32 = scmp.eq.s32.totalorder %s31, 0
    %s34 = sadd.s32 %s33, 1
    %s35 = scalar_select %p32, %s33, %s34
    %p38 = pneg %p32
    %p39 = scmp.eq.s32.totalorder %s9, 1
    %p40 = por %p38, %p39
    %p41 = scmp.ne.s32.totalorder %s33, %s36
    %p42 = scmp.eq.s32.totalorder %s9, 0
    %p43 = por %p41, %p42
    %p44 = scmp.ne.s32.totalorder %s33, %s36
    %p45 = scmp.eq.s32.totalorder %s14, 1
    %p46 = por %p44, %p45
    %p47 = scmp.ne.s32.totalorder %s36, %s37
    %p48 = scmp.eq.s32.totalorder %s14, 0
    %p49 = por %p47, %p48
    %p50 = scmp.ne.s32.totalorder %s36, %s37
    %p51 = scmp.eq.s32.totalorder %s15, 1
    %p52 = por %p50, %p51
    %p54 = scmp.ne.s32.totalorder %s37, %s53
    %p55 = scmp.eq.s32.totalorder %s15, 0
    %p56 = por %p54, %p55
    %s57 = ssub.s32 %s16, %s28
    %p58 = scmp.eq.s32.totalorder %s57, 0
    %s60 = sadd.s32 %s59, 1
    %s61 = scalar_select %p58, %s59, %s60
    %p64 = pneg %p58
    %p65 = scmp.eq.s32.totalorder %s9, 1
    %p66 = por %p64, %p65
    %p67 = scmp.ne.s32.totalorder %s59, %s62
    %p68 = scmp.eq.s32.totalorder %s9, 0
    %p69 = por %p67, %p68
    %p70 = scmp.ne.s32.totalorder %s59, %s62
    %p71 = scmp.eq.s32.totalorder %s14, 1
    %p72 = por %p70, %p71
    %p73 = scmp.ne.s32.totalorder %s62, %s63
    %p74 = scmp.eq.s32.totalorder %s14, 0
    %p75 = por %p73, %p74
    %p76 = scmp.ne.s32.totalorder %s62, %s63
    %p77 = scmp.eq.s32.totalorder %s15, 1
    %p78 = por %p76, %p77
    %p80 = scmp.ne.s32.totalorder %s63, %s79
    %p81 = scmp.eq.s32.totalorder %s15, 0
    %p82 = por %p80, %p81
    %s83 = ssub.s32 %s16, %s28
    %p84 = scmp.eq.s32.totalorder %s83, 0
    %s86 = sadd.s32 %s85, 1
    %s87 = scalar_select %p84, %s85, %s86
    %p90 = pneg %p84
    %p91 = scmp.eq.s32.totalorder %s9, 1
    %p92 = por %p90, %p91
    %p93 = scmp.ne.s32.totalorder %s85, %s88
    %p94 = scmp.eq.s32.totalorder %s9, 0
    %p95 = por %p93, %p94
    %p96 = scmp.ne.s32.totalorder %s85, %s88
    %p97 = scmp.eq.s32.totalorder %s14, 1
    %p98 = por %p96, %p97
    %p99 = scmp.ne.s32.totalorder %s88, %s89
    %p100 = scmp.eq.s32.totalorder %s14, 0
    %p101 = por %p99, %p100
    %p102 = scmp.ne.s32.totalorder %s88, %s89
    %p103 = scmp.eq.s32.totalorder %s15, 1
    %p104 = por %p102, %p103
    %p106 = scmp.ne.s32.totalorder %s89, %s105
    %p107 = scmp.eq.s32.totalorder %s15, 0
    %p108 = por %p106, %p107
    %s109 = ssub.s32 %s16, %s28
    %s110 = ssub.s32 %s17, %s24
    %s111 = sor.u32 %s109, %s110
    %p112 = scmp.eq.s32.totalorder %s111, 0
    %s114 = sadd.s32 %s113, 1
    %s115 = scalar_select %p112, %s113, %s114
    %p118 = pneg %p112
    %p119 = scmp.eq.s32.totalorder %s9, 1
    %p120 = por %p118, %p119
    %p121 = scmp.ne.s32.totalorder %s113, %s116
    %p122 = scmp.eq.s32.totalorder %s9, 0
    %p123 = por %p121, %p122
    %p124 = scmp.ne.s32.totalorder %s113, %s116
    %p125 = scmp.eq.s32.totalorder %s14, 1
    %p126 = por %p124, %p125
    %p127 = scmp.ne.s32.totalorder %s116, %s117
    %p128 = scmp.eq.s32.totalorder %s14, 0
    %p129 = por %p127, %p128
    %p130 = scmp.ne.s32.totalorder %s116, %s117
    %p131 = scmp.eq.s32.totalorder %s15, 1
    %p132 = por %p130, %p131
    %p134 = scmp.ne.s32.totalorder %s117, %s133
    %p135 = scmp.eq.s32.totalorder %s15, 0
    %p136 = por %p134, %p135
    %p137 = scmp.le.s32.totalorder 1, %s9
    %p138 = scmp.lt.s32.totalorder %s9, 3
    %p139 = pnand %p137, %p138
    %p140 = pneg %p139
    // Predicated region
    $region9: #{image_regressor.6} parent=5 // pred_check
      _
    $region10: #{image_regressor.6} parent=5 // pred_check_branch
      %142 = sbr.rel (%p139) target = $region12
    $region11: #{image_regressor.6} parent=5 // pred_region
      %s143 = ssub.s32 %s9, 1
    $region12: #{image_regressor.6} parent=5 // pred_fallthru
      _
    %p144 = scmp.lt.s32.totalorder %s9, 2
    // Predicated region
    $region13: #{image_regressor.6} parent=5 // pred_check
      %p145 = pneg %p144
    $region14: #{image_regressor.6} parent=5 // pred_check_branch
      %147 = sbr.rel (%p145) target = $region16
    $region15: #{image_regressor.6} parent=5 // pred_region
      // Predicated region
      $region17: #{image_regressor.6} parent=15 // pred_check
        %p148 = pneg %p43
      $region18: #{image_regressor.6} parent=15 // pred_check_branch
        %150 = sbr.rel (%p148) target = $region20
      $region19: #{image_regressor.6} parent=15 // pred_region
        %p151 = scmp.lt.s32.totalorder %s16, 1
        %s152 = scalar_select %p151, %s16, 1
        %p153 = scmp.lt.s32.totalorder %s17, 0
        %s154 = scalar_select %p153, %s17, 0
        %s155 = smul.addr %s152, 54
        %s156 = sadd.s32 %s154, %s155
        %s157 = smul.addr %s156, 4
        %s158 = scalar_lea.vmem %s0, %s157
      $region20: #{image_regressor.6} parent=15 // pred_fallthru
        _
      // Predicated region
      $region21: #{image_regressor.6} parent=15 // pred_check
        %p159 = pneg %p69
      $region22: #{image_regressor.6} parent=15 // pred_check_branch
        %161 = sbr.rel (%p159) target = $region24
      $region23: #{image_regressor.6} parent=15 // pred_region
        %p162 = scmp.lt.s32.totalorder %s16, 1
        %s163 = scalar_select %p162, %s16, 1
        %s164 = smul.addr %s163, 16
        %s165 = smul.addr %s164, 4
        %s166 = scalar_lea.vmem %s1, %s165
      $region24: #{image_regressor.6} parent=15 // pred_fallthru
        _
      // Predicated region
      $region25: #{image_regressor.6} parent=15 // pred_check
        %p167 = pneg %p95
      $region26: #{image_regressor.6} parent=15 // pred_check_branch
        %169 = sbr.rel (%p167) target = $region28
      $region27: #{image_regressor.6} parent=15 // pred_region
        %p170 = scmp.lt.s32.totalorder %s16, 1
        %s171 = scalar_select %p170, %s16, 1
        %s172 = smul.addr %s171, 4
        %s173 = smul.addr %s172, 8
        %s174 = scalar_lea.vmem %s2, %s173
      $region28: #{image_regressor.6} parent=15 // pred_fallthru
        _
    $region16: #{image_regressor.6} parent=5 // pred_fallthru
      _
    %p175 = scmp.le.s32.totalorder 1, %s9
    %p176 = scmp.lt.s32.totalorder %s9, 3
    %p177 = pnand %p175, %p176
    %p178 = pneg %p177
    // Predicated region
    $region29: #{image_regressor.6} parent=5 // pred_check
      _
    $region30: #{image_regressor.6} parent=5 // pred_check_branch
      %180 = sbr.rel (%p177) target = $region32
    $region31: #{image_regressor.6} parent=5 // pred_region
      %s181 = ssub.s32 %s9, 1
      %p182 = scmp.lt.s32.totalorder %s18, 1
      %s183 = scalar_select %p182, %s18, 1
      %p184 = scmp.lt.s32.totalorder %s19, 0
      %s185 = scalar_select %p184, %s19, 0
      %s186 = smul.addr %s183, 54
      %s187 = sadd.s32 %s185, %s186
      %s188 = smul.addr %s187, 4
      %s189 = scalar_lea.vmem %s0, %s188
      %p190 = pneg %p49
      %p191 = pneg %p46
      %p192 = scmp.lt.s32.totalorder %s18, 1
      %s193 = scalar_select %p192, %s18, 1
      %s194 = smul.addr %s193, 16
      %s195 = smul.addr %s194, 4
      %s196 = scalar_lea.vmem %s1, %s195
      %p197 = pneg %p75
      %p198 = pneg %p72
      %p199 = scmp.lt.s32.totalorder %s18, 1
      %s200 = scalar_select %p199, %s18, 1
      %s201 = smul.addr %s200, 4
      %s202 = smul.addr %s201, 8
      %s203 = scalar_lea.vmem %s2, %s202
      %p204 = pneg %p101
      %p205 = pneg %p98
      %p206 = pneg %p129
      %p207 = pneg %p126
      %p208 = scmp.lt.s32.totalorder %s18, 1
      %s209 = scalar_select %p208, %s18, 1
      %p210 = scmp.lt.s32.totalorder %s19, 0
      %s211 = scalar_select %p210, %s19, 0
      %s212 = smul.addr %s209, 4
      %s213 = sadd.s32 %s211, %s212
      %s214 = smul.addr %s213, 8
      %s215 = scalar_lea.vmem %s3, %s214
      %p216 = scmp.lt.s32.totalorder %s18, 1
      %s217 = scalar_select %p216, %s18, 1
      %p218 = scmp.lt.s32.totalorder %s19, 0
      %s219 = scalar_select %p218, %s19, 0
      %s220 = smul.addr %s217, 54
      %s221 = sadd.s32 %s219, %s220
      %s222 = smul.addr %s221, 4
      %s223 = scalar_lea.vmem %s0, %s222
      %p224 = scmp.lt.s32.totalorder %s18, 1
      %s225 = scalar_select %p224, %s18, 1
      %s226 = smul.addr %s225, 16
      %s227 = smul.addr %s226, 4
      %s228 = scalar_lea.vmem %s1, %s227
      %p229 = scmp.lt.s32.totalorder %s18, 1
      %s230 = scalar_select %p229, %s18, 1
      %s231 = smul.addr %s230, 4
      %s232 = smul.addr %s231, 8
      %s233 = scalar_lea.vmem %s2, %s232
      %p234 = scmp.lt.s32.totalorder %s18, 1
      %s235 = scalar_select %p234, %s18, 1
      %p236 = scmp.lt.s32.totalorder %s19, 0
      %s237 = scalar_select %p236, %s19, 0
      %s238 = smul.addr %s235, 4
      %s239 = sadd.s32 %s237, %s238
      %s240 = smul.addr %s239, 8
      %s241 = scalar_lea.vmem %s3, %s240
      %v243 = vld [vmem:[%s228] sm:$0xff]
      %v244 = vld [vmem:[%s228 + $0x8] sm:$0xff]
      %v245 = vld [vmem:[%s228 + $0x10] sm:$0xff]
      %v246 = vld [vmem:[%s228 + $0x18] sm:$0xff]
      %v247 = vld [vmem:[%s228 + $0x20] sm:$0xff]
      %v248 = vld [vmem:[%s228 + $0x28] sm:$0xff]
      %v249 = vld [vmem:[%s228 + $0x30] sm:$0xff]
      %v250 = vld [vmem:[%s228 + $0x38] sm:$0xff]
      %v251 = vld [vmem:[%s223] sm:$0xf]
      %v252 = vld [vmem:[%s223 + $0x4] sm:$0xf]
      %v253 = vld [vmem:[%s223 + $0x8] sm:$0xf]
      %v254 = vld [vmem:[%s223 + $0xc] sm:$0xf]
      %v255 = vld [vmem:[%s223 + $0x10] sm:$0xf]
      %v256 = vld [vmem:[%s223 + $0x14] sm:$0xf]
      %v257 = vld [vmem:[%s223 + $0x18] sm:$0xf]
      %v258 = vld [vmem:[%s223 + $0x1c] sm:$0xf]
      %v259 = vld [vmem:[%s223 + $0x20] sm:$0xf]
      %v260 = vld [vmem:[%s223 + $0x24] sm:$0xf]
      %v261 = vld [vmem:[%s223 + $0x28] sm:$0xf]
      %v262 = vld [vmem:[%s223 + $0x2c] sm:$0xf]
      %v263 = vld [vmem:[%s223 + $0x30] sm:$0xf]
      %v264 = vld [vmem:[%s223 + $0x34] sm:$0xf]
      %v265 = vld [vmem:[%s223 + $0x38] sm:$0xf]
      %v266 = vld [vmem:[%s223 + $0x3c] sm:$0xf]
      %v267 = vld [vmem:[%s223 + $0x40] sm:$0xf]
      %v268 = vld [vmem:[%s223 + $0x44] sm:$0xf]
      %v269 = vld [vmem:[%s223 + $0x48] sm:$0xf]
      %v270 = vld [vmem:[%s223 + $0x4c] sm:$0xf]
      %v271 = vld [vmem:[%s223 + $0x50] sm:$0xf]
      %v272 = vld [vmem:[%s223 + $0x54] sm:$0xf]
      %v273 = vld [vmem:[%s223 + $0x58] sm:$0xf]
      %v274 = vld [vmem:[%s223 + $0x5c] sm:$0xf]
      %v275 = vld [vmem:[%s223 + $0x60] sm:$0xf]
      %v276 = vld [vmem:[%s223 + $0x64] sm:$0xf]
      %v277 = vld [vmem:[%s223 + $0x68] sm:$0xf]
      %v278 = vld [vmem:[%s223 + $0x6c] sm:$0xf]
      %v279 = vld [vmem:[%s223 + $0x70] sm:$0xf]
      %v280 = vld [vmem:[%s223 + $0x74] sm:$0xf]
      %v281 = vld [vmem:[%s223 + $0x78] sm:$0xf]
      %v282 = vld [vmem:[%s223 + $0x7c] sm:$0xf]
      %v283 = vld [vmem:[%s223 + $0x80] sm:$0xf]
      %v284 = vld [vmem:[%s223 + $0x84] sm:$0xf]
      %v285 = vld [vmem:[%s223 + $0x88] sm:$0xf]
      %v286 = vld [vmem:[%s223 + $0x8c] sm:$0xf]
      %v287 = vld [vmem:[%s223 + $0x90] sm:$0xf]
      %v288 = vld [vmem:[%s223 + $0x94] sm:$0xf]
      %v289 = vld [vmem:[%s223 + $0x98] sm:$0xf]
      %v290 = vld [vmem:[%s223 + $0x9c] sm:$0xf]
      %v291 = vld [vmem:[%s223 + $0xa0] sm:$0xf]
      %v292 = vld [vmem:[%s223 + $0xa4] sm:$0xf]
      %v293 = vld [vmem:[%s223 + $0xa8] sm:$0xf]
      %v294 = vld [vmem:[%s223 + $0xac] sm:$0xf]
      %v295 = vld [vmem:[%s223 + $0xb0] sm:$0xf]
      %v296 = vld [vmem:[%s223 + $0xb4] sm:$0xf]
      %v297 = vld [vmem:[%s223 + $0xb8] sm:$0xf]
      %v298 = vld [vmem:[%s223 + $0xbc] sm:$0xf]
      %v299 = vld [vmem:[%s223 + $0xc0] sm:$0xf]
      %v300 = vld [vmem:[%s223 + $0xc4] sm:$0xf]
      %v301 = vld [vmem:[%s223 + $0xc8] sm:$0xf]
      %v302 = vld [vmem:[%s223 + $0xcc] sm:$0xf]
      %v303 = vld [vmem:[%s223 + $0xd0] sm:$0xf]
      %v304 = vld [vmem:[%s223 + $0xd4] sm:$0xf]
      %v305 = vld [vmem:[%s233] sm:$0xff]
      %v306 = vld [vmem:[%s233 + $0x8] sm:$0xff]
      %v307 = vld [vmem:[%s233 + $0x10] sm:$0xff]
      %v308 = vld [vmem:[%s233 + $0x18] sm:$0xff]
      %310 = vset.pattern.permute.xlu0 0
      %311 = vperm.xlu0 %310, %v305
      %v312 = vpop.permute.xlu0 %311
      %315 = vset.pattern.permute.xlu0 0
      %316 = vperm.xlu0 %315, %v306
      %v317 = vpop.permute.xlu0 %316
      %320 = vset.pattern.permute.xlu0 0
      %321 = vperm.xlu0 %320, %v307
      %v322 = vpop.permute.xlu0 %321
      %325 = vset.pattern.permute.xlu0 0
      %326 = vperm.xlu0 %325, %v308
      %v327 = vpop.permute.xlu0 %326
      %v337 = vunpack.c.l.b16 %v243
      %v338 = vunpack.c.h.b16 %v243
      %v339 = vunpack.c.l.b16 %v244
      %v340 = vunpack.c.h.b16 %v244
      %v341 = vunpack.c.l.b16 %v245
      %v342 = vunpack.c.h.b16 %v245
      %v343 = vunpack.c.l.b16 %v246
      %v344 = vunpack.c.h.b16 %v246
      %v345 = vunpack.c.l.b16 %v247
      %v346 = vunpack.c.h.b16 %v247
      %v347 = vunpack.c.l.b16 %v248
      %v348 = vunpack.c.h.b16 %v248
      %v349 = vunpack.c.l.b16 %v249
      %v350 = vunpack.c.h.b16 %v249
      %v351 = vunpack.c.l.b16 %v250
      %v352 = vunpack.c.h.b16 %v250
      %v353 = vpack.c.b16 %v341, %v337
      %v354 = vpack.c.b16 %v342, %v338
      %v355 = vpack.c.b16 %v343, %v339
      %v356 = vpack.c.b16 %v344, %v340
      %v357 = vpack.c.b16 %v349, %v345
      %v358 = vpack.c.b16 %v350, %v346
      %v359 = vpack.c.b16 %v351, %v347
      %v360 = vpack.c.b16 %v352, %v348
      %v421 = vunpack.c.l.b16 %v251
      %v422 = vunpack.c.l.b16 %v252
      %v423 = vunpack.c.l.b16 %v253
      %v424 = vunpack.c.l.b16 %v254
      %v425 = vunpack.c.l.b16 %v255
      %v426 = vunpack.c.l.b16 %v256
      %v427 = vunpack.c.l.b16 %v257
      %v428 = vunpack.c.l.b16 %v258
      %v429 = vunpack.c.l.b16 %v259
      %v430 = vunpack.c.l.b16 %v260
      %v431 = vunpack.c.l.b16 %v261
      %v432 = vunpack.c.l.b16 %v262
      %v433 = vunpack.c.l.b16 %v263
      %v434 = vunpack.c.l.b16 %v264
      %v435 = vunpack.c.l.b16 %v265
      %v436 = vunpack.c.l.b16 %v266
      %v437 = vunpack.c.l.b16 %v267
      %v438 = vunpack.c.l.b16 %v268
      %v439 = vunpack.c.l.b16 %v269
      %v440 = vunpack.c.l.b16 %v270
      %v441 = vunpack.c.l.b16 %v271
      %v442 = vunpack.c.l.b16 %v272
      %v443 = vunpack.c.l.b16 %v273
      %v444 = vunpack.c.l.b16 %v274
      %v445 = vunpack.c.l.b16 %v275
      %v446 = vunpack.c.l.b16 %v276
      %v447 = vunpack.c.l.b16 %v277
      %v448 = vunpack.c.l.b16 %v278
      %v449 = vunpack.c.l.b16 %v279
      %v450 = vunpack.c.l.b16 %v280
      %v451 = vunpack.c.l.b16 %v281
      %v452 = vunpack.c.l.b16 %v282
      %v453 = vunpack.c.l.b16 %v283
      %v454 = vunpack.c.l.b16 %v284
      %v455 = vunpack.c.l.b16 %v285
      %v456 = vunpack.c.l.b16 %v286
      %v457 = vunpack.c.l.b16 %v287
      %v458 = vunpack.c.l.b16 %v288
      %v459 = vunpack.c.l.b16 %v289
      %v460 = vunpack.c.l.b16 %v290
      %v461 = vunpack.c.l.b16 %v291
      %v462 = vunpack.c.l.b16 %v292
      %v463 = vunpack.c.l.b16 %v293
      %v464 = vunpack.c.l.b16 %v294
      %v465 = vunpack.c.l.b16 %v295
      %v466 = vunpack.c.l.b16 %v296
      %v467 = vunpack.c.l.b16 %v297
      %v468 = vunpack.c.l.b16 %v298
      %v469 = vunpack.c.l.b16 %v299
      %v470 = vunpack.c.l.b16 %v300
      %v471 = vunpack.c.l.b16 %v301
      %v472 = vunpack.c.l.b16 %v302
      %v473 = vunpack.c.l.b16 %v303
      %v474 = vunpack.c.l.b16 %v304
      %v475 = vpack.c.b16 %v422, %v421
      %v476 = vpack.c.b16 %v424, %v423
      %v477 = vpack.c.b16 %v426, %v425
      %v478 = vpack.c.b16 %v428, %v427
      %v479 = vpack.c.b16 %v430, %v429
      %v480 = vpack.c.b16 %v432, %v431
      %v481 = vpack.c.b16 %v434, %v433
      %v482 = vpack.c.b16 %v436, %v435
      %v483 = vpack.c.b16 %v438, %v437
      %v484 = vpack.c.b16 %v440, %v439
      %v485 = vpack.c.b16 %v442, %v441
      %v486 = vpack.c.b16 %v444, %v443
      %v487 = vpack.c.b16 %v446, %v445
      %v488 = vpack.c.b16 %v448, %v447
      %v489 = vpack.c.b16 %v450, %v449
      %v490 = vpack.c.b16 %v452, %v451
      %v491 = vpack.c.b16 %v454, %v453
      %v492 = vpack.c.b16 %v456, %v455
      %v493 = vpack.c.b16 %v458, %v457
      %v494 = vpack.c.b16 %v460, %v459
      %v495 = vpack.c.b16 %v462, %v461
      %v496 = vpack.c.b16 %v464, %v463
      %v497 = vpack.c.b16 %v466, %v465
      %v498 = vpack.c.b16 %v468, %v467
      %v499 = vpack.c.b16 %v470, %v469
      %v500 = vpack.c.b16 %v472, %v471
      %v501 = vpack.c.b16 %v474, %v473
      %vm529 = vcmask 392192
      %v531 = vsel %vm529, %v356, 0
      %v534 = vsel %vm529, %v360, 0
      %536 = vmatprep.subr.bf16.mxu0 0
      %537 = vmatpush1.bf16.msra.mxu0 %v475
      %538 = vmatprep.subr.bf16.mxu0 0
      %539 = vmatpush1.bf16.msra.mxu0 %v476
      %540 = vmatprep.subr.bf16.mxu0 0
      %541 = vmatpush1.bf16.msra.mxu0 %v477
      %542 = vmatprep.subr.bf16.mxu0 0
      %543 = vmatpush1.bf16.msra.mxu0 %v478
      %544 = vmatprep.subr.bf16.mxu0 0
      %545 = vmatpush1.bf16.msra.mxu0 %v479
      %546 = vmatprep.subr.bf16.mxu0 0
      %547 = vmatpush1.bf16.msra.mxu0 %v480
      %548 = vmatprep.subr.bf16.mxu0 0
      %549 = vmatpush1.bf16.msra.mxu0 %v481
      %550 = vmatprep.subr.bf16.mxu0 0
      %551 = vmatpush1.bf16.msra.mxu0 %v482
      %552 = vmatprep.subr.bf16.mxu0 0
      %553 = vmatpush1.bf16.msra.mxu0 %v483
      %554 = vmatprep.subr.bf16.mxu0 0
      %555 = vmatpush1.bf16.msra.mxu0 %v484
      %556 = vmatprep.subr.bf16.mxu0 0
      %557 = vmatpush1.bf16.msra.mxu0 %v485
      %558 = vmatprep.subr.bf16.mxu0 0
      %559 = vmatpush1.bf16.msra.mxu0 %v486
      %560 = vmatprep.subr.bf16.mxu0 0
      %561 = vmatpush1.bf16.msra.mxu0 %v487
      %562 = vmatprep.subr.bf16.mxu0 0
      %563 = vmatpush1.bf16.msra.mxu0 %v488
      %564 = vmatprep.subr.bf16.mxu0 0
      %565 = vmatpush1.bf16.msra.mxu0 %v489
      %566 = vmatprep.subr.bf16.mxu0 0
      %567 = vmatpush1.bf16.msra.mxu0 %v490
      %568 = vmatprep.mubr.bf16.mxu0 %v354
      %569 = vmatmul.mubr.bf16.gmra.mrb[0].mxu0 %v353
      %v570 = vpop.f32.mrb[0].mxu0
      %v571 = vadd.f32 %v312, %v570
      %v572 = vpop.f32.mrb[0].mxu0
      %v573 = vpop.f32.mrb[0].mxu0
      %v574 = vadd.f32 %v317, %v573
      %v575 = vpop.f32.mrb[0].mxu0
      %576 = vmatprep.mubr.bf16.mxu0 %v358
      %577 = vmatmul.mubr.bf16.gmra.mrb[0].mxu0 %v357
      %v578 = vpop.f32.mrb[0].mxu0
      %v579 = vadd.f32 %v322, %v578
      %v580 = vpop.f32.mrb[0].mxu0
      %v581 = vpop.f32.mrb[0].mxu0
      %v582 = vadd.f32 %v327, %v581
      %v583 = vpop.f32.mrb[0].mxu0
      %584 = vdwg.mxu0
      %585 = vmatprep.subr.bf16.mxu0 0
      %586 = vmatpush1.bf16.msra.mxu0 %v491
      %587 = vmatprep.subr.bf16.mxu0 0
      %588 = vmatpush1.bf16.msra.mxu0 %v492
      %589 = vmatprep.subr.bf16.mxu0 0
      %590 = vmatpush1.bf16.msra.mxu0 %v493
      %591 = vmatprep.subr.bf16.mxu0 0
      %592 = vmatpush1.bf16.msra.mxu0 %v494
      %593 = vmatprep.subr.bf16.mxu0 0
      %594 = vmatpush1.bf16.msra.mxu0 %v495
      %595 = vmatprep.subr.bf16.mxu0 0
      %596 = vmatpush1.bf16.msra.mxu0 %v496
      %597 = vmatprep.subr.bf16.mxu0 0
      %598 = vmatpush1.bf16.msra.mxu0 %v497
      %599 = vmatprep.subr.bf16.mxu0 0
      %600 = vmatpush1.bf16.msra.mxu0 %v498
      %601 = vmatprep.subr.bf16.mxu0 0
      %602 = vmatpush1.bf16.msra.mxu0 %v499
      %603 = vmatprep.subr.bf16.mxu0 0
      %604 = vmatpush1.bf16.msra.mxu0 %v500
      %605 = vmatprep.subr.bf16.mxu0 0
      %606 = vmatpush1.bf16.msra.mxu0 %v501
      %607 = vmatprep.subr.bf16.mxu0 0
      %608 = vmatpush1.bf16.msra.mxu0 0
      %609 = vmatprep.subr.bf16.mxu0 0
      %610 = vmatpush1.bf16.msra.mxu0 0
      %611 = vmatprep.subr.bf16.mxu0 0
      %612 = vmatpush1.bf16.msra.mxu0 0
      %613 = vmatprep.subr.bf16.mxu0 0
      %614 = vmatpush1.bf16.msra.mxu0 0
      %615 = vmatprep.subr.bf16.mxu0 0
      %616 = vmatpush1.bf16.msra.mxu0 0
      %617 = vmatprep.mubr.bf16.mxu0 %v531
      %618 = vmatmul.mubr.bf16.gmra.mrb[0].mxu0 %v355
      %v619 = vpop.f32.mrb[0].mxu0
      %v620 = vadd.f32 %v571, %v619
      %v621 = vpop.f32.mrb[0].mxu0
      %v622 = vpop.f32.mrb[0].mxu0
      %v623 = vadd.f32 %v574, %v622
      %v624 = vpop.f32.mrb[0].mxu0
      %625 = vmatprep.mubr.bf16.mxu0 %v534
      %626 = vmatmul.mubr.bf16.gmra.mrb[0].mxu0 %v359
      %v627 = vpop.f32.mrb[0].mxu0
      %v628 = vadd.f32 %v579, %v627
      %v629 = vpop.f32.mrb[0].mxu0
      %v630 = vpop.f32.mrb[0].mxu0
      %v631 = vadd.f32 %v582, %v630
      %v632 = vpop.f32.mrb[0].mxu0
      %633 = vdwg.mxu0
      %v634 = vmax.f32 %v620, 0.0
      %v635 = vmax.f32 %v623, 0.0
      %v636 = vmax.f32 %v628, 0.0
      %v637 = vmax.f32 %v631, 0.0
      %vm638 = vcmask 523264
      %639 = vst.msk [vmem:[%s241] sm:$0xff] %vm638, %v634
      %640 = vst.msk [vmem:[%s241 + $0x8] sm:$0xff] %vm638, %v635
      %641 = vst.msk [vmem:[%s241 + $0x10] sm:$0xff] %vm638, %v636
      %642 = vst.msk [vmem:[%s241 + $0x18] sm:$0xff] %vm638, %v637
      %p643 = scmp.lt.s32.totalorder %s18, 1
      %s644 = scalar_select %p643, %s18, 1
      %p645 = scmp.lt.s32.totalorder %s19, 0
      %s646 = scalar_select %p645, %s19, 0
      %s647 = smul.addr %s644, 4
      %s648 = sadd.s32 %s646, %s647
      %s649 = smul.addr %s648, 8
      %s650 = scalar_lea.vmem %s3, %s649
      // Predicated region
      $region33: #{image_regressor.6} parent=31 // pred_check
        %p651 = pneg %p126
      $region34: #{image_regressor.6} parent=31 // pred_check_branch
        %653 = sbr.rel (%p651) target = $region36
      $region35: #{image_regressor.6} parent=31 // pred_region
        _
      $region36: #{image_regressor.6} parent=31 // pred_fallthru
        _
    $region32: #{image_regressor.6} parent=5 // pred_fallthru
      _
    %p654 = scmp.le.s32.totalorder 2, %s9
    // Predicated region
    $region37: #{image_regressor.6} parent=5 // pred_check
      %p655 = pneg %p654
    $region38: #{image_regressor.6} parent=5 // pred_check_branch
      %657 = sbr.rel (%p655) target = $region40
    $region39: #{image_regressor.6} parent=5 // pred_region
      %s658 = ssub.s32 %s9, 2
      // Predicated region
      $region41: #{image_regressor.6} parent=39 // pred_check
        %p659 = pneg %p132
      $region42: #{image_regressor.6} parent=39 // pred_check_branch
        %661 = sbr.rel (%p659) target = $region44
      $region43: #{image_regressor.6} parent=39 // pred_region
        %p662 = scmp.lt.s32.totalorder %s20, 1
        %s663 = scalar_select %p662, %s20, 1
        %p664 = scmp.lt.s32.totalorder %s21, 0
        %s665 = scalar_select %p664, %s21, 0
        %s666 = smul.addr %s663, 4
        %s667 = sadd.s32 %s665, %s666
        %s668 = smul.addr %s667, 8
        %s669 = scalar_lea.vmem %s3, %s668
      $region44: #{image_regressor.6} parent=39 // pred_fallthru
        _
    $region40: #{image_regressor.6} parent=5 // pred_fallthru
      _
  $region6: #{image_regressor.6} parent=0 // loop_footer
    %s13 = sadd.s32 1, %s9
  $region7: #{image_regressor.6} parent=0 // loop_footer_branch
    %8 = sbr.rel target = $region3
  $region8: #{image_regressor.6} parent=0 // loop_exit
    _

// kernel: squeeze.3
$region0: #{squeeze.3}
  %s0 = inlined_call_operand.vmem [shape: f32[1,2,32,1,2,2], index: 0, kind: input, shape index: {}]
  %s1 = inlined_call_operand.vmem [shape: f32[2,128], index: 1, kind: output, shape index: {}]
  $region1: #{squeeze.3} parent=0
    #allocation0 [shape = 'u8[4096]{0}', space=vmem, size = 0x1000, scoped, tag = 'scoped mem for output reshape']
    #allocation1 [shape = 'u8[262144]{0}', space=vmem, size = 0x40000, scoped, tag = 'scoped mem for input reshape']
    %s3 = sshllo.u32 0, 2
    %s4 = smul.addr 2, 63
    %s5 = scalar_lea.vmem %s0, %s4
    %v6 = vld [vmem:[%s5] sm:%s3]
    %s7 = scalar_lea.vmem [#allocation1], 504
    %8 = vst [vmem:[%s7] sm:%s3] %v6
    %s9 = smul.addr 2, 62
    %s10 = scalar_lea.vmem %s0, %s9
    %v11 = vld [vmem:[%s10] sm:%s3]
    %s12 = scalar_lea.vmem [#allocation1], 496
    %13 = vst [vmem:[%s12] sm:%s3] %v11
    %s14 = smul.addr 2, 61
    %s15 = scalar_lea.vmem %s0, %s14
    %v16 = vld [vmem:[%s15] sm:%s3]
    %s17 = scalar_lea.vmem [#allocation1], 488
    %18 = vst [vmem:[%s17] sm:%s3] %v16
    %s19 = smul.addr 2, 60
    %s20 = scalar_lea.vmem %s0, %s19
    %v21 = vld [vmem:[%s20] sm:%s3]
    %s22 = scalar_lea.vmem [#allocation1], 480
    %23 = vst [vmem:[%s22] sm:%s3] %v21
    %s24 = smul.addr 2, 59
    %s25 = scalar_lea.vmem %s0, %s24
    %v26 = vld [vmem:[%s25] sm:%s3]
    %s27 = scalar_lea.vmem [#allocation1], 472
    %28 = vst [vmem:[%s27] sm:%s3] %v26
    %s29 = smul.addr 2, 58
    %s30 = scalar_lea.vmem %s0, %s29
    %v31 = vld [vmem:[%s30] sm:%s3]
    %s32 = scalar_lea.vmem [#allocation1], 464
    %33 = vst [vmem:[%s32] sm:%s3] %v31
    %s34 = smul.addr 2, 57
    %s35 = scalar_lea.vmem %s0, %s34
    %v36 = vld [vmem:[%s35] sm:%s3]
    %s37 = scalar_lea.vmem [#allocation1], 456
    %38 = vst [vmem:[%s37] sm:%s3] %v36
    %s39 = smul.addr 2, 56
    %s40 = scalar_lea.vmem %s0, %s39
    %v41 = vld [vmem:[%s40] sm:%s3]
    %s42 = scalar_lea.vmem [#allocation1], 448
    %43 = vst [vmem:[%s42] sm:%s3] %v41
    %s44 = smul.addr 2, 55
    %s45 = scalar_lea.vmem %s0, %s44
    %v46 = vld [vmem:[%s45] sm:%s3]
    %s47 = scalar_lea.vmem [#allocation1], 440
    %48 = vst [vmem:[%s47] sm:%s3] %v46
    %s49 = smul.addr 2, 54
    %s50 = scalar_lea.vmem %s0, %s49
    %v51 = vld [vmem:[%s50] sm:%s3]
    %s52 = scalar_lea.vmem [#allocation1], 432
    %53 = vst [vmem:[%s52] sm:%s3] %v51
    %s54 = smul.addr 2, 53
    %s55 = scalar_lea.vmem %s0, %s54
    %v56 = vld [vmem:[%s55] sm:%s3]
    %s57 = scalar_lea.vmem [#allocation1], 424
    %58 = vst [vmem:[%s57] sm:%s3] %v56
    %s59 = smul.addr 2, 52
    %s60 = scalar_lea.vmem %s0, %s59
    %v61 = vld [vmem:[%s60] sm:%s3]
    %s62 = scalar_lea.vmem [#allocation1], 416
    %63 = vst [vmem:[%s62] sm:%s3] %v61
    %s64 = smul.addr 2, 51
    %s65 = scalar_lea.vmem %s0, %s64
    %v66 = vld [vmem:[%s65] sm:%s3]
    %s67 = scalar_lea.vmem [#allocation1], 408
    %68 = vst [vmem:[%s67] sm:%s3] %v66
    %s69 = smul.addr 2, 50
    %s70 = scalar_lea.vmem %s0, %s69
    %v71 = vld [vmem:[%s70] sm:%s3]
    %s72 = scalar_lea.vmem [#allocation1], 400
    %73 = vst [vmem:[%s72] sm:%s3] %v71
    %s74 = smul.addr 2, 49
    %s75 = scalar_lea.vmem %s0, %s74
    %v76 = vld [vmem:[%s75] sm:%s3]
    %s77 = scalar_lea.vmem [#allocation1], 392
    %78 = vst [vmem:[%s77] sm:%s3] %v76
    %s79 = smul.addr 2, 48
    %s80 = scalar_lea.vmem %s0, %s79
    %v81 = vld [vmem:[%s80] sm:%s3]
    %s82 = scalar_lea.vmem [#allocation1], 384
    %83 = vst [vmem:[%s82] sm:%s3] %v81
    %s84 = smul.addr 2, 47
    %s85 = scalar_lea.vmem %s0, %s84
    %v86 = vld [vmem:[%s85] sm:%s3]
    %s87 = scalar_lea.vmem [#allocation1], 376
    %88 = vst [vmem:[%s87] sm:%s3] %v86
    %s89 = smul.addr 2, 46
    %s90 = scalar_lea.vmem %s0, %s89
    %v91 = vld [vmem:[%s90] sm:%s3]
    %s92 = scalar_lea.vmem [#allocation1], 368
    %93 = vst [vmem:[%s92] sm:%s3] %v91
    %s94 = smul.addr 2, 45
    %s95 = scalar_lea.vmem %s0, %s94
    %v96 = vld [vmem:[%s95] sm:%s3]
    %s97 = scalar_lea.vmem [#allocation1], 360
    %98 = vst [vmem:[%s97] sm:%s3] %v96
    %s99 = smul.addr 2, 44
    %s100 = scalar_lea.vmem %s0, %s99
    %v101 = vld [vmem:[%s100] sm:%s3]
    %s102 = scalar_lea.vmem [#allocation1], 352
    %103 = vst [vmem:[%s102] sm:%s3] %v101
    %s104 = smul.addr 2, 43
    %s105 = scalar_lea.vmem %s0, %s104
    %v106 = vld [vmem:[%s105] sm:%s3]
    %s107 = scalar_lea.vmem [#allocation1], 344
    %108 = vst [vmem:[%s107] sm:%s3] %v106
    %s109 = smul.addr 2, 42
    %s110 = scalar_lea.vmem %s0, %s109
    %v111 = vld [vmem:[%s110] sm:%s3]
    %s112 = scalar_lea.vmem [#allocation1], 336
    %113 = vst [vmem:[%s112] sm:%s3] %v111
    %s114 = smul.addr 2, 41
    %s115 = scalar_lea.vmem %s0, %s114
    %v116 = vld [vmem:[%s115] sm:%s3]
    %s117 = scalar_lea.vmem [#allocation1], 328
    %118 = vst [vmem:[%s117] sm:%s3] %v116
    %s119 = smul.addr 2, 40
    %s120 = scalar_lea.vmem %s0, %s119
    %v121 = vld [vmem:[%s120] sm:%s3]
    %s122 = scalar_lea.vmem [#allocation1], 320
    %123 = vst [vmem:[%s122] sm:%s3] %v121
    %s124 = smul.addr 2, 39
    %s125 = scalar_lea.vmem %s0, %s124
    %v126 = vld [vmem:[%s125] sm:%s3]
    %s127 = scalar_lea.vmem [#allocation1], 312
    %128 = vst [vmem:[%s127] sm:%s3] %v126
    %s129 = smul.addr 2, 38
    %s130 = scalar_lea.vmem %s0, %s129
    %v131 = vld [vmem:[%s130] sm:%s3]
    %s132 = scalar_lea.vmem [#allocation1], 304
    %133 = vst [vmem:[%s132] sm:%s3] %v131
    %s134 = smul.addr 2, 37
    %s135 = scalar_lea.vmem %s0, %s134
    %v136 = vld [vmem:[%s135] sm:%s3]
    %s137 = scalar_lea.vmem [#allocation1], 296
    %138 = vst [vmem:[%s137] sm:%s3] %v136
    %s139 = smul.addr 2, 36
    %s140 = scalar_lea.vmem %s0, %s139
    %v141 = vld [vmem:[%s140] sm:%s3]
    %s142 = scalar_lea.vmem [#allocation1], 288
    %143 = vst [vmem:[%s142] sm:%s3] %v141
    %s144 = smul.addr 2, 35
    %s145 = scalar_lea.vmem %s0, %s144
    %v146 = vld [vmem:[%s145] sm:%s3]
    %s147 = scalar_lea.vmem [#allocation1], 280
    %148 = vst [vmem:[%s147] sm:%s3] %v146
    %s149 = smul.addr 2, 34
    %s150 = scalar_lea.vmem %s0, %s149
    %v151 = vld [vmem:[%s150] sm:%s3]
    %s152 = scalar_lea.vmem [#allocation1], 272
    %153 = vst [vmem:[%s152] sm:%s3] %v151
    %s154 = smul.addr 2, 33
    %s155 = scalar_lea.vmem %s0, %s154
    %v156 = vld [vmem:[%s155] sm:%s3]
    %s157 = scalar_lea.vmem [#allocation1], 264
    %158 = vst [vmem:[%s157] sm:%s3] %v156
    %s159 = smul.addr 2, 32
    %s160 = scalar_lea.vmem %s0, %s159
    %v161 = vld [vmem:[%s160] sm:%s3]
    %s162 = scalar_lea.vmem [#allocation1], 256
    %163 = vst [vmem:[%s162] sm:%s3] %v161
    %s164 = smul.addr 2, 31
    %s165 = scalar_lea.vmem %s0, %s164
    %v166 = vld [vmem:[%s165] sm:%s3]
    %s167 = scalar_lea.vmem [#allocation1], 248
    %168 = vst [vmem:[%s167] sm:%s3] %v166
    %s169 = smul.addr 2, 30
    %s170 = scalar_lea.vmem %s0, %s169
    %v171 = vld [vmem:[%s170] sm:%s3]
    %s172 = scalar_lea.vmem [#allocation1], 240
    %173 = vst [vmem:[%s172] sm:%s3] %v171
    %s174 = smul.addr 2, 29
    %s175 = scalar_lea.vmem %s0, %s174
    %v176 = vld [vmem:[%s175] sm:%s3]
    %s177 = scalar_lea.vmem [#allocation1], 232
    %178 = vst [vmem:[%s177] sm:%s3] %v176
    %s179 = smul.addr 2, 28
    %s180 = scalar_lea.vmem %s0, %s179
    %v181 = vld [vmem:[%s180] sm:%s3]
    %s182 = scalar_lea.vmem [#allocation1], 224
    %183 = vst [vmem:[%s182] sm:%s3] %v181
    %s184 = smul.addr 2, 27
    %s185 = scalar_lea.vmem %s0, %s184
    %v186 = vld [vmem:[%s185] sm:%s3]
    %s187 = scalar_lea.vmem [#allocation1], 216
    %188 = vst [vmem:[%s187] sm:%s3] %v186
    %s189 = smul.addr 2, 26
    %s190 = scalar_lea.vmem %s0, %s189
    %v191 = vld [vmem:[%s190] sm:%s3]
    %s192 = scalar_lea.vmem [#allocation1], 208
    %193 = vst [vmem:[%s192] sm:%s3] %v191
    %s194 = smul.addr 2, 25
    %s195 = scalar_lea.vmem %s0, %s194
    %v196 = vld [vmem:[%s195] sm:%s3]
    %s197 = scalar_lea.vmem [#allocation1], 200
    %198 = vst [vmem:[%s197] sm:%s3] %v196
    %s199 = smul.addr 2, 24
    %s200 = scalar_lea.vmem %s0, %s199
    %v201 = vld [vmem:[%s200] sm:%s3]
    %s202 = scalar_lea.vmem [#allocation1], 192
    %203 = vst [vmem:[%s202] sm:%s3] %v201
    %s204 = smul.addr 2, 23
    %s205 = scalar_lea.vmem %s0, %s204
    %v206 = vld [vmem:[%s205] sm:%s3]
    %s207 = scalar_lea.vmem [#allocation1], 184
    %208 = vst [vmem:[%s207] sm:%s3] %v206
    %s209 = smul.addr 2, 22
    %s210 = scalar_lea.vmem %s0, %s209
    %v211 = vld [vmem:[%s210] sm:%s3]
    %s212 = scalar_lea.vmem [#allocation1], 176
    %213 = vst [vmem:[%s212] sm:%s3] %v211
    %s214 = smul.addr 2, 21
    %s215 = scalar_lea.vmem %s0, %s214
    %v216 = vld [vmem:[%s215] sm:%s3]
    %s217 = scalar_lea.vmem [#allocation1], 168
    %218 = vst [vmem:[%s217] sm:%s3] %v216
    %s219 = smul.addr 2, 20
    %s220 = scalar_lea.vmem %s0, %s219
    %v221 = vld [vmem:[%s220] sm:%s3]
    %s222 = scalar_lea.vmem [#allocation1], 160
    %223 = vst [vmem:[%s222] sm:%s3] %v221
    %s224 = smul.addr 2, 19
    %s225 = scalar_lea.vmem %s0, %s224
    %v226 = vld [vmem:[%s225] sm:%s3]
    %s227 = scalar_lea.vmem [#allocation1], 152
    %228 = vst [vmem:[%s227] sm:%s3] %v226
    %s229 = smul.addr 2, 18
    %s230 = scalar_lea.vmem %s0, %s229
    %v231 = vld [vmem:[%s230] sm:%s3]
    %s232 = scalar_lea.vmem [#allocation1], 144
    %233 = vst [vmem:[%s232] sm:%s3] %v231
    %s234 = smul.addr 2, 17
    %s235 = scalar_lea.vmem %s0, %s234
    %v236 = vld [vmem:[%s235] sm:%s3]
    %s237 = scalar_lea.vmem [#allocation1], 136
    %238 = vst [vmem:[%s237] sm:%s3] %v236
    %s239 = smul.addr 2, 16
    %s240 = scalar_lea.vmem %s0, %s239
    %v241 = vld [vmem:[%s240] sm:%s3]
    %s242 = scalar_lea.vmem [#allocation1], 128
    %243 = vst [vmem:[%s242] sm:%s3] %v241
    %s244 = smul.addr 2, 15
    %s245 = scalar_lea.vmem %s0, %s244
    %v246 = vld [vmem:[%s245] sm:%s3]
    %s247 = scalar_lea.vmem [#allocation1], 120
    %248 = vst [vmem:[%s247] sm:%s3] %v246
    %s249 = smul.addr 2, 14
    %s250 = scalar_lea.vmem %s0, %s249
    %v251 = vld [vmem:[%s250] sm:%s3]
    %s252 = scalar_lea.vmem [#allocation1], 112
    %253 = vst [vmem:[%s252] sm:%s3] %v251
    %s254 = smul.addr 2, 13
    %s255 = scalar_lea.vmem %s0, %s254
    %v256 = vld [vmem:[%s255] sm:%s3]
    %s257 = scalar_lea.vmem [#allocation1], 104
    %258 = vst [vmem:[%s257] sm:%s3] %v256
    %s259 = smul.addr 2, 12
    %s260 = scalar_lea.vmem %s0, %s259
    %v261 = vld [vmem:[%s260] sm:%s3]
    %s262 = scalar_lea.vmem [#allocation1], 96
    %263 = vst [vmem:[%s262] sm:%s3] %v261
    %s264 = smul.addr 2, 11
    %s265 = scalar_lea.vmem %s0, %s264
    %v266 = vld [vmem:[%s265] sm:%s3]
    %s267 = scalar_lea.vmem [#allocation1], 88
    %268 = vst [vmem:[%s267] sm:%s3] %v266
    %s269 = smul.addr 2, 10
    %s270 = scalar_lea.vmem %s0, %s269
    %v271 = vld [vmem:[%s270] sm:%s3]
    %s272 = scalar_lea.vmem [#allocation1], 80
    %273 = vst [vmem:[%s272] sm:%s3] %v271
    %s274 = smul.addr 2, 9
    %s275 = scalar_lea.vmem %s0, %s274
    %v276 = vld [vmem:[%s275] sm:%s3]
    %s277 = scalar_lea.vmem [#allocation1], 72
    %278 = vst [vmem:[%s277] sm:%s3] %v276
    %s279 = smul.addr 2, 8
    %s280 = scalar_lea.vmem %s0, %s279
    %v281 = vld [vmem:[%s280] sm:%s3]
    %s282 = scalar_lea.vmem [#allocation1], 64
    %283 = vst [vmem:[%s282] sm:%s3] %v281
    %s284 = smul.addr 2, 7
    %s285 = scalar_lea.vmem %s0, %s284
    %v286 = vld [vmem:[%s285] sm:%s3]
    %s287 = scalar_lea.vmem [#allocation1], 56
    %288 = vst [vmem:[%s287] sm:%s3] %v286
    %s289 = smul.addr 2, 6
    %s290 = scalar_lea.vmem %s0, %s289
    %v291 = vld [vmem:[%s290] sm:%s3]
    %s292 = scalar_lea.vmem [#allocation1], 48
    %293 = vst [vmem:[%s292] sm:%s3] %v291
    %s294 = smul.addr 2, 5
    %s295 = scalar_lea.vmem %s0, %s294
    %v296 = vld [vmem:[%s295] sm:%s3]
    %s297 = scalar_lea.vmem [#allocation1], 40
    %298 = vst [vmem:[%s297] sm:%s3] %v296
    %s299 = smul.addr 2, 4
    %s300 = scalar_lea.vmem %s0, %s299
    %v301 = vld [vmem:[%s300] sm:%s3]
    %s302 = scalar_lea.vmem [#allocation1], 32
    %303 = vst [vmem:[%s302] sm:%s3] %v301
    %s304 = smul.addr 2, 3
    %s305 = scalar_lea.vmem %s0, %s304
    %v306 = vld [vmem:[%s305] sm:%s3]
    %s307 = scalar_lea.vmem [#allocation1], 24
    %308 = vst [vmem:[%s307] sm:%s3] %v306
    %s309 = smul.addr 2, 2
    %s310 = scalar_lea.vmem %s0, %s309
    %v311 = vld [vmem:[%s310] sm:%s3]
    %s312 = scalar_lea.vmem [#allocation1], 16
    %313 = vst [vmem:[%s312] sm:%s3] %v311
    %s314 = scalar_lea.vmem %s0, 2
    %v315 = vld [vmem:[%s314] sm:%s3]
    %s316 = scalar_lea.vmem [#allocation1], 8
    %317 = vst [vmem:[%s316] sm:%s3] %v315
    %v318 = vld [vmem:[%s0] sm:%s3]
    %319 = vst [vmem:[#allocation1] sm:%s3] %v318
    %v320 = vld [vmem:[#allocation1] sm:$0x1]
    %s321 = scalar_lea.vmem [#allocation1], 255
    %v322 = vld [vmem:[%s321] sm:$0x2]
    %vm323 = vcmask 1041409
    %v324 = vsel %vm323, %v322, %v320
    %vm325 = vcmask 15360
    %326 = vst.msk [vmem:[#allocation0] sm:$0x3] %vm325, %v324
    %s327 = scalar_lea.vmem [#allocation1], 249
    %v328 = vld [vmem:[%s327] sm:$0x1]
    %s329 = scalar_lea.vmem [#allocation1], 504
    %v330 = vld [vmem:[%s329] sm:$0x2]
    %vm331 = vcmask 1041409
    %v332 = vsel %vm331, %v330, %v328
    %333 = vrot.lane.b32.xlu0 %v332, 126
    %v334 = vpop.permute.xlu0 %333
    %vm335 = vcmask 1048560
    %336 = vst.msk [vmem:[#allocation0] sm:$0x3] %vm335, %v334
    %s337 = scalar_lea.vmem [#allocation1], 248
    %v338 = vld [vmem:[%s337] sm:$0x1]
    %s339 = scalar_lea.vmem [#allocation1], 503
    %v340 = vld [vmem:[%s339] sm:$0x2]
    %vm341 = vcmask 1041409
    %v342 = vsel %vm341, %v340, %v338
    %343 = vrot.lane.b32.xlu0 %v342, 124
    %v344 = vpop.permute.xlu0 %343
    %vm345 = vcmask 1032160
    %346 = vst.msk [vmem:[#allocation0] sm:$0x3] %vm345, %v344
    %s347 = scalar_lea.vmem [#allocation1], 241
    %v348 = vld [vmem:[%s347] sm:$0x1]
    %s349 = scalar_lea.vmem [#allocation1], 496
    %v350 = vld [vmem:[%s349] sm:$0x2]
    %vm351 = vcmask 1041409
    %v352 = vsel %vm351, %v350, %v348
    %353 = vrot.lane.b32.xlu0 %v352, 122
    %v354 = vpop.permute.xlu0 %353
    %vm355 = vcmask 1015760
    %356 = vst.msk [vmem:[#allocation0] sm:$0x3] %vm355, %v354
    %s357 = scalar_lea.vmem [#allocation1], 240
    %v358 = vld [vmem:[%s357] sm:$0x1]
    %s359 = scalar_lea.vmem [#allocation1], 495
    %v360 = vld [vmem:[%s359] sm:$0x2]
    %vm361 = vcmask 1041409
    %v362 = vsel %vm361, %v360, %v358
    %363 = vrot.lane.b32.xlu0 %v362, 120
    %v364 = vpop.permute.xlu0 %363
    %vm365 = vcmask 999360
    %366 = vst.msk [vmem:[#allocation0] sm:$0x3] %vm365, %v364
    %s367 = scalar_lea.vmem [#allocation1], 233
    %v368 = vld [vmem:[%s367] sm:$0x1]
    %s369 = scalar_lea.vmem [#allocation1], 488
    %v370 = vld [vmem:[%s369] sm:$0x2]
    %vm371 = vcmask 1041409
    %v372 = vsel %vm371, %v370, %v368
    %373 = vrot.lane.b32.xlu0 %v372, 118
    %v374 = vpop.permute.xlu0 %373
    %vm375 = vcmask 982960
    %376 = vst.msk [vmem:[#allocation0] sm:$0x3] %vm375, %v374
    %s377 = scalar_lea.vmem [#allocation1], 232
    %v378 = vld [vmem:[%s377] sm:$0x1]
    %s379 = scalar_lea.vmem [#allocation1], 487
    %v380 = vld [vmem:[%s379] sm:$0x2]
    %vm381 = vcmask 1041409
    %v382 = vsel %vm381, %v380, %v378
    %383 = vrot.lane.b32.xlu0 %v382, 116
    %v384 = vpop.permute.xlu0 %383
    %vm385 = vcmask 966560
    %386 = vst.msk [vmem:[#allocation0] sm:$0x3] %vm385, %v384
    %s387 = scalar_lea.vmem [#allocation1], 225
    %v388 = vld [vmem:[%s387] sm:$0x1]
    %s389 = scalar_lea.vmem [#allocation1], 480
    %v390 = vld [vmem:[%s389] sm:$0x2]
    %vm391 = vcmask 1041409
    %v392 = vsel %vm391, %v390, %v388
    %393 = vrot.lane.b32.xlu0 %v392, 114
    %v394 = vpop.permute.xlu0 %393
    %vm395 = vcmask 950160
    %396 = vst.msk [vmem:[#allocation0] sm:$0x3] %vm395, %v394
    %s397 = scalar_lea.vmem [#allocation1], 224
    %v398 = vld [vmem:[%s397] sm:$0x1]
    %s399 = scalar_lea.vmem [#allocation1], 479
    %v400 = vld [vmem:[%s399] sm:$0x2]
    %vm401 = vcmask 1041409
    %v402 = vsel %vm401, %v400, %v398
    %403 = vrot.lane.b32.xlu0 %v402, 112
    %v404 = vpop.permute.xlu0 %403
    %vm405 = vcmask 933760
    %406 = vst.msk [vmem:[#allocation0] sm:$0x3] %vm405, %v404
    %s407 = scalar_lea.vmem [#allocation1], 217
    %v408 = vld [vmem:[%s407] sm:$0x1]
    %s409 = scalar_lea.vmem [#allocation1], 472
    %v410 = vld [vmem:[%s409] sm:$0x2]
    %vm411 = vcmask 1041409
    %v412 = vsel %vm411, %v410, %v408
    %413 = vrot.lane.b32.xlu0 %v412, 110
    %v414 = vpop.permute.xlu0 %413
    %vm415 = vcmask 917360
    %416 = vst.msk [vmem:[#allocation0] sm:$0x3] %vm415, %v414
    %s417 = scalar_lea.vmem [#allocation1], 216
    %v418 = vld [vmem:[%s417] sm:$0x1]
    %s419 = scalar_lea.vmem [#allocation1], 471
    %v420 = vld [vmem:[%s419] sm:$0x2]
    %vm421 = vcmask 1041409
    %v422 = vsel %vm421, %v420, %v418
    %423 = vrot.lane.b32.xlu0 %v422, 108
    %v424 = vpop.permute.xlu0 %423
    %vm425 = vcmask 900960
    %426 = vst.msk [vmem:[#allocation0] sm:$0x3] %vm425, %v424
    %s427 = scalar_lea.vmem [#allocation1], 209
    %v428 = vld [vmem:[%s427] sm:$0x1]
    %s429 = scalar_lea.vmem [#allocation1], 464
    %v430 = vld [vmem:[%s429] sm:$0x2]
    %vm431 = vcmask 1041409
    %v432 = vsel %vm431, %v430, %v428
    %433 = vrot.lane.b32.xlu0 %v432, 106
    %v434 = vpop.permute.xlu0 %433
    %vm435 = vcmask 884560
    %436 = vst.msk [vmem:[#allocation0] sm:$0x3] %vm435, %v434
    %s437 = scalar_lea.vmem [#allocation1], 208
    %v438 = vld [vmem:[%s437] sm:$0x1]
    %s439 = scalar_lea.vmem [#allocation1], 463
    %v440 = vld [vmem:[%s439] sm:$0x2]
    %vm441 = vcmask 1041409
    %v442 = vsel %vm441, %v440, %v438
    %443 = vrot.lane.b32.xlu0 %v442, 104
    %v444 = vpop.permute.xlu0 %443
    %vm445 = vcmask 868160
    %446 = vst.msk [vmem:[#allocation0] sm:$0x3] %vm445, %v444
    %s447 = scalar_lea.vmem [#allocation1], 201
    %v448 = vld [vmem:[%s447] sm:$0x1]
    %s449 = scalar_lea.vmem [#allocation1], 456
    %v450 = vld [vmem:[%s449] sm:$0x2]
    %vm451 = vcmask 1041409
    %v452 = vsel %vm451, %v450, %v448
    %453 = vrot.lane.b32.xlu0 %v452, 102
    %v454 = vpop.permute.xlu0 %453
    %vm455 = vcmask 851760
    %456 = vst.msk [vmem:[#allocation0] sm:$0x3] %vm455, %v454
    %s457 = scalar_lea.vmem [#allocation1], 200
    %v458 = vld [vmem:[%s457] sm:$0x1]
    %s459 = scalar_lea.vmem [#allocation1], 455
    %v460 = vld [vmem:[%s459] sm:$0x2]
    %vm461 = vcmask 1041409
    %v462 = vsel %vm461, %v460, %v458
    %463 = vrot.lane.b32.xlu0 %v462, 100
    %v464 = vpop.permute.xlu0 %463
    %vm465 = vcmask 835360
    %466 = vst.msk [vmem:[#allocation0] sm:$0x3] %vm465, %v464
    %s467 = scalar_lea.vmem [#allocation1], 193
    %v468 = vld [vmem:[%s467] sm:$0x1]
    %s469 = scalar_lea.vmem [#allocation1], 448
    %v470 = vld [vmem:[%s469] sm:$0x2]
    %vm471 = vcmask 1041409
    %v472 = vsel %vm471, %v470, %v468
    %473 = vrot.lane.b32.xlu0 %v472, 98
    %v474 = vpop.permute.xlu0 %473
    %vm475 = vcmask 818960
    %476 = vst.msk [vmem:[#allocation0] sm:$0x3] %vm475, %v474
    %s477 = scalar_lea.vmem [#allocation1], 192
    %v478 = vld [vmem:[%s477] sm:$0x1]
    %s479 = scalar_lea.vmem [#allocation1], 447
    %v480 = vld [vmem:[%s479] sm:$0x2]
    %vm481 = vcmask 1041409
    %v482 = vsel %vm481, %v480, %v478
    %483 = vrot.lane.b32.xlu0 %v482, 96
    %v484 = vpop.permute.xlu0 %483
    %vm485 = vcmask 802560
    %486 = vst.msk [vmem:[#allocation0] sm:$0x3] %vm485, %v484
    %s487 = scalar_lea.vmem [#allocation1], 185
    %v488 = vld [vmem:[%s487] sm:$0x1]
    %s489 = scalar_lea.vmem [#allocation1], 440
    %v490 = vld [vmem:[%s489] sm:$0x2]
    %vm491 = vcmask 1041409
    %v492 = vsel %vm491, %v490, %v488
    %493 = vrot.lane.b32.xlu0 %v492, 94
    %v494 = vpop.permute.xlu0 %493
    %vm495 = vcmask 786160
    %496 = vst.msk [vmem:[#allocation0] sm:$0x3] %vm495, %v494
    %s497 = scalar_lea.vmem [#allocation1], 184
    %v498 = vld [vmem:[%s497] sm:$0x1]
    %s499 = scalar_lea.vmem [#allocation1], 439
    %v500 = vld [vmem:[%s499] sm:$0x2]
    %vm501 = vcmask 1041409
    %v502 = vsel %vm501, %v500, %v498
    %503 = vrot.lane.b32.xlu0 %v502, 92
    %v504 = vpop.permute.xlu0 %503
    %vm505 = vcmask 769760
    %506 = vst.msk [vmem:[#allocation0] sm:$0x3] %vm505, %v504
    %s507 = scalar_lea.vmem [#allocation1], 177
    %v508 = vld [vmem:[%s507] sm:$0x1]
    %s509 = scalar_lea.vmem [#allocation1], 432
    %v510 = vld [vmem:[%s509] sm:$0x2]
    %vm511 = vcmask 1041409
    %v512 = vsel %vm511, %v510, %v508
    %513 = vrot.lane.b32.xlu0 %v512, 90
    %v514 = vpop.permute.xlu0 %513
    %vm515 = vcmask 753360
    %516 = vst.msk [vmem:[#allocation0] sm:$0x3] %vm515, %v514
    %s517 = scalar_lea.vmem [#allocation1], 176
    %v518 = vld [vmem:[%s517] sm:$0x1]
    %s519 = scalar_lea.vmem [#allocation1], 431
    %v520 = vld [vmem:[%s519] sm:$0x2]
    %vm521 = vcmask 1041409
    %v522 = vsel %vm521, %v520, %v518
    %523 = vrot.lane.b32.xlu0 %v522, 88
    %v524 = vpop.permute.xlu0 %523
    %vm525 = vcmask 736960
    %526 = vst.msk [vmem:[#allocation0] sm:$0x3] %vm525, %v524
    %s527 = scalar_lea.vmem [#allocation1], 169
    %v528 = vld [vmem:[%s527] sm:$0x1]
    %s529 = scalar_lea.vmem [#allocation1], 424
    %v530 = vld [vmem:[%s529] sm:$0x2]
    %vm531 = vcmask 1041409
    %v532 = vsel %vm531, %v530, %v528
    %533 = vrot.lane.b32.xlu0 %v532, 86
    %v534 = vpop.permute.xlu0 %533
    %vm535 = vcmask 720560
    %536 = vst.msk [vmem:[#allocation0] sm:$0x3] %vm535, %v534
    %s537 = scalar_lea.vmem [#allocation1], 168
    %v538 = vld [vmem:[%s537] sm:$0x1]
    %s539 = scalar_lea.vmem [#allocation1], 423
    %v540 = vld [vmem:[%s539] sm:$0x2]
    %vm541 = vcmask 1041409
    %v542 = vsel %vm541, %v540, %v538
    %543 = vrot.lane.b32.xlu0 %v542, 84
    %v544 = vpop.permute.xlu0 %543
    %vm545 = vcmask 704160
    %546 = vst.msk [vmem:[#allocation0] sm:$0x3] %vm545, %v544
    %s547 = scalar_lea.vmem [#allocation1], 161
    %v548 = vld [vmem:[%s547] sm:$0x1]
    %s549 = scalar_lea.vmem [#allocation1], 416
    %v550 = vld [vmem:[%s549] sm:$0x2]
    %vm551 = vcmask 1041409
    %v552 = vsel %vm551, %v550, %v548
    %553 = vrot.lane.b32.xlu0 %v552, 82
    %v554 = vpop.permute.xlu0 %553
    %vm555 = vcmask 687760
    %556 = vst.msk [vmem:[#allocation0] sm:$0x3] %vm555, %v554
    %s557 = scalar_lea.vmem [#allocation1], 160
    %v558 = vld [vmem:[%s557] sm:$0x1]
    %s559 = scalar_lea.vmem [#allocation1], 415
    %v560 = vld [vmem:[%s559] sm:$0x2]
    %vm561 = vcmask 1041409
    %v562 = vsel %vm561, %v560, %v558
    %563 = vrot.lane.b32.xlu0 %v562, 80
    %v564 = vpop.permute.xlu0 %563
    %vm565 = vcmask 671360
    %566 = vst.msk [vmem:[#allocation0] sm:$0x3] %vm565, %v564
    %s567 = scalar_lea.vmem [#allocation1], 153
    %v568 = vld [vmem:[%s567] sm:$0x1]
    %s569 = scalar_lea.vmem [#allocation1], 408
    %v570 = vld [vmem:[%s569] sm:$0x2]
    %vm571 = vcmask 1041409
    %v572 = vsel %vm571, %v570, %v568
    %573 = vrot.lane.b32.xlu0 %v572, 78
    %v574 = vpop.permute.xlu0 %573
    %vm575 = vcmask 654960
    %576 = vst.msk [vmem:[#allocation0] sm:$0x3] %vm575, %v574
    %s577 = scalar_lea.vmem [#allocation1], 152
    %v578 = vld [vmem:[%s577] sm:$0x1]
    %s579 = scalar_lea.vmem [#allocation1], 407
    %v580 = vld [vmem:[%s579] sm:$0x2]
    %vm581 = vcmask 1041409
    %v582 = vsel %vm581, %v580, %v578
    %583 = vrot.lane.b32.xlu0 %v582, 76
    %v584 = vpop.permute.xlu0 %583
    %vm585 = vcmask 638560
    %586 = vst.msk [vmem:[#allocation0] sm:$0x3] %vm585, %v584
    %s587 = scalar_lea.vmem [#allocation1], 145
    %v588 = vld [vmem:[%s587] sm:$0x1]
    %s589 = scalar_lea.vmem [#allocation1], 400
    %v590 = vld [vmem:[%s589] sm:$0x2]
    %vm591 = vcmask 1041409
    %v592 = vsel %vm591, %v590, %v588
    %593 = vrot.lane.b32.xlu0 %v592, 74
    %v594 = vpop.permute.xlu0 %593
    %vm595 = vcmask 622160
    %596 = vst.msk [vmem:[#allocation0] sm:$0x3] %vm595, %v594
    %s597 = scalar_lea.vmem [#allocation1], 144
    %v598 = vld [vmem:[%s597] sm:$0x1]
    %s599 = scalar_lea.vmem [#allocation1], 399
    %v600 = vld [vmem:[%s599] sm:$0x2]
    %vm601 = vcmask 1041409
    %v602 = vsel %vm601, %v600, %v598
    %603 = vrot.lane.b32.xlu0 %v602, 72
    %v604 = vpop.permute.xlu0 %603
    %vm605 = vcmask 605760
    %606 = vst.msk [vmem:[#allocation0] sm:$0x3] %vm605, %v604
    %s607 = scalar_lea.vmem [#allocation1], 137
    %v608 = vld [vmem:[%s607] sm:$0x1]
    %s609 = scalar_lea.vmem [#allocation1], 392
    %v610 = vld [vmem:[%s609] sm:$0x2]
    %vm611 = vcmask 1041409
    %v612 = vsel %vm611, %v610, %v608
    %613 = vrot.lane.b32.xlu0 %v612, 70
    %v614 = vpop.permute.xlu0 %613
    %vm615 = vcmask 589360
    %616 = vst.msk [vmem:[#allocation0] sm:$0x3] %vm615, %v614
    %s617 = scalar_lea.vmem [#allocation1], 136
    %v618 = vld [vmem:[%s617] sm:$0x1]
    %s619 = scalar_lea.vmem [#allocation1], 391
    %v620 = vld [vmem:[%s619] sm:$0x2]
    %vm621 = vcmask 1041409
    %v622 = vsel %vm621, %v620, %v618
    %623 = vrot.lane.b32.xlu0 %v622, 68
    %v624 = vpop.permute.xlu0 %623
    %vm625 = vcmask 572960
    %626 = vst.msk [vmem:[#allocation0] sm:$0x3] %vm625, %v624
    %s627 = scalar_lea.vmem [#allocation1], 129
    %v628 = vld [vmem:[%s627] sm:$0x1]
    %s629 = scalar_lea.vmem [#allocation1], 384
    %v630 = vld [vmem:[%s629] sm:$0x2]
    %vm631 = vcmask 1041409
    %v632 = vsel %vm631, %v630, %v628
    %633 = vrot.lane.b32.xlu0 %v632, 66
    %v634 = vpop.permute.xlu0 %633
    %vm635 = vcmask 556560
    %636 = vst.msk [vmem:[#allocation0] sm:$0x3] %vm635, %v634
    %s637 = scalar_lea.vmem [#allocation1], 128
    %v638 = vld [vmem:[%s637] sm:$0x1]
    %s639 = scalar_lea.vmem [#allocation1], 383
    %v640 = vld [vmem:[%s639] sm:$0x2]
    %vm641 = vcmask 1041409
    %v642 = vsel %vm641, %v640, %v638
    %643 = vrot.lane.b32.xlu0 %v642, 64
    %v644 = vpop.permute.xlu0 %643
    %vm645 = vcmask 540160
    %646 = vst.msk [vmem:[#allocation0] sm:$0x3] %vm645, %v644
    %s647 = scalar_lea.vmem [#allocation1], 121
    %v648 = vld [vmem:[%s647] sm:$0x1]
    %s649 = scalar_lea.vmem [#allocation1], 376
    %v650 = vld [vmem:[%s649] sm:$0x2]
    %vm651 = vcmask 1041409
    %v652 = vsel %vm651, %v650, %v648
    %653 = vrot.lane.b32.xlu0 %v652, 62
    %v654 = vpop.permute.xlu0 %653
    %vm655 = vcmask 523760
    %656 = vst.msk [vmem:[#allocation0] sm:$0x3] %vm655, %v654
    %s657 = scalar_lea.vmem [#allocation1], 120
    %v658 = vld [vmem:[%s657] sm:$0x1]
    %s659 = scalar_lea.vmem [#allocation1], 375
    %v660 = vld [vmem:[%s659] sm:$0x2]
    %vm661 = vcmask 1041409
    %v662 = vsel %vm661, %v660, %v658
    %663 = vrot.lane.b32.xlu0 %v662, 60
    %v664 = vpop.permute.xlu0 %663
    %vm665 = vcmask 507360
    %666 = vst.msk [vmem:[#allocation0] sm:$0x3] %vm665, %v664
    %s667 = scalar_lea.vmem [#allocation1], 113
    %v668 = vld [vmem:[%s667] sm:$0x1]
    %s669 = scalar_lea.vmem [#allocation1], 368
    %v670 = vld [vmem:[%s669] sm:$0x2]
    %vm671 = vcmask 1041409
    %v672 = vsel %vm671, %v670, %v668
    %673 = vrot.lane.b32.xlu0 %v672, 58
    %v674 = vpop.permute.xlu0 %673
    %vm675 = vcmask 490960
    %676 = vst.msk [vmem:[#allocation0] sm:$0x3] %vm675, %v674
    %s677 = scalar_lea.vmem [#allocation1], 112
    %v678 = vld [vmem:[%s677] sm:$0x1]
    %s679 = scalar_lea.vmem [#allocation1], 367
    %v680 = vld [vmem:[%s679] sm:$0x2]
    %vm681 = vcmask 1041409
    %v682 = vsel %vm681, %v680, %v678
    %683 = vrot.lane.b32.xlu0 %v682, 56
    %v684 = vpop.permute.xlu0 %683
    %vm685 = vcmask 474560
    %686 = vst.msk [vmem:[#allocation0] sm:$0x3] %vm685, %v684
    %s687 = scalar_lea.vmem [#allocation1], 105
    %v688 = vld [vmem:[%s687] sm:$0x1]
    %s689 = scalar_lea.vmem [#allocation1], 360
    %v690 = vld [vmem:[%s689] sm:$0x2]
    %vm691 = vcmask 1041409
    %v692 = vsel %vm691, %v690, %v688
    %693 = vrot.lane.b32.xlu0 %v692, 54
    %v694 = vpop.permute.xlu0 %693
    %vm695 = vcmask 458160
    %696 = vst.msk [vmem:[#allocation0] sm:$0x3] %vm695, %v694
    %s697 = scalar_lea.vmem [#allocation1], 104
    %v698 = vld [vmem:[%s697] sm:$0x1]
    %s699 = scalar_lea.vmem [#allocation1], 359
    %v700 = vld [vmem:[%s699] sm:$0x2]
    %vm701 = vcmask 1041409
    %v702 = vsel %vm701, %v700, %v698
    %703 = vrot.lane.b32.xlu0 %v702, 52
    %v704 = vpop.permute.xlu0 %703
    %vm705 = vcmask 441760
    %706 = vst.msk [vmem:[#allocation0] sm:$0x3] %vm705, %v704
    %s707 = scalar_lea.vmem [#allocation1], 97
    %v708 = vld [vmem:[%s707] sm:$0x1]
    %s709 = scalar_lea.vmem [#allocation1], 352
    %v710 = vld [vmem:[%s709] sm:$0x2]
    %vm711 = vcmask 1041409
    %v712 = vsel %vm711, %v710, %v708
    %713 = vrot.lane.b32.xlu0 %v712, 50
    %v714 = vpop.permute.xlu0 %713
    %vm715 = vcmask 425360
    %716 = vst.msk [vmem:[#allocation0] sm:$0x3] %vm715, %v714
    %s717 = scalar_lea.vmem [#allocation1], 96
    %v718 = vld [vmem:[%s717] sm:$0x1]
    %s719 = scalar_lea.vmem [#allocation1], 351
    %v720 = vld [vmem:[%s719] sm:$0x2]
    %vm721 = vcmask 1041409
    %v722 = vsel %vm721, %v720, %v718
    %723 = vrot.lane.b32.xlu0 %v722, 48
    %v724 = vpop.permute.xlu0 %723
    %vm725 = vcmask 408960
    %726 = vst.msk [vmem:[#allocation0] sm:$0x3] %vm725, %v724
    %s727 = scalar_lea.vmem [#allocation1], 89
    %v728 = vld [vmem:[%s727] sm:$0x1]
    %s729 = scalar_lea.vmem [#allocation1], 344
    %v730 = vld [vmem:[%s729] sm:$0x2]
    %vm731 = vcmask 1041409
    %v732 = vsel %vm731, %v730, %v728
    %733 = vrot.lane.b32.xlu0 %v732, 46
    %v734 = vpop.permute.xlu0 %733
    %vm735 = vcmask 392560
    %736 = vst.msk [vmem:[#allocation0] sm:$0x3] %vm735, %v734
    %s737 = scalar_lea.vmem [#allocation1], 88
    %v738 = vld [vmem:[%s737] sm:$0x1]
    %s739 = scalar_lea.vmem [#allocation1], 343
    %v740 = vld [vmem:[%s739] sm:$0x2]
    %vm741 = vcmask 1041409
    %v742 = vsel %vm741, %v740, %v738
    %743 = vrot.lane.b32.xlu0 %v742, 44
    %v744 = vpop.permute.xlu0 %743
    %vm745 = vcmask 376160
    %746 = vst.msk [vmem:[#allocation0] sm:$0x3] %vm745, %v744
    %s747 = scalar_lea.vmem [#allocation1], 81
    %v748 = vld [vmem:[%s747] sm:$0x1]
    %s749 = scalar_lea.vmem [#allocation1], 336
    %v750 = vld [vmem:[%s749] sm:$0x2]
    %vm751 = vcmask 1041409
    %v752 = vsel %vm751, %v750, %v748
    %753 = vrot.lane.b32.xlu0 %v752, 42
    %v754 = vpop.permute.xlu0 %753
    %vm755 = vcmask 359760
    %756 = vst.msk [vmem:[#allocation0] sm:$0x3] %vm755, %v754
    %s757 = scalar_lea.vmem [#allocation1], 80
    %v758 = vld [vmem:[%s757] sm:$0x1]
    %s759 = scalar_lea.vmem [#allocation1], 335
    %v760 = vld [vmem:[%s759] sm:$0x2]
    %vm761 = vcmask 1041409
    %v762 = vsel %vm761, %v760, %v758
    %763 = vrot.lane.b32.xlu0 %v762, 40
    %v764 = vpop.permute.xlu0 %763
    %vm765 = vcmask 343360
    %766 = vst.msk [vmem:[#allocation0] sm:$0x3] %vm765, %v764
    %s767 = scalar_lea.vmem [#allocation1], 73
    %v768 = vld [vmem:[%s767] sm:$0x1]
    %s769 = scalar_lea.vmem [#allocation1], 328
    %v770 = vld [vmem:[%s769] sm:$0x2]
    %vm771 = vcmask 1041409
    %v772 = vsel %vm771, %v770, %v768
    %773 = vrot.lane.b32.xlu0 %v772, 38
    %v774 = vpop.permute.xlu0 %773
    %vm775 = vcmask 326960
    %776 = vst.msk [vmem:[#allocation0] sm:$0x3] %vm775, %v774
    %s777 = scalar_lea.vmem [#allocation1], 72
    %v778 = vld [vmem:[%s777] sm:$0x1]
    %s779 = scalar_lea.vmem [#allocation1], 327
    %v780 = vld [vmem:[%s779] sm:$0x2]
    %vm781 = vcmask 1041409
    %v782 = vsel %vm781, %v780, %v778
    %783 = vrot.lane.b32.xlu0 %v782, 36
    %v784 = vpop.permute.xlu0 %783
    %vm785 = vcmask 310560
    %786 = vst.msk [vmem:[#allocation0] sm:$0x3] %vm785, %v784
    %s787 = scalar_lea.vmem [#allocation1], 65
    %v788 = vld [vmem:[%s787] sm:$0x1]
    %s789 = scalar_lea.vmem [#allocation1], 320
    %v790 = vld [vmem:[%s789] sm:$0x2]
    %vm791 = vcmask 1041409
    %v792 = vsel %vm791, %v790, %v788
    %793 = vrot.lane.b32.xlu0 %v792, 34
    %v794 = vpop.permute.xlu0 %793
    %vm795 = vcmask 294160
    %796 = vst.msk [vmem:[#allocation0] sm:$0x3] %vm795, %v794
    %s797 = scalar_lea.vmem [#allocation1], 64
    %v798 = vld [vmem:[%s797] sm:$0x1]
    %s799 = scalar_lea.vmem [#allocation1], 319
    %v800 = vld [vmem:[%s799] sm:$0x2]
    %vm801 = vcmask 1041409
    %v802 = vsel %vm801, %v800, %v798
    %803 = vrot.lane.b32.xlu0 %v802, 32
    %v804 = vpop.permute.xlu0 %803
    %vm805 = vcmask 277760
    %806 = vst.msk [vmem:[#allocation0] sm:$0x3] %vm805, %v804
    %s807 = scalar_lea.vmem [#allocation1], 57
    %v808 = vld [vmem:[%s807] sm:$0x1]
    %s809 = scalar_lea.vmem [#allocation1], 312
    %v810 = vld [vmem:[%s809] sm:$0x2]
    %vm811 = vcmask 1041409
    %v812 = vsel %vm811, %v810, %v808
    %813 = vrot.lane.b32.xlu0 %v812, 30
    %v814 = vpop.permute.xlu0 %813
    %vm815 = vcmask 261360
    %816 = vst.msk [vmem:[#allocation0] sm:$0x3] %vm815, %v814
    %s817 = scalar_lea.vmem [#allocation1], 56
    %v818 = vld [vmem:[%s817] sm:$0x1]
    %s819 = scalar_lea.vmem [#allocation1], 311
    %v820 = vld [vmem:[%s819] sm:$0x2]
    %vm821 = vcmask 1041409
    %v822 = vsel %vm821, %v820, %v818
    %823 = vrot.lane.b32.xlu0 %v822, 28
    %v824 = vpop.permute.xlu0 %823
    %vm825 = vcmask 244960
    %826 = vst.msk [vmem:[#allocation0] sm:$0x3] %vm825, %v824
    %s827 = scalar_lea.vmem [#allocation1], 49
    %v828 = vld [vmem:[%s827] sm:$0x1]
    %s829 = scalar_lea.vmem [#allocation1], 304
    %v830 = vld [vmem:[%s829] sm:$0x2]
    %vm831 = vcmask 1041409
    %v832 = vsel %vm831, %v830, %v828
    %833 = vrot.lane.b32.xlu0 %v832, 26
    %v834 = vpop.permute.xlu0 %833
    %vm835 = vcmask 228560
    %836 = vst.msk [vmem:[#allocation0] sm:$0x3] %vm835, %v834
    %s837 = scalar_lea.vmem [#allocation1], 48
    %v838 = vld [vmem:[%s837] sm:$0x1]
    %s839 = scalar_lea.vmem [#allocation1], 303
    %v840 = vld [vmem:[%s839] sm:$0x2]
    %vm841 = vcmask 1041409
    %v842 = vsel %vm841, %v840, %v838
    %843 = vrot.lane.b32.xlu0 %v842, 24
    %v844 = vpop.permute.xlu0 %843
    %vm845 = vcmask 212160
    %846 = vst.msk [vmem:[#allocation0] sm:$0x3] %vm845, %v844
    %s847 = scalar_lea.vmem [#allocation1], 41
    %v848 = vld [vmem:[%s847] sm:$0x1]
    %s849 = scalar_lea.vmem [#allocation1], 296
    %v850 = vld [vmem:[%s849] sm:$0x2]
    %vm851 = vcmask 1041409
    %v852 = vsel %vm851, %v850, %v848
    %853 = vrot.lane.b32.xlu0 %v852, 22
    %v854 = vpop.permute.xlu0 %853
    %vm855 = vcmask 195760
    %856 = vst.msk [vmem:[#allocation0] sm:$0x3] %vm855, %v854
    %s857 = scalar_lea.vmem [#allocation1], 40
    %v858 = vld [vmem:[%s857] sm:$0x1]
    %s859 = scalar_lea.vmem [#allocation1], 295
    %v860 = vld [vmem:[%s859] sm:$0x2]
    %vm861 = vcmask 1041409
    %v862 = vsel %vm861, %v860, %v858
    %863 = vrot.lane.b32.xlu0 %v862, 20
    %v864 = vpop.permute.xlu0 %863
    %vm865 = vcmask 179360
    %866 = vst.msk [vmem:[#allocation0] sm:$0x3] %vm865, %v864
    %s867 = scalar_lea.vmem [#allocation1], 33
    %v868 = vld [vmem:[%s867] sm:$0x1]
    %s869 = scalar_lea.vmem [#allocation1], 288
    %v870 = vld [vmem:[%s869] sm:$0x2]
    %vm871 = vcmask 1041409
    %v872 = vsel %vm871, %v870, %v868
    %873 = vrot.lane.b32.xlu0 %v872, 18
    %v874 = vpop.permute.xlu0 %873
    %vm875 = vcmask 162960
    %876 = vst.msk [vmem:[#allocation0] sm:$0x3] %vm875, %v874
    %s877 = scalar_lea.vmem [#allocation1], 32
    %v878 = vld [vmem:[%s877] sm:$0x1]
    %s879 = scalar_lea.vmem [#allocation1], 287
    %v880 = vld [vmem:[%s879] sm:$0x2]
    %vm881 = vcmask 1041409
    %v882 = vsel %vm881, %v880, %v878
    %883 = vrot.lane.b32.xlu0 %v882, 16
    %v884 = vpop.permute.xlu0 %883
    %vm885 = vcmask 146560
    %886 = vst.msk [vmem:[#allocation0] sm:$0x3] %vm885, %v884
    %s887 = scalar_lea.vmem [#allocation1], 25
    %v888 = vld [vmem:[%s887] sm:$0x1]
    %s889 = scalar_lea.vmem [#allocation1], 280
    %v890 = vld [vmem:[%s889] sm:$0x2]
    %vm891 = vcmask 1041409
    %v892 = vsel %vm891, %v890, %v888
    %893 = vrot.lane.b32.xlu0 %v892, 14
    %v894 = vpop.permute.xlu0 %893
    %vm895 = vcmask 130160
    %896 = vst.msk [vmem:[#allocation0] sm:$0x3] %vm895, %v894
    %s897 = scalar_lea.vmem [#allocation1], 24
    %v898 = vld [vmem:[%s897] sm:$0x1]
    %s899 = scalar_lea.vmem [#allocation1], 279
    %v900 = vld [vmem:[%s899] sm:$0x2]
    %vm901 = vcmask 1041409
    %v902 = vsel %vm901, %v900, %v898
    %903 = vrot.lane.b32.xlu0 %v902, 12
    %v904 = vpop.permute.xlu0 %903
    %vm905 = vcmask 113760
    %906 = vst.msk [vmem:[#allocation0] sm:$0x3] %vm905, %v904
    %s907 = scalar_lea.vmem [#allocation1], 17
    %v908 = vld [vmem:[%s907] sm:$0x1]
    %s909 = scalar_lea.vmem [#allocation1], 272
    %v910 = vld [vmem:[%s909] sm:$0x2]
    %vm911 = vcmask 1041409
    %v912 = vsel %vm911, %v910, %v908
    %913 = vrot.lane.b32.xlu0 %v912, 10
    %v914 = vpop.permute.xlu0 %913
    %vm915 = vcmask 97360
    %916 = vst.msk [vmem:[#allocation0] sm:$0x3] %vm915, %v914
    %s917 = scalar_lea.vmem [#allocation1], 16
    %v918 = vld [vmem:[%s917] sm:$0x1]
    %s919 = scalar_lea.vmem [#allocation1], 271
    %v920 = vld [vmem:[%s919] sm:$0x2]
    %vm921 = vcmask 1041409
    %v922 = vsel %vm921, %v920, %v918
    %923 = vrot.lane.b32.xlu0 %v922, 8
    %v924 = vpop.permute.xlu0 %923
    %vm925 = vcmask 80960
    %926 = vst.msk [vmem:[#allocation0] sm:$0x3] %vm925, %v924
    %s927 = scalar_lea.vmem [#allocation1], 9
    %v928 = vld [vmem:[%s927] sm:$0x1]
    %s929 = scalar_lea.vmem [#allocation1], 264
    %v930 = vld [vmem:[%s929] sm:$0x2]
    %vm931 = vcmask 1041409
    %v932 = vsel %vm931, %v930, %v928
    %933 = vrot.lane.b32.xlu0 %v932, 6
    %v934 = vpop.permute.xlu0 %933
    %vm935 = vcmask 64560
    %936 = vst.msk [vmem:[#allocation0] sm:$0x3] %vm935, %v934
    %s937 = scalar_lea.vmem [#allocation1], 8
    %v938 = vld [vmem:[%s937] sm:$0x1]
    %s939 = scalar_lea.vmem [#allocation1], 263
    %v940 = vld [vmem:[%s939] sm:$0x2]
    %vm941 = vcmask 1041409
    %v942 = vsel %vm941, %v940, %v938
    %943 = vrot.lane.b32.xlu0 %v942, 4
    %v944 = vpop.permute.xlu0 %943
    %vm945 = vcmask 48160
    %946 = vst.msk [vmem:[#allocation0] sm:$0x3] %vm945, %v944
    %s947 = scalar_lea.vmem [#allocation1], 1
    %v948 = vld [vmem:[%s947] sm:$0x1]
    %s949 = scalar_lea.vmem [#allocation1], 256
    %v950 = vld [vmem:[%s949] sm:$0x2]
    %vm951 = vcmask 1041409
    %v952 = vsel %vm951, %v950, %v948
    %953 = vrot.lane.b32.xlu0 %v952, 2
    %v954 = vpop.permute.xlu0 %953
    %vm955 = vcmask 31760
    %956 = vst.msk [vmem:[#allocation0] sm:$0x3] %vm955, %v954
    %s958 = sshllo.u32 0, 2
    %v960 = vld [vmem:[#allocation0] sm:%s958]
    %s961 = sshllo.u32 0, 2
    %962 = vst [vmem:[%s1] sm:%s961] %v960

// kernel: image_regressor.7
$region0: #{image_regressor.7}
  #allocation0 [shape = 'u32[]', space=smem, size = 0x4, offset = 0x4, fixed_abs, tag = 'smem constant byte address 0x4 - core index']
  #allocation1 [shape = 'u32[144,128]{1,0:T(1,128)}', space=vmem, size = 0x12000, scoped, tag = 'internal scratch']
  #allocation2 [shape = 'f32[1,1]{1,0:T(1,128)S(1)}', space=vmem, size = 0x200, scoped, tag = 'scoped memory for image_regressor.7']
  %s0 = inlined_call_operand.vmem [shape: f32[2,128], index: 0, kind: input, shape index: {}]
  %s1 = inlined_call_operand.vmem [shape: f32[2,128], index: 1, kind: input, shape index: {}]
  %s2 = inlined_call_operand.vmem [shape: f32[128,32], index: 2, kind: input, shape index: {}]
  %s3 = inlined_call_operand.vmem [shape: f32[1,32], index: 3, kind: input, shape index: {}]
  %s4 = inlined_call_operand.vmem [shape: f32[32,32], index: 4, kind: input, shape index: {}]
  %s5 = inlined_call_operand.vmem [shape: f32[1,32], index: 5, kind: input, shape index: {}]
  %s6 = inlined_call_operand.vmem [shape: f32[128,32], index: 6, kind: input, shape index: {}]
  %s7 = inlined_call_operand.vmem [shape: f32[1,32], index: 7, kind: input, shape index: {}]
  %s8 = inlined_call_operand.vmem [shape: f32[32,32], index: 8, kind: input, shape index: {}]
  %s9 = inlined_call_operand.vmem [shape: f32[1,32], index: 9, kind: input, shape index: {}]
  %s10 = inlined_call_operand.vmem [shape: f32[32,32], index: 10, kind: input, shape index: {}]
  %s11 = inlined_call_operand.vmem [shape: f32[32,32], index: 11, kind: input, shape index: {}]
  %s12 = inlined_call_operand.vmem [shape: f32[1,32], index: 12, kind: input, shape index: {}]
  %s13 = inlined_call_operand.vmem [shape: f32[32,32], index: 13, kind: input, shape index: {}]
  %s14 = inlined_call_operand.vmem [shape: f32[1,32], index: 14, kind: input, shape index: {}]
  %s15 = inlined_call_operand.vmem [shape: f32[1,32], index: 15, kind: input, shape index: {}]
  %s16 = inlined_call_operand.<no memory space> [shape: f32[1,1], index: 16, kind: input, shape index: {}]
  %s17 = inlined_call_operand.vmem [shape: f32[2,1], index: 17, kind: output, shape index: {}]
  %s18 = sld [smem:[#allocation0]]
  $region78: #{image_regressor.7} parent=0
    _
  %s20 = ssub.s32 1, %s18
  %s21 = scalar_select 0, %s20, %s18
  %v22 = vstv %s16
  %23 = vst [vmem:[#allocation2] sm:$0x1] %v22
  // Predicated region
  $region2: #{image_regressor.7} parent=0 // pred_check
    _
  $region3: #{image_regressor.7} parent=0 // pred_check_branch
    %25 = sbr.rel (0) target = $region5
  $region4: #{image_regressor.7} parent=0 // pred_region
    _
  $region5: #{image_regressor.7} parent=0 // pred_fallthru
    _
  // Predicated region
  $region6: #{image_regressor.7} parent=0 // pred_check
    _
  $region7: #{image_regressor.7} parent=0 // pred_check_branch
    %27 = sbr.rel (0) target = $region9
  $region8: #{image_regressor.7} parent=0 // pred_region
    _
  $region9: #{image_regressor.7} parent=0 // pred_fallthru
    _
  // Predicated region
  $region10: #{image_regressor.7} parent=0 // pred_check
    _
  $region11: #{image_regressor.7} parent=0 // pred_check_branch
    %29 = sbr.rel (0) target = $region13
  $region12: #{image_regressor.7} parent=0 // pred_region
    _
  $region13: #{image_regressor.7} parent=0 // pred_fallthru
    _
  // Predicated region
  $region14: #{image_regressor.7} parent=0 // pred_check
    _
  $region15: #{image_regressor.7} parent=0 // pred_check_branch
    %31 = sbr.rel (0) target = $region17
  $region16: #{image_regressor.7} parent=0 // pred_region
    _
  $region17: #{image_regressor.7} parent=0 // pred_fallthru
    _
  // Predicated region
  $region18: #{image_regressor.7} parent=0 // pred_check
    _
  $region19: #{image_regressor.7} parent=0 // pred_check_branch
    %33 = sbr.rel (0) target = $region21
  $region20: #{image_regressor.7} parent=0 // pred_region
    _
  $region21: #{image_regressor.7} parent=0 // pred_fallthru
    _
  // Predicated region
  $region22: #{image_regressor.7} parent=0 // pred_check
    _
  $region23: #{image_regressor.7} parent=0 // pred_check_branch
    %35 = sbr.rel (0) target = $region25
  $region24: #{image_regressor.7} parent=0 // pred_region
    _
  $region25: #{image_regressor.7} parent=0 // pred_fallthru
    _
  // Predicated region
  $region26: #{image_regressor.7} parent=0 // pred_check
    _
  $region27: #{image_regressor.7} parent=0 // pred_check_branch
    %37 = sbr.rel (0) target = $region29
  $region28: #{image_regressor.7} parent=0 // pred_region
    _
  $region29: #{image_regressor.7} parent=0 // pred_fallthru
    _
  // Predicated region
  $region30: #{image_regressor.7} parent=0 // pred_check
    _
  $region31: #{image_regressor.7} parent=0 // pred_check_branch
    %39 = sbr.rel (0) target = $region33
  $region32: #{image_regressor.7} parent=0 // pred_region
    _
  $region33: #{image_regressor.7} parent=0 // pred_fallthru
    _
  // Predicated region
  $region34: #{image_regressor.7} parent=0 // pred_check
    _
  $region35: #{image_regressor.7} parent=0 // pred_check_branch
    %41 = sbr.rel (0) target = $region37
  $region36: #{image_regressor.7} parent=0 // pred_region
    _
  $region37: #{image_regressor.7} parent=0 // pred_fallthru
    _
  // Predicated region
  $region38: #{image_regressor.7} parent=0 // pred_check
    _
  $region39: #{image_regressor.7} parent=0 // pred_check_branch
    %43 = sbr.rel (0) target = $region41
  $region40: #{image_regressor.7} parent=0 // pred_region
    _
  $region41: #{image_regressor.7} parent=0 // pred_fallthru
    _
  // Predicated region
  $region42: #{image_regressor.7} parent=0 // pred_check
    _
  $region43: #{image_regressor.7} parent=0 // pred_check_branch
    %45 = sbr.rel (0) target = $region45
  $region44: #{image_regressor.7} parent=0 // pred_region
    _
  $region45: #{image_regressor.7} parent=0 // pred_fallthru
    _
  // Predicated region
  $region46: #{image_regressor.7} parent=0 // pred_check
    _
  $region47: #{image_regressor.7} parent=0 // pred_check_branch
    %47 = sbr.rel (0) target = $region49
  $region48: #{image_regressor.7} parent=0 // pred_region
    _
  $region49: #{image_regressor.7} parent=0 // pred_fallthru
    _
  // Predicated region
  $region50: #{image_regressor.7} parent=0 // pred_check
    _
  $region51: #{image_regressor.7} parent=0 // pred_check_branch
    %49 = sbr.rel (0) target = $region53
  $region52: #{image_regressor.7} parent=0 // pred_region
    _
  $region53: #{image_regressor.7} parent=0 // pred_fallthru
    _
  // Predicated region
  $region54: #{image_regressor.7} parent=0 // pred_check
    _
  $region55: #{image_regressor.7} parent=0 // pred_check_branch
    %51 = sbr.rel (0) target = $region57
  $region56: #{image_regressor.7} parent=0 // pred_region
    _
  $region57: #{image_regressor.7} parent=0 // pred_fallthru
    _
  // Predicated region
  $region58: #{image_regressor.7} parent=0 // pred_check
    _
  $region59: #{image_regressor.7} parent=0 // pred_check_branch
    %53 = sbr.rel (0) target = $region61
  $region60: #{image_regressor.7} parent=0 // pred_region
    _
  $region61: #{image_regressor.7} parent=0 // pred_fallthru
    _
  // Predicated region
  $region62: #{image_regressor.7} parent=0 // pred_check
    _
  $region63: #{image_regressor.7} parent=0 // pred_check_branch
    %55 = sbr.rel (0) target = $region65
  $region64: #{image_regressor.7} parent=0 // pred_region
    _
  $region65: #{image_regressor.7} parent=0 // pred_fallthru
    _
  // Predicated region
  $region66: #{image_regressor.7} parent=0 // pred_check
    _
  $region67: #{image_regressor.7} parent=0 // pred_check_branch
    %57 = sbr.rel (0) target = $region69
  $region68: #{image_regressor.7} parent=0 // pred_region
    _
  $region69: #{image_regressor.7} parent=0 // pred_fallthru
    _
  %v58 = vld [vmem:[%s0] sm:$0x3]
  %v59 = vld [vmem:[%s2] sm:$0xff]
  %v60 = vld [vmem:[%s2 + $0x8] sm:$0xff]
  %v61 = vld [vmem:[%s2 + $0x10] sm:$0xff]
  %v62 = vld [vmem:[%s2 + $0x18] sm:$0xff]
  %v63 = vld [vmem:[%s2 + $0x20] sm:$0xff]
  %v64 = vld [vmem:[%s2 + $0x28] sm:$0xff]
  %v65 = vld [vmem:[%s2 + $0x30] sm:$0xff]
  %v66 = vld [vmem:[%s2 + $0x38] sm:$0xff]
  %v67 = vld [vmem:[%s2 + $0x40] sm:$0xff]
  %v68 = vld [vmem:[%s2 + $0x48] sm:$0xff]
  %v69 = vld [vmem:[%s2 + $0x50] sm:$0xff]
  %v70 = vld [vmem:[%s2 + $0x58] sm:$0xff]
  %v71 = vld [vmem:[%s2 + $0x60] sm:$0xff]
  %v72 = vld [vmem:[%s2 + $0x68] sm:$0xff]
  %v73 = vld [vmem:[%s2 + $0x70] sm:$0xff]
  %v74 = vld [vmem:[%s2 + $0x78] sm:$0xff]
  %v75 = vld [vmem:[%s3] sm:$0x1]
  %v77 = vlaneseq
  %v78 = vshrl.u32 %v77, 7
  %v79 = vsub.s32 0, %v78
  %v80 = vrot.slane %v75, %v79
  %82 = vmatprep.subr.mxu0 0.0
  %83 = vmatpush1.msra.mxu0 %v59
  %84 = vmatprep.subr.mxu0 0.0
  %85 = vmatpush1.msra.mxu0 %v60
  %86 = vmatprep.subr.mxu0 0.0
  %87 = vmatpush1.msra.mxu0 %v61
  %88 = vmatprep.subr.mxu0 0.0
  %89 = vmatpush1.msra.mxu0 %v62
  %90 = vmatprep.subr.mxu0 0.0
  %91 = vmatpush1.msra.mxu0 %v63
  %92 = vmatprep.subr.mxu0 0.0
  %93 = vmatpush1.msra.mxu0 %v64
  %94 = vmatprep.subr.mxu0 0.0
  %95 = vmatpush1.msra.mxu0 %v65
  %96 = vmatprep.subr.mxu0 0.0
  %97 = vmatpush1.msra.mxu0 %v66
  %98 = vmatprep.subr.mxu0 0.0
  %99 = vmatpush1.msra.mxu0 %v67
  %100 = vmatprep.subr.mxu0 0.0
  %101 = vmatpush1.msra.mxu0 %v68
  %102 = vmatprep.subr.mxu0 0.0
  %103 = vmatpush1.msra.mxu0 %v69
  %104 = vmatprep.subr.mxu0 0.0
  %105 = vmatpush1.msra.mxu0 %v70
  %106 = vmatprep.subr.mxu0 0.0
  %107 = vmatpush1.msra.mxu0 %v71
  %108 = vmatprep.subr.mxu0 0.0
  %109 = vmatpush1.msra.mxu0 %v72
  %110 = vmatprep.subr.mxu0 0.0
  %111 = vmatpush1.msra.mxu0 %v73
  %112 = vmatprep.subr.mxu0 0.0
  %113 = vmatpush1.msra.mxu0 %v74
  %114 = vmatprep.subr.mxu0 0.0
  %115 = vmatpush1.msra.mxu0 0.0
  %116 = vmatprep.subr.mxu0 0.0
  %117 = vmatpush1.msra.mxu0 0.0
  %118 = vmatprep.subr.mxu0 0.0
  %119 = vmatpush1.msra.mxu0 0.0
  %120 = vmatprep.subr.mxu0 0.0
  %121 = vmatpush1.msra.mxu0 0.0
  %122 = vmatprep.subr.mxu0 0.0
  %123 = vmatpush1.msra.mxu0 0.0
  %124 = vmatprep.subr.mxu0 0.0
  %125 = vmatpush1.msra.mxu0 0.0
  %126 = vmatprep.subr.mxu0 0.0
  %127 = vmatpush1.msra.mxu0 0.0
  %128 = vmatprep.subr.mxu0 0.0
  %129 = vmatpush1.msra.mxu0 0.0
  %130 = vmatprep.subr.mxu0 0.0
  %131 = vmatpush1.msra.mxu0 0.0
  %132 = vmatprep.subr.mxu0 0.0
  %133 = vmatpush1.msra.mxu0 0.0
  %134 = vmatprep.subr.mxu0 0.0
  %135 = vmatpush1.msra.mxu0 0.0
  %136 = vmatprep.subr.mxu0 0.0
  %137 = vmatpush1.msra.mxu0 0.0
  %138 = vmatprep.subr.mxu0 0.0
  %139 = vmatpush1.msra.mxu0 0.0
  %140 = vmatprep.subr.mxu0 0.0
  %141 = vmatpush1.msra.mxu0 0.0
  %142 = vmatprep.subr.mxu0 0.0
  %143 = vmatpush1.msra.mxu0 0.0
  %144 = vmatprep.subr.mxu0 0.0
  %145 = vmatpush1.msra.mxu0 0.0
  %146 = vmatprep.mubr.f32.mxu0 0.0
  %147 = vmatmul.mubr.f32.gmra.mrb[0].mxu0 %v58
  %v148 = vpop.f32.mrb[0].mxu0
  %v149 = vadd.f32 %v80, %v148
  %v150 = vpop.f32.mrb[0].mxu0
  %151 = vdwg.mxu0
  %v152 = vmax.f32 %v149, 0.0
  %v153 = vld [vmem:[%s4] sm:$0xff]
  %v154 = vld [vmem:[%s4 + $0x8] sm:$0xff]
  %v155 = vld [vmem:[%s4 + $0x10] sm:$0xff]
  %v156 = vld [vmem:[%s4 + $0x18] sm:$0xff]
  %v157 = vld [vmem:[%s5] sm:$0x1]
  %v159 = vlaneseq
  %v160 = vshrl.u32 %v159, 7
  %v161 = vsub.s32 0, %v160
  %v162 = vrot.slane %v157, %v161
  %vm164 = vcmask 261120
  %v166 = vsel %vm164, %v152, 0
  %168 = vmatprep.subr.mxu0 0.0
  %169 = vmatpush1.msra.mxu0 %v153
  %170 = vmatprep.subr.mxu0 0.0
  %171 = vmatpush1.msra.mxu0 %v154
  %172 = vmatprep.subr.mxu0 0.0
  %173 = vmatpush1.msra.mxu0 %v155
  %174 = vmatprep.subr.mxu0 0.0
  %175 = vmatpush1.msra.mxu0 %v156
  %176 = vmatprep.subr.mxu0 0.0
  %177 = vmatpush1.msra.mxu0 0.0
  %178 = vmatprep.subr.mxu0 0.0
  %179 = vmatpush1.msra.mxu0 0.0
  %180 = vmatprep.subr.mxu0 0.0
  %181 = vmatpush1.msra.mxu0 0.0
  %182 = vmatprep.subr.mxu0 0.0
  %183 = vmatpush1.msra.mxu0 0.0
  %184 = vmatprep.subr.mxu0 0.0
  %185 = vmatpush1.msra.mxu0 0.0
  %186 = vmatprep.subr.mxu0 0.0
  %187 = vmatpush1.msra.mxu0 0.0
  %188 = vmatprep.subr.mxu0 0.0
  %189 = vmatpush1.msra.mxu0 0.0
  %190 = vmatprep.subr.mxu0 0.0
  %191 = vmatpush1.msra.mxu0 0.0
  %192 = vmatprep.subr.mxu0 0.0
  %193 = vmatpush1.msra.mxu0 0.0
  %194 = vmatprep.subr.mxu0 0.0
  %195 = vmatpush1.msra.mxu0 0.0
  %196 = vmatprep.subr.mxu0 0.0
  %197 = vmatpush1.msra.mxu0 0.0
  %198 = vmatprep.subr.mxu0 0.0
  %199 = vmatpush1.msra.mxu0 0.0
  %200 = vmatprep.subr.mxu0 0.0
  %201 = vmatpush1.msra.mxu0 0.0
  %202 = vmatprep.subr.mxu0 0.0
  %203 = vmatpush1.msra.mxu0 0.0
  %204 = vmatprep.subr.mxu0 0.0
  %205 = vmatpush1.msra.mxu0 0.0
  %206 = vmatprep.subr.mxu0 0.0
  %207 = vmatpush1.msra.mxu0 0.0
  %208 = vmatprep.subr.mxu0 0.0
  %209 = vmatpush1.msra.mxu0 0.0
  %210 = vmatprep.subr.mxu0 0.0
  %211 = vmatpush1.msra.mxu0 0.0
  %212 = vmatprep.subr.mxu0 0.0
  %213 = vmatpush1.msra.mxu0 0.0
  %214 = vmatprep.subr.mxu0 0.0
  %215 = vmatpush1.msra.mxu0 0.0
  %216 = vmatprep.subr.mxu0 0.0
  %217 = vmatpush1.msra.mxu0 0.0
  %218 = vmatprep.subr.mxu0 0.0
  %219 = vmatpush1.msra.mxu0 0.0
  %220 = vmatprep.subr.mxu0 0.0
  %221 = vmatpush1.msra.mxu0 0.0
  %222 = vmatprep.subr.mxu0 0.0
  %223 = vmatpush1.msra.mxu0 0.0
  %224 = vmatprep.subr.mxu0 0.0
  %225 = vmatpush1.msra.mxu0 0.0
  %226 = vmatprep.subr.mxu0 0.0
  %227 = vmatpush1.msra.mxu0 0.0
  %228 = vmatprep.subr.mxu0 0.0
  %229 = vmatpush1.msra.mxu0 0.0
  %230 = vmatprep.subr.mxu0 0.0
  %231 = vmatpush1.msra.mxu0 0.0
  %232 = vmatprep.mubr.f32.mxu0 0.0
  %233 = vmatmul.mubr.f32.gmra.mrb[0].mxu0 %v166
  %v234 = vpop.f32.mrb[0].mxu0
  %v235 = vadd.f32 %v162, %v234
  %v236 = vpop.f32.mrb[0].mxu0
  %237 = vdwg.mxu0
  %v238 = vld [vmem:[%s1] sm:$0x3]
  %v239 = vld [vmem:[%s6] sm:$0xff]
  %v240 = vld [vmem:[%s6 + $0x8] sm:$0xff]
  %v241 = vld [vmem:[%s6 + $0x10] sm:$0xff]
  %v242 = vld [vmem:[%s6 + $0x18] sm:$0xff]
  %v243 = vld [vmem:[%s6 + $0x20] sm:$0xff]
  %v244 = vld [vmem:[%s6 + $0x28] sm:$0xff]
  %v245 = vld [vmem:[%s6 + $0x30] sm:$0xff]
  %v246 = vld [vmem:[%s6 + $0x38] sm:$0xff]
  %v247 = vld [vmem:[%s6 + $0x40] sm:$0xff]
  %v248 = vld [vmem:[%s6 + $0x48] sm:$0xff]
  %v249 = vld [vmem:[%s6 + $0x50] sm:$0xff]
  %v250 = vld [vmem:[%s6 + $0x58] sm:$0xff]
  %v251 = vld [vmem:[%s6 + $0x60] sm:$0xff]
  %v252 = vld [vmem:[%s6 + $0x68] sm:$0xff]
  %v253 = vld [vmem:[%s6 + $0x70] sm:$0xff]
  %v254 = vld [vmem:[%s6 + $0x78] sm:$0xff]
  %v255 = vld [vmem:[%s7] sm:$0x1]
  %v257 = vlaneseq
  %v258 = vshrl.u32 %v257, 7
  %v259 = vsub.s32 0, %v258
  %v260 = vrot.slane %v255, %v259
  %262 = vmatprep.subr.mxu0 0.0
  %263 = vmatpush1.msra.mxu0 %v239
  %264 = vmatprep.subr.mxu0 0.0
  %265 = vmatpush1.msra.mxu0 %v240
  %266 = vmatprep.subr.mxu0 0.0
  %267 = vmatpush1.msra.mxu0 %v241
  %268 = vmatprep.subr.mxu0 0.0
  %269 = vmatpush1.msra.mxu0 %v242
  %270 = vmatprep.subr.mxu0 0.0
  %271 = vmatpush1.msra.mxu0 %v243
  %272 = vmatprep.subr.mxu0 0.0
  %273 = vmatpush1.msra.mxu0 %v244
  %274 = vmatprep.subr.mxu0 0.0
  %275 = vmatpush1.msra.mxu0 %v245
  %276 = vmatprep.subr.mxu0 0.0
  %277 = vmatpush1.msra.mxu0 %v246
  %278 = vmatprep.subr.mxu0 0.0
  %279 = vmatpush1.msra.mxu0 %v247
  %280 = vmatprep.subr.mxu0 0.0
  %281 = vmatpush1.msra.mxu0 %v248
  %282 = vmatprep.subr.mxu0 0.0
  %283 = vmatpush1.msra.mxu0 %v249
  %284 = vmatprep.subr.mxu0 0.0
  %285 = vmatpush1.msra.mxu0 %v250
  %286 = vmatprep.subr.mxu0 0.0
  %287 = vmatpush1.msra.mxu0 %v251
  %288 = vmatprep.subr.mxu0 0.0
  %289 = vmatpush1.msra.mxu0 %v252
  %290 = vmatprep.subr.mxu0 0.0
  %291 = vmatpush1.msra.mxu0 %v253
  %292 = vmatprep.subr.mxu0 0.0
  %293 = vmatpush1.msra.mxu0 %v254
  %294 = vmatprep.subr.mxu0 0.0
  %295 = vmatpush1.msra.mxu0 0.0
  %296 = vmatprep.subr.mxu0 0.0
  %297 = vmatpush1.msra.mxu0 0.0
  %298 = vmatprep.subr.mxu0 0.0
  %299 = vmatpush1.msra.mxu0 0.0
  %300 = vmatprep.subr.mxu0 0.0
  %301 = vmatpush1.msra.mxu0 0.0
  %302 = vmatprep.subr.mxu0 0.0
  %303 = vmatpush1.msra.mxu0 0.0
  %304 = vmatprep.subr.mxu0 0.0
  %305 = vmatpush1.msra.mxu0 0.0
  %306 = vmatprep.subr.mxu0 0.0
  %307 = vmatpush1.msra.mxu0 0.0
  %308 = vmatprep.subr.mxu0 0.0
  %309 = vmatpush1.msra.mxu0 0.0
  %310 = vmatprep.subr.mxu0 0.0
  %311 = vmatpush1.msra.mxu0 0.0
  %312 = vmatprep.subr.mxu0 0.0
  %313 = vmatpush1.msra.mxu0 0.0
  %314 = vmatprep.subr.mxu0 0.0
  %315 = vmatpush1.msra.mxu0 0.0
  %316 = vmatprep.subr.mxu0 0.0
  %317 = vmatpush1.msra.mxu0 0.0
  %318 = vmatprep.subr.mxu0 0.0
  %319 = vmatpush1.msra.mxu0 0.0
  %320 = vmatprep.subr.mxu0 0.0
  %321 = vmatpush1.msra.mxu0 0.0
  %322 = vmatprep.subr.mxu0 0.0
  %323 = vmatpush1.msra.mxu0 0.0
  %324 = vmatprep.subr.mxu0 0.0
  %325 = vmatpush1.msra.mxu0 0.0
  %326 = vmatprep.mubr.f32.mxu0 0.0
  %327 = vmatmul.mubr.f32.gmra.mrb[0].mxu0 %v238
  %v328 = vpop.f32.mrb[0].mxu0
  %v329 = vadd.f32 %v260, %v328
  %v330 = vpop.f32.mrb[0].mxu0
  %331 = vdwg.mxu0
  %v332 = vmax.f32 %v329, 0.0
  %v333 = vld [vmem:[%s8] sm:$0xff]
  %v334 = vld [vmem:[%s8 + $0x8] sm:$0xff]
  %v335 = vld [vmem:[%s8 + $0x10] sm:$0xff]
  %v336 = vld [vmem:[%s8 + $0x18] sm:$0xff]
  %v337 = vld [vmem:[%s9] sm:$0x1]
  %v339 = vlaneseq
  %v340 = vshrl.u32 %v339, 7
  %v341 = vsub.s32 0, %v340
  %v342 = vrot.slane %v337, %v341
  %v345 = vsel %vm164, %v332, 0
  %347 = vmatprep.subr.mxu0 0.0
  %348 = vmatpush1.msra.mxu0 %v333
  %349 = vmatprep.subr.mxu0 0.0
  %350 = vmatpush1.msra.mxu0 %v334
  %351 = vmatprep.subr.mxu0 0.0
  %352 = vmatpush1.msra.mxu0 %v335
  %353 = vmatprep.subr.mxu0 0.0
  %354 = vmatpush1.msra.mxu0 %v336
  %355 = vmatprep.subr.mxu0 0.0
  %356 = vmatpush1.msra.mxu0 0.0
  %357 = vmatprep.subr.mxu0 0.0
  %358 = vmatpush1.msra.mxu0 0.0
  %359 = vmatprep.subr.mxu0 0.0
  %360 = vmatpush1.msra.mxu0 0.0
  %361 = vmatprep.subr.mxu0 0.0
  %362 = vmatpush1.msra.mxu0 0.0
  %363 = vmatprep.subr.mxu0 0.0
  %364 = vmatpush1.msra.mxu0 0.0
  %365 = vmatprep.subr.mxu0 0.0
  %366 = vmatpush1.msra.mxu0 0.0
  %367 = vmatprep.subr.mxu0 0.0
  %368 = vmatpush1.msra.mxu0 0.0
  %369 = vmatprep.subr.mxu0 0.0
  %370 = vmatpush1.msra.mxu0 0.0
  %371 = vmatprep.subr.mxu0 0.0
  %372 = vmatpush1.msra.mxu0 0.0
  %373 = vmatprep.subr.mxu0 0.0
  %374 = vmatpush1.msra.mxu0 0.0
  %375 = vmatprep.subr.mxu0 0.0
  %376 = vmatpush1.msra.mxu0 0.0
  %377 = vmatprep.subr.mxu0 0.0
  %378 = vmatpush1.msra.mxu0 0.0
  %379 = vmatprep.subr.mxu0 0.0
  %380 = vmatpush1.msra.mxu0 0.0
  %381 = vmatprep.subr.mxu0 0.0
  %382 = vmatpush1.msra.mxu0 0.0
  %383 = vmatprep.subr.mxu0 0.0
  %384 = vmatpush1.msra.mxu0 0.0
  %385 = vmatprep.subr.mxu0 0.0
  %386 = vmatpush1.msra.mxu0 0.0
  %387 = vmatprep.subr.mxu0 0.0
  %388 = vmatpush1.msra.mxu0 0.0
  %389 = vmatprep.subr.mxu0 0.0
  %390 = vmatpush1.msra.mxu0 0.0
  %391 = vmatprep.subr.mxu0 0.0
  %392 = vmatpush1.msra.mxu0 0.0
  %393 = vmatprep.subr.mxu0 0.0
  %394 = vmatpush1.msra.mxu0 0.0
  %395 = vmatprep.subr.mxu0 0.0
  %396 = vmatpush1.msra.mxu0 0.0
  %397 = vmatprep.subr.mxu0 0.0
  %398 = vmatpush1.msra.mxu0 0.0
  %399 = vmatprep.subr.mxu0 0.0
  %400 = vmatpush1.msra.mxu0 0.0
  %401 = vmatprep.subr.mxu0 0.0
  %402 = vmatpush1.msra.mxu0 0.0
  %403 = vmatprep.subr.mxu0 0.0
  %404 = vmatpush1.msra.mxu0 0.0
  %405 = vmatprep.subr.mxu0 0.0
  %406 = vmatpush1.msra.mxu0 0.0
  %407 = vmatprep.subr.mxu0 0.0
  %408 = vmatpush1.msra.mxu0 0.0
  %409 = vmatprep.subr.mxu0 0.0
  %410 = vmatpush1.msra.mxu0 0.0
  %411 = vmatprep.mubr.f32.mxu0 0.0
  %412 = vmatmul.mubr.f32.gmra.mrb[0].mxu0 %v345
  %v413 = vpop.f32.mrb[0].mxu0
  %v414 = vadd.f32 %v342, %v413
  %v415 = vpop.f32.mrb[0].mxu0
  %416 = vdwg.mxu0
  %v417 = vld [vmem:[%s10] sm:$0xff]
  %v418 = vld [vmem:[%s10 + $0x8] sm:$0xff]
  %v419 = vld [vmem:[%s10 + $0x10] sm:$0xff]
  %v420 = vld [vmem:[%s10 + $0x18] sm:$0xff]
  %v421 = vld [vmem:[%s11] sm:$0xff]
  %v422 = vld [vmem:[%s11 + $0x8] sm:$0xff]
  %v423 = vld [vmem:[%s11 + $0x10] sm:$0xff]
  %v424 = vld [vmem:[%s11 + $0x18] sm:$0xff]
  %v426 = vsel %vm164, %v414, 0
  %428 = vmatprep.subr.mxu0 0.0
  %429 = vmatpush1.msra.mxu0 %v421
  %430 = vmatprep.subr.mxu0 0.0
  %431 = vmatpush1.msra.mxu0 %v422
  %432 = vmatprep.subr.mxu0 0.0
  %433 = vmatpush1.msra.mxu0 %v423
  %434 = vmatprep.subr.mxu0 0.0
  %435 = vmatpush1.msra.mxu0 %v424
  %436 = vmatprep.subr.mxu0 0.0
  %437 = vmatpush1.msra.mxu0 0.0
  %438 = vmatprep.subr.mxu0 0.0
  %439 = vmatpush1.msra.mxu0 0.0
  %440 = vmatprep.subr.mxu0 0.0
  %441 = vmatpush1.msra.mxu0 0.0
  %442 = vmatprep.subr.mxu0 0.0
  %443 = vmatpush1.msra.mxu0 0.0
  %444 = vmatprep.subr.mxu0 0.0
  %445 = vmatpush1.msra.mxu0 0.0
  %446 = vmatprep.subr.mxu0 0.0
  %447 = vmatpush1.msra.mxu0 0.0
  %448 = vmatprep.subr.mxu0 0.0
  %449 = vmatpush1.msra.mxu0 0.0
  %450 = vmatprep.subr.mxu0 0.0
  %451 = vmatpush1.msra.mxu0 0.0
  %452 = vmatprep.subr.mxu0 0.0
  %453 = vmatpush1.msra.mxu0 0.0
  %454 = vmatprep.subr.mxu0 0.0
  %455 = vmatpush1.msra.mxu0 0.0
  %456 = vmatprep.subr.mxu0 0.0
  %457 = vmatpush1.msra.mxu0 0.0
  %458 = vmatprep.subr.mxu0 0.0
  %459 = vmatpush1.msra.mxu0 0.0
  %460 = vmatprep.subr.mxu0 0.0
  %461 = vmatpush1.msra.mxu0 0.0
  %462 = vmatprep.subr.mxu0 0.0
  %463 = vmatpush1.msra.mxu0 0.0
  %464 = vmatprep.subr.mxu0 0.0
  %465 = vmatpush1.msra.mxu0 0.0
  %466 = vmatprep.subr.mxu0 0.0
  %467 = vmatpush1.msra.mxu0 0.0
  %468 = vmatprep.subr.mxu0 0.0
  %469 = vmatpush1.msra.mxu0 0.0
  %470 = vmatprep.subr.mxu0 0.0
  %471 = vmatpush1.msra.mxu0 0.0
  %472 = vmatprep.subr.mxu0 0.0
  %473 = vmatpush1.msra.mxu0 0.0
  %474 = vmatprep.subr.mxu0 0.0
  %475 = vmatpush1.msra.mxu0 0.0
  %476 = vmatprep.subr.mxu0 0.0
  %477 = vmatpush1.msra.mxu0 0.0
  %478 = vmatprep.subr.mxu0 0.0
  %479 = vmatpush1.msra.mxu0 0.0
  %480 = vmatprep.subr.mxu0 0.0
  %481 = vmatpush1.msra.mxu0 0.0
  %482 = vmatprep.subr.mxu0 0.0
  %483 = vmatpush1.msra.mxu0 0.0
  %484 = vmatprep.subr.mxu0 0.0
  %485 = vmatpush1.msra.mxu0 0.0
  %486 = vmatprep.subr.mxu0 0.0
  %487 = vmatpush1.msra.mxu0 0.0
  %488 = vmatprep.subr.mxu0 0.0
  %489 = vmatpush1.msra.mxu0 0.0
  %490 = vmatprep.subr.mxu0 0.0
  %491 = vmatpush1.msra.mxu0 0.0
  %492 = vmatprep.mubr.f32.mxu0 0.0
  %493 = vmatmul.mubr.f32.gmra.mrb[0].mxu0 %v426
  %v494 = vpop.f32.mrb[0].mxu0
  %v495 = vadd.f32 0.0, %v494
  %v496 = vpop.f32.mrb[0].mxu0
  %497 = vdwg.mxu0
  %v499 = vsel %vm164, %v235, 0
  %501 = vmatprep.subr.mxu0 0.0
  %502 = vmatpush1.msra.mxu0 %v417
  %503 = vmatprep.subr.mxu0 0.0
  %504 = vmatpush1.msra.mxu0 %v418
  %505 = vmatprep.subr.mxu0 0.0
  %506 = vmatpush1.msra.mxu0 %v419
  %507 = vmatprep.subr.mxu0 0.0
  %508 = vmatpush1.msra.mxu0 %v420
  %509 = vmatprep.subr.mxu0 0.0
  %510 = vmatpush1.msra.mxu0 0.0
  %511 = vmatprep.subr.mxu0 0.0
  %512 = vmatpush1.msra.mxu0 0.0
  %513 = vmatprep.subr.mxu0 0.0
  %514 = vmatpush1.msra.mxu0 0.0
  %515 = vmatprep.subr.mxu0 0.0
  %516 = vmatpush1.msra.mxu0 0.0
  %517 = vmatprep.subr.mxu0 0.0
  %518 = vmatpush1.msra.mxu0 0.0
  %519 = vmatprep.subr.mxu0 0.0
  %520 = vmatpush1.msra.mxu0 0.0
  %521 = vmatprep.subr.mxu0 0.0
  %522 = vmatpush1.msra.mxu0 0.0
  %523 = vmatprep.subr.mxu0 0.0
  %524 = vmatpush1.msra.mxu0 0.0
  %525 = vmatprep.subr.mxu0 0.0
  %526 = vmatpush1.msra.mxu0 0.0
  %527 = vmatprep.subr.mxu0 0.0
  %528 = vmatpush1.msra.mxu0 0.0
  %529 = vmatprep.subr.mxu0 0.0
  %530 = vmatpush1.msra.mxu0 0.0
  %531 = vmatprep.subr.mxu0 0.0
  %532 = vmatpush1.msra.mxu0 0.0
  %533 = vmatprep.subr.mxu0 0.0
  %534 = vmatpush1.msra.mxu0 0.0
  %535 = vmatprep.subr.mxu0 0.0
  %536 = vmatpush1.msra.mxu0 0.0
  %537 = vmatprep.subr.mxu0 0.0
  %538 = vmatpush1.msra.mxu0 0.0
  %539 = vmatprep.subr.mxu0 0.0
  %540 = vmatpush1.msra.mxu0 0.0
  %541 = vmatprep.subr.mxu0 0.0
  %542 = vmatpush1.msra.mxu0 0.0
  %543 = vmatprep.subr.mxu0 0.0
  %544 = vmatpush1.msra.mxu0 0.0
  %545 = vmatprep.subr.mxu0 0.0
  %546 = vmatpush1.msra.mxu0 0.0
  %547 = vmatprep.subr.mxu0 0.0
  %548 = vmatpush1.msra.mxu0 0.0
  %549 = vmatprep.subr.mxu0 0.0
  %550 = vmatpush1.msra.mxu0 0.0
  %551 = vmatprep.subr.mxu0 0.0
  %552 = vmatpush1.msra.mxu0 0.0
  %553 = vmatprep.subr.mxu0 0.0
  %554 = vmatpush1.msra.mxu0 0.0
  %555 = vmatprep.subr.mxu0 0.0
  %556 = vmatpush1.msra.mxu0 0.0
  %557 = vmatprep.subr.mxu0 0.0
  %558 = vmatpush1.msra.mxu0 0.0
  %559 = vmatprep.subr.mxu0 0.0
  %560 = vmatpush1.msra.mxu0 0.0
  %561 = vmatprep.subr.mxu0 0.0
  %562 = vmatpush1.msra.mxu0 0.0
  %563 = vmatprep.subr.mxu0 0.0
  %564 = vmatpush1.msra.mxu0 0.0
  %565 = vmatprep.mubr.f32.mxu0 0.0
  %566 = vmatmul.mubr.f32.gmra.mrb[0].mxu0 %v499
  %v567 = vpop.f32.mrb[0].mxu0
  %v568 = vadd.f32 %v495, %v567
  %v569 = vpop.f32.mrb[0].mxu0
  %570 = vdwg.mxu0
  %v571 = vld [vmem:[%s12] sm:$0x1]
  %v573 = vlaneseq
  %v574 = vshrl.u32 %v573, 7
  %v575 = vsub.s32 0, %v574
  %v576 = vrot.slane %v571, %v575
  %v578 = vadd.f32 %v568, %v576
  %v579 = vmax.f32 %v578, 0.0
  %v580 = vld [vmem:[%s13] sm:$0xff]
  %v581 = vld [vmem:[%s13 + $0x8] sm:$0xff]
  %v582 = vld [vmem:[%s13 + $0x10] sm:$0xff]
  %v583 = vld [vmem:[%s13 + $0x18] sm:$0xff]
  %v584 = vld [vmem:[%s14] sm:$0x1]
  %v586 = vlaneseq
  %v587 = vshrl.u32 %v586, 7
  %v588 = vsub.s32 0, %v587
  %v589 = vrot.slane %v584, %v588
  %v592 = vsel %vm164, %v579, 0
  %594 = vmatprep.subr.mxu0 0.0
  %595 = vmatpush1.msra.mxu0 %v580
  %596 = vmatprep.subr.mxu0 0.0
  %597 = vmatpush1.msra.mxu0 %v581
  %598 = vmatprep.subr.mxu0 0.0
  %599 = vmatpush1.msra.mxu0 %v582
  %600 = vmatprep.subr.mxu0 0.0
  %601 = vmatpush1.msra.mxu0 %v583
  %602 = vmatprep.subr.mxu0 0.0
  %603 = vmatpush1.msra.mxu0 0.0
  %604 = vmatprep.subr.mxu0 0.0
  %605 = vmatpush1.msra.mxu0 0.0
  %606 = vmatprep.subr.mxu0 0.0
  %607 = vmatpush1.msra.mxu0 0.0
  %608 = vmatprep.subr.mxu0 0.0
  %609 = vmatpush1.msra.mxu0 0.0
  %610 = vmatprep.subr.mxu0 0.0
  %611 = vmatpush1.msra.mxu0 0.0
  %612 = vmatprep.subr.mxu0 0.0
  %613 = vmatpush1.msra.mxu0 0.0
  %614 = vmatprep.subr.mxu0 0.0
  %615 = vmatpush1.msra.mxu0 0.0
  %616 = vmatprep.subr.mxu0 0.0
  %617 = vmatpush1.msra.mxu0 0.0
  %618 = vmatprep.subr.mxu0 0.0
  %619 = vmatpush1.msra.mxu0 0.0
  %620 = vmatprep.subr.mxu0 0.0
  %621 = vmatpush1.msra.mxu0 0.0
  %622 = vmatprep.subr.mxu0 0.0
  %623 = vmatpush1.msra.mxu0 0.0
  %624 = vmatprep.subr.mxu0 0.0
  %625 = vmatpush1.msra.mxu0 0.0
  %626 = vmatprep.subr.mxu0 0.0
  %627 = vmatpush1.msra.mxu0 0.0
  %628 = vmatprep.subr.mxu0 0.0
  %629 = vmatpush1.msra.mxu0 0.0
  %630 = vmatprep.subr.mxu0 0.0
  %631 = vmatpush1.msra.mxu0 0.0
  %632 = vmatprep.subr.mxu0 0.0
  %633 = vmatpush1.msra.mxu0 0.0
  %634 = vmatprep.subr.mxu0 0.0
  %635 = vmatpush1.msra.mxu0 0.0
  %636 = vmatprep.subr.mxu0 0.0
  %637 = vmatpush1.msra.mxu0 0.0
  %638 = vmatprep.subr.mxu0 0.0
  %639 = vmatpush1.msra.mxu0 0.0
  %640 = vmatprep.subr.mxu0 0.0
  %641 = vmatpush1.msra.mxu0 0.0
  %642 = vmatprep.subr.mxu0 0.0
  %643 = vmatpush1.msra.mxu0 0.0
  %644 = vmatprep.subr.mxu0 0.0
  %645 = vmatpush1.msra.mxu0 0.0
  %646 = vmatprep.subr.mxu0 0.0
  %647 = vmatpush1.msra.mxu0 0.0
  %648 = vmatprep.subr.mxu0 0.0
  %649 = vmatpush1.msra.mxu0 0.0
  %650 = vmatprep.subr.mxu0 0.0
  %651 = vmatpush1.msra.mxu0 0.0
  %652 = vmatprep.subr.mxu0 0.0
  %653 = vmatpush1.msra.mxu0 0.0
  %654 = vmatprep.subr.mxu0 0.0
  %655 = vmatpush1.msra.mxu0 0.0
  %656 = vmatprep.subr.mxu0 0.0
  %657 = vmatpush1.msra.mxu0 0.0
  %658 = vmatprep.mubr.f32.mxu0 0.0
  %659 = vmatmul.mubr.f32.gmra.mrb[0].mxu0 %v592
  %v660 = vpop.f32.mrb[0].mxu0
  %v661 = vadd.f32 %v589, %v660
  %v662 = vpop.f32.mrb[0].mxu0
  %663 = vdwg.mxu0
  %v664 = vmax.f32 %v661, 0.0
  %v665 = vld [vmem:[%s15] sm:$0x1]
  %v667 = vlaneseq
  %v668 = vshrl.u32 %v667, 7
  %v669 = vsub.s32 0, %v668
  %v670 = vrot.slane %v665, %v669
  %v672 = vmul.f32 %v664, %v670
  %vm673 = vcmask 254976
  %v674 = vsel %vm673, %v672, 0.0
  %675 = vadd.xlane.f32.xlu0 %v674
  %v676 = vpop.xlane.xlu0 %675
  %v677 = vld [vmem:[#allocation2] sm:$0x1]
  %v679 = vlaneseq
  %v680 = vshrl.u32 %v679, 7
  %v681 = vsub.s32 0, %v680
  %v682 = vrot.slane %v677, %v681
  %v684 = vadd.f32 %v676, %v682
  %vm685 = vcmask 1024
  %686 = vst.msk [vmem:[%s17] sm:$0x3] %vm685, %v684
  // Predicated region
  $region70: #{image_regressor.7} parent=0 // pred_check
    _
  $region71: #{image_regressor.7} parent=0 // pred_check_branch
    %688 = sbr.rel (0) target = $region73
  $region72: #{image_regressor.7} parent=0 // pred_region
    _
  $region73: #{image_regressor.7} parent=0 // pred_fallthru
    _
  // Predicated region
  $region74: #{image_regressor.7} parent=0 // pred_check
    _
  $region75: #{image_regressor.7} parent=0 // pred_check_branch
    %690 = sbr.rel (0) target = $region77
  $region76: #{image_regressor.7} parent=0 // pred_region
    _
  $region77: #{image_regressor.7} parent=0 // pred_fallthru
    _

</llo_original>
